<compile_context>
chip_gen: v6e
topology: v6e:2x2x1
jax: 0.10.0
libtpu: 0.0.40
codegen_flags: <defaults>
</compile_context>

<pallas_src>
import jax
import jax.numpy as jnp
import numpy as np
from jax import lax
from jax.experimental import pallas as pl
from jax.experimental.pallas import tpu as pltpu


# ----------------------------- Pallas kernels --------------------------------

def make_conv_bias_relu_pool_kernel(q):
    """Fused im2col-matmul conv + bias (-> z) + ReLU + 2x2/stride-2 max-pool.

    Patch rows of one image are ordered (di, dj, i, j) where (di, dj) is the
    position inside the 2x2 pooling window and (i, j) the pooled output pixel,
    so pooling is three maxes over four contiguous q-row blocks.
    """
    def kernel(p_ref, w_ref, b_ref, z_ref, pooled_ref):
        # (4q, K) @ (K, O) + (1, O) on the MXU, f32 accumulation.
        h = jnp.dot(p_ref[...], w_ref[...],
                    preferred_element_type=jnp.float32) + b_ref[...]
        z_ref[...] = h                               # pre-activation conv output
        m = jnp.maximum(jnp.maximum(h[0 * q:1 * q], h[1 * q:2 * q]),
                        jnp.maximum(h[2 * q:3 * q], h[3 * q:4 * q]))
        pooled_ref[...] = jnp.maximum(m, 0.0)        # relu(max) == max(relu)
    return kernel


def fc_fused_kernel(x_ref, w1_ref, b1_ref, w2_ref, b2_ref, f1_ref, f2_ref):
    """fc1 + bias (-> z), ReLU, fc2 + bias (-> logits) in one kernel."""
    f1 = jnp.dot(x_ref[...], w1_ref[...],
                 preferred_element_type=jnp.float32) + b1_ref[...]
    f1_ref[...] = f1
    r = jnp.maximum(f1, 0.0)
    f2_ref[...] = jnp.dot(r, w2_ref[...],
                          preferred_element_type=jnp.float32) + b2_ref[...]


# ----------------------------- Pallas wrappers --------------------------------

def conv_bias_relu_pool(patches, wmat, bias, *, batch):
    """patches: (batch*4*q, K), rows ordered (b, di, dj, i, j); wmat: (K, O).

    Returns (conv_raw (batch*4*q, O), pooled_relu (batch*q, O)). No padding,
    no post-slicing: block shapes are full-dim / 8-aligned row blocks.
    """
    M, K = patches.shape
    _, O = wmat.shape
    rows_b = M // batch
    q = rows_b // 4
    return pl.pallas_call(
        make_conv_bias_relu_pool_kernel(q),
        out_shape=(jax.ShapeDtypeStruct((M, O), jnp.float32),
                   jax.ShapeDtypeStruct((batch * q, O), jnp.float32)),
        grid=(batch,),
        in_specs=[
            pl.BlockSpec((rows_b, K), lambda b: (b, 0)),
            pl.BlockSpec((K, O), lambda b: (0, 0)),
            pl.BlockSpec((1, O), lambda b: (0, 0)),
        ],
        out_specs=(
            pl.BlockSpec((rows_b, O), lambda b: (b, 0)),
            pl.BlockSpec((q, O), lambda b: (b, 0)),
        ),
        compiler_params=pltpu.CompilerParams(
            dimension_semantics=("parallel",)),
    )(patches, wmat, bias.reshape(1, O))


def fc_fused(flat, wf1, bf1, wf2, bf2):
    """flat: (B, F). Torch Linear weights (out, in). Returns (fc1_out, fc2_out)."""
    B, F = flat.shape
    H = wf1.shape[0]
    O = wf2.shape[0]
    return pl.pallas_call(
        fc_fused_kernel,
        out_shape=(jax.ShapeDtypeStruct((B, H), jnp.float32),
                   jax.ShapeDtypeStruct((B, O), jnp.float32)),
        grid=(1,),
        in_specs=[
            pl.BlockSpec((B, F), lambda i: (0, 0)),
            pl.BlockSpec((F, H), lambda i: (0, 0)),
            pl.BlockSpec((1, H), lambda i: (0, 0)),
            pl.BlockSpec((H, O), lambda i: (0, 0)),
            pl.BlockSpec((1, O), lambda i: (0, 0)),
        ],
        out_specs=(
            pl.BlockSpec((B, H), lambda i: (0, 0)),
            pl.BlockSpec((B, O), lambda i: (0, 0)),
        ),
        compiler_params=pltpu.CompilerParams(
            dimension_semantics=("arbitrary",)),
    )(flat, wf1.T, bf1.reshape(1, H), wf2.T, bf2.reshape(1, O))


# ----------------------------- Layout glue (tiny XLA ops) ----------------------

def _im2col_nhwc(x, k):
    """x: (B, H, W, C) -> (B, Ho, Wo, C*k*k), feature order (c, kh, kw)."""
    B, H, W, C = x.shape
    Ho, Wo = H - k + 1, W - k + 1
    cols = [x[:, i:i + Ho, j:j + Wo, :] for i in range(k) for j in range(k)]
    p = jnp.stack(cols, axis=-1)              # (B, Ho, Wo, C, k*k)
    return p.reshape(B, Ho, Wo, C * k * k)    # feature = c*k*k + kh*k + kw


def _pool_row_order(p):
    """(B, Ho, Wo, F) -> (B*4*(Ho//2)*(Wo//2), F), rows ordered (b, di, dj, i, j)."""
    B, Ho, Wo, F = p.shape
    p = p.reshape(B, Ho // 2, 2, Wo // 2, 2, F).transpose(0, 2, 4, 1, 3, 5)
    return p.reshape(B * 4 * (Ho // 2) * (Wo // 2), F)


def _to_nchw(z, B, Ho, Wo, C):
    """Inverse of the (b, di, dj, i, j) row order -> NCHW (B, C, Ho, Wo)."""
    z = z.reshape(B, 2, 2, Ho // 2, Wo // 2, C).transpose(0, 5, 3, 1, 4, 2)
    return z.reshape(B, C, Ho, Wo)


# ----------------------------- Network forward --------------------------------

@jax.jit
def net_forward(x, params):
    """Pallas implementation of Net.forward: returns (logits, [z1, z2, z3, z4])."""
    B = x.shape[0]
    z = []

    # conv1 (1 -> 20, 5x5) + ReLU + 2x2 max-pool, fused in one kernel
    x_nhwc = jnp.transpose(x, (0, 2, 3, 1))                        # (B, 28, 28, 1)
    p1 = _pool_row_order(_im2col_nhwc(x_nhwc, 5))                  # (B*576, 25)
    w1m = params["w1"].reshape(20, 25).T                           # (25, 20)
    z1_raw, pooled1 = conv_bias_relu_pool(p1, w1m, params["b1"], batch=B)
    z.append(_to_nchw(z1_raw, B, 24, 24, 20))                      # (B, 20, 24, 24)

    # conv2 (20 -> 50, 5x5) + ReLU + 2x2 max-pool, fused in one kernel
    p2 = _pool_row_order(
        _im2col_nhwc(pooled1.reshape(B, 12, 12, 20), 5))           # (B*64, 500)
    w2m = params["w2"].reshape(50, 500).T                          # (500, 50)
    z2_raw, pooled2 = conv_bias_relu_pool(p2, w2m, params["b2"], batch=B)
    z.append(_to_nchw(z2_raw, B, 8, 8, 50))                        # (B, 50, 8, 8)

    # flatten to torch's NCHW .view(-1, 4*4*50) feature order: (c, h, w)
    flat = pooled2.reshape(B, 16, 50).transpose(0, 2, 1).reshape(B, 800)

    # fc1 + ReLU + fc2, fused in one kernel
    f1, f2 = fc_fused(flat, params["wf1"], params["bf1"],
                      params["wf2"], params["bf2"])
    z.append(f1)                                                   # (B, 500)
    z.append(f2)                                                   # (B, 10)
    return f2, z


# ----------------------------- Pure-JAX reference ------------------------------

def ref_forward(x, params):
    def conv(x, w, b):
        dn = lax.conv_dimension_numbers(x.shape, w.shape, ("NCHW", "OIHW", "NCHW"))
        return lax.conv_general_dilated(
            x, w, (1, 1), "VALID", dimension_numbers=dn
        ) + b[None, :, None, None]

    def pool(x):
        return lax.reduce_window(
            x, -jnp.inf, lax.max, (1, 1, 2, 2), (1, 1, 2, 2), "VALID"
        )

    z = []
    x1 = conv(x, params["w1"], params["b1"]); z.append(x1)
    x2 = pool(jnp.maximum(x1, 0.0))
    x3 = conv(x2, params["w2"], params["b2"]); z.append(x3)
    x4 = pool(jnp.maximum(x3, 0.0))
    flat = x4.reshape(-1, 800)
    f1 = flat @ params["wf1"].T + params["bf1"]; z.append(f1)
    f2 = jnp.maximum(f1, 0.0) @ params["wf2"].T + params["bf2"]; z.append(f2)
    return f2, z


# ----------------------------- Param init --------------------------------------

def init_params(key):
    def uniform(key, shape, fan_in):
        k = 1.0 / np.sqrt(fan_in)
        return jax.random.uniform(key, shape, jnp.float32, -k, k)

    ks = jax.random.split(key, 8)
    return {
        "w1": uniform(ks[0], (20, 1, 5, 5), 1 * 5 * 5),
        "b1": uniform(ks[1], (20,), 1 * 5 * 5),
        "w2": uniform(ks[2], (50, 20, 5, 5), 20 * 5 * 5),
        "b2": uniform(ks[3], (50,), 20 * 5 * 5),
        "wf1": uniform(ks[4], (500, 800), 800),
        "bf1": uniform(ks[5], (500,), 800),
        "wf2": uniform(ks[6], (10, 500), 500),
        "bf2": uniform(ks[7], (10,), 500),
    }


# ----------------------------- Main ---------------------------------------------

if __name__ == "__main__":
    key = jax.random.PRNGKey(0)
    kx, kp = jax.random.split(key)
    # fc1 expects 4*4*50 features => 28x28 single-channel input (MNIST-style), batch 2
    x = jax.random.normal(kx, (2, 1, 28, 28), jnp.float32)
    params = init_params(kp)

    logits, z = net_forward(x, params)
    logits = jax.block_until_ready(logits)
    z = [jax.block_until_ready(zi) for zi in z]

    # sanity check against a pure-JAX reference
    ref_logits, ref_z = ref_forward(x, params)
    np.testing.assert_allclose(np.asarray(logits), np.asarray(ref_logits),
                               rtol=1e-3, atol=1e-3)
    for zi, rzi in zip(z, ref_z):
        assert zi.shape == rzi.shape
        np.testing.assert_allclose(np.asarray(zi), np.asarray(rzi),
                                   rtol=1e-3, atol=1e-3)

    print("KERNEL_OK")
</pallas_src>

<mosaic_0001>
module attributes {stable_mosaic.version = 11 : i64} {
  func.func @kernel(%arg0: i32, %arg1: memref<576x25xf32, #tpu.memory_space<vmem>>, %arg2: memref<25x20xf32, #tpu.memory_space<vmem>>, %arg3: memref<1x20xf32, #tpu.memory_space<vmem>>, %arg4: memref<576x20xf32, #tpu.memory_space<vmem>>, %arg5: memref<144x20xf32, #tpu.memory_space<vmem>>) attributes {dimension_semantics = [#tpu.dimension_semantics<parallel>], iteration_bounds = array<i64: 2>, scalar_prefetch = 0 : i64, scratch_operands = 0 : i64, tpu.core_type = #tpu.core_type<tc>, window_params = [{transform_indices = @transform_0, window_bounds = array<i64: 576, 25>}, {pipeline_mode = #tpu.pipeline_mode<synchronous>, transform_indices = @transform_1, window_bounds = array<i64: 25, 20>}, {pipeline_mode = #tpu.pipeline_mode<synchronous>, transform_indices = @transform_2, window_bounds = array<i64: 1, 20>}, {transform_indices = @transform_3, window_bounds = array<i64: 576, 20>}, {transform_indices = @transform_4, window_bounds = array<i64: 144, 20>}]} {
    %c0 = arith.constant 0 : index
    %c0_0 = arith.constant 0 : index
    %0 = vector.load %arg1[%c0, %c0_0] : memref<576x25xf32, #tpu.memory_space<vmem>>, vector<576x25xf32>
    %c0_1 = arith.constant 0 : index
    %c0_2 = arith.constant 0 : index
    %1 = vector.load %arg2[%c0_1, %c0_2] : memref<25x20xf32, #tpu.memory_space<vmem>>, vector<25x20xf32>
    %cst = arith.constant dense<0.000000e+00> : vector<576x20xf32>
    %2 = tpu.matmul %0, %1, %cst {dimension_numbers = #tpu.dot_dimension_numbers<[1], [0], [0], [1], [0, 0, 1, 1], [], []>} : vector<576x25xf32>, vector<25x20xf32>, vector<576x20xf32> -> vector<576x20xf32>
    %c0_3 = arith.constant 0 : index
    %c0_4 = arith.constant 0 : index
    %3 = vector.load %arg3[%c0_3, %c0_4] : memref<1x20xf32, #tpu.memory_space<vmem>>, vector<1x20xf32>
    %4 = vector.broadcast %3 : vector<1x20xf32> to vector<576x20xf32>
    %5 = arith.addf %2, %4 : vector<576x20xf32>
    %c0_5 = arith.constant 0 : index
    %c0_6 = arith.constant 0 : index
    %6 = vector.load %arg4[%c0_5, %c0_6] : memref<576x20xf32, #tpu.memory_space<vmem>>, vector<576x20xf32>
    tpu.vector_store %arg4[%c0_5, %c0_6], %5 {strides = array<i32>} : memref<576x20xf32, #tpu.memory_space<vmem>>, vector<576x20xf32>,
    %7 = vector.extract_strided_slice %5 {offsets = [0, 0], sizes = [144, 20], strides = [1, 1]} : vector<576x20xf32> to vector<144x20xf32>
    %8 = vector.extract_strided_slice %5 {offsets = [144, 0], sizes = [144, 20], strides = [1, 1]} : vector<576x20xf32> to vector<144x20xf32>
    %9 = arith.maximumf %7, %8 : vector<144x20xf32>
    %10 = vector.extract_strided_slice %5 {offsets = [288, 0], sizes = [144, 20], strides = [1, 1]} : vector<576x20xf32> to vector<144x20xf32>
    %11 = vector.extract_strided_slice %5 {offsets = [432, 0], sizes = [144, 20], strides = [1, 1]} : vector<576x20xf32> to vector<144x20xf32>
    %12 = arith.maximumf %10, %11 : vector<144x20xf32>
    %13 = arith.maximumf %9, %12 : vector<144x20xf32>
    %cst_7 = arith.constant 0.000000e+00 : f32
    %14 = vector.broadcast %cst_7 : f32 to vector<144x20xf32>
    %15 = arith.maximumf %13, %14 : vector<144x20xf32>
    %c0_8 = arith.constant 0 : index
    %c0_9 = arith.constant 0 : index
    %16 = vector.load %arg5[%c0_8, %c0_9] : memref<144x20xf32, #tpu.memory_space<vmem>>, vector<144x20xf32>
    tpu.vector_store %arg5[%c0_8, %c0_9], %15 {strides = array<i32>} : memref<144x20xf32, #tpu.memory_space<vmem>>, vector<144x20xf32>,
    return
  }
  func.func @transform_0(%arg0: i32) -> (i32, i32) {
    %c0_i32 = arith.constant 0 : i32
    %c0_i32_0 = arith.constant 0 : i32
    return %arg0, %c0_i32 : i32, i32
  }
  func.func @transform_1(%arg0: i32) -> (i32, i32) {
    %c0_i32 = arith.constant 0 : i32
    %c0_i32_0 = arith.constant 0 : i32
    %c0_i32_1 = arith.constant 0 : i32
    return %c0_i32, %c0_i32_0 : i32, i32
  }
  func.func @transform_2(%arg0: i32) -> (i32, i32) {
    %c0_i32 = arith.constant 0 : i32
    %c0_i32_0 = arith.constant 0 : i32
    %c0_i32_1 = arith.constant 0 : i32
    return %c0_i32, %c0_i32_0 : i32, i32
  }
  func.func @transform_3(%arg0: i32) -> (i32, i32) {
    %c0_i32 = arith.constant 0 : i32
    %c0_i32_0 = arith.constant 0 : i32
    return %arg0, %c0_i32 : i32, i32
  }
  func.func @transform_4(%arg0: i32) -> (i32, i32) {
    %c0_i32 = arith.constant 0 : i32
    %c0_i32_0 = arith.constant 0 : i32
    return %arg0, %c0_i32 : i32, i32
  }
}

module attributes {stable_mosaic.version = 11 : i64} {
  func.func @kernel(%arg0: i32, %arg1: memref<64x500xf32, #tpu.memory_space<vmem>>, %arg2: memref<500x50xf32, #tpu.memory_space<vmem>>, %arg3: memref<1x50xf32, #tpu.memory_space<vmem>>, %arg4: memref<64x50xf32, #tpu.memory_space<vmem>>, %arg5: memref<16x50xf32, #tpu.memory_space<vmem>>) attributes {dimension_semantics = [#tpu.dimension_semantics<parallel>], iteration_bounds = array<i64: 2>, scalar_prefetch = 0 : i64, scratch_operands = 0 : i64, tpu.core_type = #tpu.core_type<tc>, window_params = [{transform_indices = @transform_0, window_bounds = array<i64: 64, 500>}, {pipeline_mode = #tpu.pipeline_mode<synchronous>, transform_indices = @transform_1, window_bounds = array<i64: 500, 50>}, {pipeline_mode = #tpu.pipeline_mode<synchronous>, transform_indices = @transform_2, window_bounds = array<i64: 1, 50>}, {transform_indices = @transform_3, window_bounds = array<i64: 64, 50>}, {transform_indices = @transform_4, window_bounds = array<i64: 16, 50>}]} {
    %c0 = arith.constant 0 : index
    %c0_0 = arith.constant 0 : index
    %0 = vector.load %arg1[%c0, %c0_0] : memref<64x500xf32, #tpu.memory_space<vmem>>, vector<64x500xf32>
    %c0_1 = arith.constant 0 : index
    %c0_2 = arith.constant 0 : index
    %1 = vector.load %arg2[%c0_1, %c0_2] : memref<500x50xf32, #tpu.memory_space<vmem>>, vector<500x50xf32>
    %cst = arith.constant dense<0.000000e+00> : vector<64x50xf32>
    %2 = tpu.matmul %0, %1, %cst {dimension_numbers = #tpu.dot_dimension_numbers<[1], [0], [0], [1], [0, 0, 1, 1], [], []>} : vector<64x500xf32>, vector<500x50xf32>, vector<64x50xf32> -> vector<64x50xf32>
    %c0_3 = arith.constant 0 : index
    %c0_4 = arith.constant 0 : index
    %3 = vector.load %arg3[%c0_3, %c0_4] : memref<1x50xf32, #tpu.memory_space<vmem>>, vector<1x50xf32>
    %4 = vector.broadcast %3 : vector<1x50xf32> to vector<64x50xf32>
    %5 = arith.addf %2, %4 : vector<64x50xf32>
    %c0_5 = arith.constant 0 : index
    %c0_6 = arith.constant 0 : index
    %6 = vector.load %arg4[%c0_5, %c0_6] : memref<64x50xf32, #tpu.memory_space<vmem>>, vector<64x50xf32>
    tpu.vector_store %arg4[%c0_5, %c0_6], %5 {strides = array<i32>} : memref<64x50xf32, #tpu.memory_space<vmem>>, vector<64x50xf32>,
    %7 = vector.extract_strided_slice %5 {offsets = [0, 0], sizes = [16, 50], strides = [1, 1]} : vector<64x50xf32> to vector<16x50xf32>
    %8 = vector.extract_strided_slice %5 {offsets = [16, 0], sizes = [16, 50], strides = [1, 1]} : vector<64x50xf32> to vector<16x50xf32>
    %9 = arith.maximumf %7, %8 : vector<16x50xf32>
    %10 = vector.extract_strided_slice %5 {offsets = [32, 0], sizes = [16, 50], strides = [1, 1]} : vector<64x50xf32> to vector<16x50xf32>
    %11 = vector.extract_strided_slice %5 {offsets = [48, 0], sizes = [16, 50], strides = [1, 1]} : vector<64x50xf32> to vector<16x50xf32>
    %12 = arith.maximumf %10, %11 : vector<16x50xf32>
    %13 = arith.maximumf %9, %12 : vector<16x50xf32>
    %cst_7 = arith.constant 0.000000e+00 : f32
    %14 = vector.broadcast %cst_7 : f32 to vector<16x50xf32>
    %15 = arith.maximumf %13, %14 : vector<16x50xf32>
    %c0_8 = arith.constant 0 : index
    %c0_9 = arith.constant 0 : index
    %16 = vector.load %arg5[%c0_8, %c0_9] : memref<16x50xf32, #tpu.memory_space<vmem>>, vector<16x50xf32>
    tpu.vector_store %arg5[%c0_8, %c0_9], %15 {strides = array<i32>} : memref<16x50xf32, #tpu.memory_space<vmem>>, vector<16x50xf32>,
    return
  }
  func.func @transform_0(%arg0: i32) -> (i32, i32) {
    %c0_i32 = arith.constant 0 : i32
    %c0_i32_0 = arith.constant 0 : i32
    return %arg0, %c0_i32 : i32, i32
  }
  func.func @transform_1(%arg0: i32) -> (i32, i32) {
    %c0_i32 = arith.constant 0 : i32
    %c0_i32_0 = arith.constant 0 : i32
    %c0_i32_1 = arith.constant 0 : i32
    return %c0_i32, %c0_i32_0 : i32, i32
  }
  func.func @transform_2(%arg0: i32) -> (i32, i32) {
    %c0_i32 = arith.constant 0 : i32
    %c0_i32_0 = arith.constant 0 : i32
    %c0_i32_1 = arith.constant 0 : i32
    return %c0_i32, %c0_i32_0 : i32, i32
  }
  func.func @transform_3(%arg0: i32) -> (i32, i32) {
    %c0_i32 = arith.constant 0 : i32
    %c0_i32_0 = arith.constant 0 : i32
    return %arg0, %c0_i32 : i32, i32
  }
  func.func @transform_4(%arg0: i32) -> (i32, i32) {
    %c0_i32 = arith.constant 0 : i32
    %c0_i32_0 = arith.constant 0 : i32
    return %arg0, %c0_i32 : i32, i32
  }
}

module attributes {stable_mosaic.version = 11 : i64} {
  func.func @fc_fused_kernel(%arg0: i32, %arg1: memref<2x800xf32, #tpu.memory_space<vmem>>, %arg2: memref<800x500xf32, #tpu.memory_space<vmem>>, %arg3: memref<1x500xf32, #tpu.memory_space<vmem>>, %arg4: memref<500x10xf32, #tpu.memory_space<vmem>>, %arg5: memref<1x10xf32, #tpu.memory_space<vmem>>, %arg6: memref<2x500xf32, #tpu.memory_space<vmem>>, %arg7: memref<2x10xf32, #tpu.memory_space<vmem>>) attributes {dimension_semantics = [#tpu.dimension_semantics<arbitrary>], iteration_bounds = array<i64: 1>, scalar_prefetch = 0 : i64, scratch_operands = 0 : i64, tpu.core_type = #tpu.core_type<tc>, window_params = [{pipeline_mode = #tpu.pipeline_mode<synchronous>, transform_indices = @transform_0, window_bounds = array<i64: 2, 800>}, {pipeline_mode = #tpu.pipeline_mode<synchronous>, transform_indices = @transform_1, window_bounds = array<i64: 800, 500>}, {pipeline_mode = #tpu.pipeline_mode<synchronous>, transform_indices = @transform_2, window_bounds = array<i64: 1, 500>}, {pipeline_mode = #tpu.pipeline_mode<synchronous>, transform_indices = @transform_3, window_bounds = array<i64: 500, 10>}, {pipeline_mode = #tpu.pipeline_mode<synchronous>, transform_indices = @transform_4, window_bounds = array<i64: 1, 10>}, {pipeline_mode = #tpu.pipeline_mode<synchronous>, transform_indices = @transform_5, window_bounds = array<i64: 2, 500>}, {pipeline_mode = #tpu.pipeline_mode<synchronous>, transform_indices = @transform_6, window_bounds = array<i64: 2, 10>}]} {
    %c0 = arith.constant 0 : index
    %c0_0 = arith.constant 0 : index
    %0 = vector.load %arg1[%c0, %c0_0] : memref<2x800xf32, #tpu.memory_space<vmem>>, vector<2x800xf32>
    %c0_1 = arith.constant 0 : index
    %c0_2 = arith.constant 0 : index
    %1 = vector.load %arg2[%c0_1, %c0_2] : memref<800x500xf32, #tpu.memory_space<vmem>>, vector<800x500xf32>
    %cst = arith.constant dense<0.000000e+00> : vector<2x500xf32>
    %2 = tpu.matmul %0, %1, %cst {dimension_numbers = #tpu.dot_dimension_numbers<[1], [0], [0], [1], [0, 0, 1, 1], [], []>} : vector<2x800xf32>, vector<800x500xf32>, vector<2x500xf32> -> vector<2x500xf32>
    %c0_3 = arith.constant 0 : index
    %c0_4 = arith.constant 0 : index
    %3 = vector.load %arg3[%c0_3, %c0_4] : memref<1x500xf32, #tpu.memory_space<vmem>>, vector<1x500xf32>
    %4 = vector.broadcast %3 : vector<1x500xf32> to vector<2x500xf32>
    %5 = arith.addf %2, %4 : vector<2x500xf32>
    %c0_5 = arith.constant 0 : index
    %c0_6 = arith.constant 0 : index
    %6 = vector.load %arg6[%c0_5, %c0_6] : memref<2x500xf32, #tpu.memory_space<vmem>>, vector<2x500xf32>
    tpu.vector_store %arg6[%c0_5, %c0_6], %5 {strides = array<i32>} : memref<2x500xf32, #tpu.memory_space<vmem>>, vector<2x500xf32>,
    %cst_7 = arith.constant 0.000000e+00 : f32
    %7 = vector.broadcast %cst_7 : f32 to vector<2x500xf32>
    %8 = arith.maximumf %5, %7 : vector<2x500xf32>
    %c0_8 = arith.constant 0 : index
    %c0_9 = arith.constant 0 : index
    %9 = vector.load %arg4[%c0_8, %c0_9] : memref<500x10xf32, #tpu.memory_space<vmem>>, vector<500x10xf32>
    %cst_10 = arith.constant dense<0.000000e+00> : vector<2x10xf32>
    %10 = tpu.matmul %8, %9, %cst_10 {dimension_numbers = #tpu.dot_dimension_numbers<[1], [0], [0], [1], [0, 0, 1, 1], [], []>} : vector<2x500xf32>, vector<500x10xf32>, vector<2x10xf32> -> vector<2x10xf32>
    %c0_11 = arith.constant 0 : index
    %c0_12 = arith.constant 0 : index
    %11 = vector.load %arg5[%c0_11, %c0_12] : memref<1x10xf32, #tpu.memory_space<vmem>>, vector<1x10xf32>
    %12 = vector.broadcast %11 : vector<1x10xf32> to vector<2x10xf32>
    %13 = arith.addf %10, %12 : vector<2x10xf32>
    %c0_13 = arith.constant 0 : index
    %c0_14 = arith.constant 0 : index
    %14 = vector.load %arg7[%c0_13, %c0_14] : memref<2x10xf32, #tpu.memory_space<vmem>>, vector<2x10xf32>
    tpu.vector_store %arg7[%c0_13, %c0_14], %13 {strides = array<i32>} : memref<2x10xf32, #tpu.memory_space<vmem>>, vector<2x10xf32>,
    return
  }
  func.func @transform_0(%arg0: i32) -> (i32, i32) {
    %c0_i32 = arith.constant 0 : i32
    %c0_i32_0 = arith.constant 0 : i32
    %c0_i32_1 = arith.constant 0 : i32
    return %c0_i32, %c0_i32_0 : i32, i32
  }
  func.func @transform_1(%arg0: i32) -> (i32, i32) {
    %c0_i32 = arith.constant 0 : i32
    %c0_i32_0 = arith.constant 0 : i32
    %c0_i32_1 = arith.constant 0 : i32
    return %c0_i32, %c0_i32_0 : i32, i32
  }
  func.func @transform_2(%arg0: i32) -> (i32, i32) {
    %c0_i32 = arith.constant 0 : i32
    %c0_i32_0 = arith.constant 0 : i32
    %c0_i32_1 = arith.constant 0 : i32
    return %c0_i32, %c0_i32_0 : i32, i32
  }
  func.func @transform_3(%arg0: i32) -> (i32, i32) {
    %c0_i32 = arith.constant 0 : i32
    %c0_i32_0 = arith.constant 0 : i32
    %c0_i32_1 = arith.constant 0 : i32
    return %c0_i32, %c0_i32_0 : i32, i32
  }
  func.func @transform_4(%arg0: i32) -> (i32, i32) {
    %c0_i32 = arith.constant 0 : i32
    %c0_i32_0 = arith.constant 0 : i32
    %c0_i32_1 = arith.constant 0 : i32
    return %c0_i32, %c0_i32_0 : i32, i32
  }
  func.func @transform_5(%arg0: i32) -> (i32, i32) {
    %c0_i32 = arith.constant 0 : i32
    %c0_i32_0 = arith.constant 0 : i32
    %c0_i32_1 = arith.constant 0 : i32
    return %c0_i32, %c0_i32_0 : i32, i32
  }
  func.func @transform_6(%arg0: i32) -> (i32, i32) {
    %c0_i32 = arith.constant 0 : i32
    %c0_i32_0 = arith.constant 0 : i32
    %c0_i32_1 = arith.constant 0 : i32
    return %c0_i32, %c0_i32_0 : i32, i32
  }
}

</mosaic_0001>

<llo_original>
// kernel: net_forward.3
$region0: #{net_forward.3}
  #allocation0 [shape = 'u32[]', space=smem, size = 0x4, offset = 0x4, fixed_abs, tag = 'smem constant byte address 0x4 - core index']
  #allocation1 [shape = 'u32[144,128]{1,0:T(1,128)}', space=vmem, size = 0x12000, scoped, tag = 'internal scratch']
  %s0 = inlined_call_operand.vmem [shape: f32[1152,25], index: 0, kind: input, shape index: {}]
  %s1 = inlined_call_operand.vmem [shape: f32[25,20], index: 1, kind: input, shape index: {}]
  %s2 = inlined_call_operand.vmem [shape: f32[1,20], index: 2, kind: input, shape index: {}]
  %s3 = inlined_call_operand.vmem [shape: f32[1152,20], index: 3, kind: output, shape index: {0}]
  %s4 = inlined_call_operand.vmem [shape: f32[288,20], index: 4, kind: output, shape index: {1}]
  %5 = xla_tuple %s3, %s4
  %s6 = sld [smem:[#allocation0]]
  $region53: #{net_forward.3} parent=0
    _
  %s8 = ssub.s32 1, %s6
  %s9 = scalar_select 0, %s8, %s6
  loop: start=0, step=1, limit=4
  $region2: #{net_forward.3} parent=0 // loop_pre_header
    _
  $region3: #{net_forward.3} parent=0 // loop_header
    %s11 = sphi 0, %s15
    %p12 = scmp.ge.s32.totalorder %s11, 4
    %s21 = sphi 0, %s23
    %s24 = sphi 0, %s21
    %s25 = sphi 0, %s24
    %s41 = sphi 0, %s25
    %s45 = sphi 0, %s45
    %s47 = sphi 0, %s45
    %s48 = sphi 0, %s47
    %s62 = sphi 0, %s48
    %s66 = sphi 0, %s66
    %s68 = sphi 0, %s66
    %s69 = sphi 0, %s68
    %s83 = sphi 0, %s69
    %s89 = sphi 0, %s91
    %s92 = sphi 0, %s89
    %s93 = sphi 0, %s92
    %s109 = sphi 0, %s93
    %s115 = sphi 0, %s117
    %s118 = sphi 0, %s115
    %s119 = sphi 0, %s118
    %s135 = sphi 0, %s119
  $region4: #{net_forward.3} parent=0 // loop_header_branch
    %14 = sbr.rel (%p12) target = $region8
  $region5: #{net_forward.3} parent=0 // loop_body
    %s16 = ssub.s32 %s11, 1
    %s17 = ssub.s32 %s11, 2
    %s18 = sadd.s32 %s11, 1
    %s19 = ssub.s32 %s11, %s18
    %p20 = scmp.eq.s32.totalorder %s19, 0
    %s22 = sadd.s32 %s21, 1
    %s23 = scalar_select %p20, %s21, %s22
    %p26 = pneg %p20
    %p27 = scmp.eq.s32.totalorder %s11, 1
    %p28 = por %p26, %p27
    %p29 = scmp.ne.s32.totalorder %s21, %s24
    %p30 = scmp.eq.s32.totalorder %s11, 0
    %p31 = por %p29, %p30
    %p32 = scmp.ne.s32.totalorder %s21, %s24
    %p33 = scmp.eq.s32.totalorder %s16, 1
    %p34 = por %p32, %p33
    %p35 = scmp.ne.s32.totalorder %s24, %s25
    %p36 = scmp.eq.s32.totalorder %s16, 0
    %p37 = por %p35, %p36
    %p38 = scmp.ne.s32.totalorder %s24, %s25
    %p39 = scmp.eq.s32.totalorder %s17, 1
    %p40 = por %p38, %p39
    %p42 = scmp.ne.s32.totalorder %s25, %s41
    %p43 = scmp.eq.s32.totalorder %s17, 0
    %p44 = por %p42, %p43
    %s46 = sadd.s32 %s45, 1
    %p49 = scmp.eq.s32.totalorder %s11, 1
    %p50 = scmp.ne.s32.totalorder %s45, %s47
    %p51 = scmp.eq.s32.totalorder %s11, 0
    %p52 = por %p50, %p51
    %p53 = scmp.ne.s32.totalorder %s45, %s47
    %p54 = scmp.eq.s32.totalorder %s16, 1
    %p55 = por %p53, %p54
    %p56 = scmp.ne.s32.totalorder %s47, %s48
    %p57 = scmp.eq.s32.totalorder %s16, 0
    %p58 = por %p56, %p57
    %p59 = scmp.ne.s32.totalorder %s47, %s48
    %p60 = scmp.eq.s32.totalorder %s17, 1
    %p61 = por %p59, %p60
    %p63 = scmp.ne.s32.totalorder %s48, %s62
    %p64 = scmp.eq.s32.totalorder %s17, 0
    %p65 = por %p63, %p64
    %s67 = sadd.s32 %s66, 1
    %p70 = scmp.eq.s32.totalorder %s11, 1
    %p71 = scmp.ne.s32.totalorder %s66, %s68
    %p72 = scmp.eq.s32.totalorder %s11, 0
    %p73 = por %p71, %p72
    %p74 = scmp.ne.s32.totalorder %s66, %s68
    %p75 = scmp.eq.s32.totalorder %s16, 1
    %p76 = por %p74, %p75
    %p77 = scmp.ne.s32.totalorder %s68, %s69
    %p78 = scmp.eq.s32.totalorder %s16, 0
    %p79 = por %p77, %p78
    %p80 = scmp.ne.s32.totalorder %s68, %s69
    %p81 = scmp.eq.s32.totalorder %s17, 1
    %p82 = por %p80, %p81
    %p84 = scmp.ne.s32.totalorder %s69, %s83
    %p85 = scmp.eq.s32.totalorder %s17, 0
    %p86 = por %p84, %p85
    %s87 = ssub.s32 %s11, %s18
    %p88 = scmp.eq.s32.totalorder %s87, 0
    %s90 = sadd.s32 %s89, 1
    %s91 = scalar_select %p88, %s89, %s90
    %p94 = pneg %p88
    %p95 = scmp.eq.s32.totalorder %s11, 1
    %p96 = por %p94, %p95
    %p97 = scmp.ne.s32.totalorder %s89, %s92
    %p98 = scmp.eq.s32.totalorder %s11, 0
    %p99 = por %p97, %p98
    %p100 = scmp.ne.s32.totalorder %s89, %s92
    %p101 = scmp.eq.s32.totalorder %s16, 1
    %p102 = por %p100, %p101
    %p103 = scmp.ne.s32.totalorder %s92, %s93
    %p104 = scmp.eq.s32.totalorder %s16, 0
    %p105 = por %p103, %p104
    %p106 = scmp.ne.s32.totalorder %s92, %s93
    %p107 = scmp.eq.s32.totalorder %s17, 1
    %p108 = por %p106, %p107
    %p110 = scmp.ne.s32.totalorder %s93, %s109
    %p111 = scmp.eq.s32.totalorder %s17, 0
    %p112 = por %p110, %p111
    %s113 = ssub.s32 %s11, %s18
    %p114 = scmp.eq.s32.totalorder %s113, 0
    %s116 = sadd.s32 %s115, 1
    %s117 = scalar_select %p114, %s115, %s116
    %p120 = pneg %p114
    %p121 = scmp.eq.s32.totalorder %s11, 1
    %p122 = por %p120, %p121
    %p123 = scmp.ne.s32.totalorder %s115, %s118
    %p124 = scmp.eq.s32.totalorder %s11, 0
    %p125 = por %p123, %p124
    %p126 = scmp.ne.s32.totalorder %s115, %s118
    %p127 = scmp.eq.s32.totalorder %s16, 1
    %p128 = por %p126, %p127
    %p129 = scmp.ne.s32.totalorder %s118, %s119
    %p130 = scmp.eq.s32.totalorder %s16, 0
    %p131 = por %p129, %p130
    %p132 = scmp.ne.s32.totalorder %s118, %s119
    %p133 = scmp.eq.s32.totalorder %s17, 1
    %p134 = por %p132, %p133
    %p136 = scmp.ne.s32.totalorder %s119, %s135
    %p137 = scmp.eq.s32.totalorder %s17, 0
    %p138 = por %p136, %p137
    %p139 = scmp.le.s32.totalorder 1, %s11
    %p140 = scmp.lt.s32.totalorder %s11, 3
    %p141 = pnand %p139, %p140
    %p142 = pneg %p141
    // Predicated region
    $region9: #{net_forward.3} parent=5 // pred_check
      _
    $region10: #{net_forward.3} parent=5 // pred_check_branch
      %144 = sbr.rel (%p141) target = $region12
    $region11: #{net_forward.3} parent=5 // pred_region
      %s145 = ssub.s32 %s11, 1
      // Predicated region
      $region13: #{net_forward.3} parent=11 // pred_check
        %p146 = pneg %p58
      $region14: #{net_forward.3} parent=11 // pred_check_branch
        %148 = sbr.rel (%p146) target = $region16
      $region15: #{net_forward.3} parent=11 // pred_region
        _
      $region16: #{net_forward.3} parent=11 // pred_fallthru
        _
      // Predicated region
      $region17: #{net_forward.3} parent=11 // pred_check
        %p149 = pneg %p79
      $region18: #{net_forward.3} parent=11 // pred_check_branch
        %151 = sbr.rel (%p149) target = $region20
      $region19: #{net_forward.3} parent=11 // pred_region
        _
      $region20: #{net_forward.3} parent=11 // pred_fallthru
        _
    $region12: #{net_forward.3} parent=5 // pred_fallthru
      _
    %p152 = scmp.lt.s32.totalorder %s11, 2
    // Predicated region
    $region21: #{net_forward.3} parent=5 // pred_check
      %p153 = pneg %p152
    $region22: #{net_forward.3} parent=5 // pred_check_branch
      %155 = sbr.rel (%p153) target = $region24
    $region23: #{net_forward.3} parent=5 // pred_region
      // Predicated region
      $region25: #{net_forward.3} parent=23 // pred_check
        %p156 = pneg %p31
      $region26: #{net_forward.3} parent=23 // pred_check_branch
        %158 = sbr.rel (%p156) target = $region28
      $region27: #{net_forward.3} parent=23 // pred_region
        %s159 = smul.u32 72, %s11
        %p160 = scmp.lt.s32.totalorder %s159, 143
        %s161 = scalar_select %p160, %s159, 143
        %s162 = smul.addr %s161, 8
        %s163 = scalar_lea.vmem %s0, %s162
        %s164 = smul.u32 72, %s11
      $region28: #{net_forward.3} parent=23 // pred_fallthru
        _
    $region24: #{net_forward.3} parent=5 // pred_fallthru
      _
    %p165 = scmp.le.s32.totalorder 1, %s11
    %p166 = scmp.lt.s32.totalorder %s11, 3
    %p167 = pnand %p165, %p166
    %p168 = pneg %p167
    // Predicated region
    $region29: #{net_forward.3} parent=5 // pred_check
      _
    $region30: #{net_forward.3} parent=5 // pred_check_branch
      %170 = sbr.rel (%p167) target = $region32
    $region31: #{net_forward.3} parent=5 // pred_region
      %s171 = ssub.s32 %s11, 1
      %s172 = smul.u32 72, %s16
      %p173 = scmp.lt.s32.totalorder %s172, 143
      %s174 = scalar_select %p173, %s172, 143
      %s175 = smul.addr %s174, 8
      %s176 = scalar_lea.vmem %s0, %s175
      %p177 = pneg %p37
      %p178 = pneg %p34
      %p179 = pneg %p58
      %p180 = pneg %p55
      %p181 = pneg %p79
      %p182 = pneg %p76
      %p183 = pneg %p105
      %p184 = pneg %p102
      %s185 = smul.u32 72, %s16
      %p186 = scmp.lt.s32.totalorder %s185, 143
      %s187 = scalar_select %p186, %s185, 143
      %s188 = smul.addr %s187, 8
      %s189 = scalar_lea.vmem %s3, %s188
      %p190 = pneg %p131
      %p191 = pneg %p128
      %s192 = smul.u32 18, %s16
      %p193 = scmp.lt.s32.totalorder %s192, 35
      %s194 = scalar_select %p193, %s192, 35
      %s195 = smul.addr %s194, 8
      %s196 = scalar_lea.vmem %s4, %s195
      %s197 = smul.u32 72, %s16
      %p198 = scmp.lt.s32.totalorder %s197, 143
      %s199 = scalar_select %p198, %s197, 143
      %s200 = smul.addr %s199, 8
      %s201 = scalar_lea.vmem %s0, %s200
      %s202 = smul.u32 72, %s16
      %s203 = smul.u32 72, %s16
      %p204 = scmp.lt.s32.totalorder %s203, 143
      %s205 = scalar_select %p204, %s203, 143
      %s206 = smul.addr %s205, 8
      %s207 = scalar_lea.vmem %s3, %s206
      %s208 = smul.u32 72, %s16
      %s209 = smul.u32 18, %s16
      %p210 = scmp.lt.s32.totalorder %s209, 35
      %s211 = scalar_select %p210, %s209, 35
      %s212 = smul.addr %s211, 8
      %s213 = scalar_lea.vmem %s4, %s212
      %s214 = smul.u32 18, %s16
      %v215 = vld [vmem:[%s201] sm:$0xff]
      %v216 = vld [vmem:[%s201 + $0x8] sm:$0xff]
      %v217 = vld [vmem:[%s201 + $0x10] sm:$0xff]
      %v218 = vld [vmem:[%s201 + $0x18] sm:$0xff]
      %v219 = vld [vmem:[%s201 + $0x20] sm:$0xff]
      %v220 = vld [vmem:[%s201 + $0x28] sm:$0xff]
      %v221 = vld [vmem:[%s201 + $0x30] sm:$0xff]
      %v222 = vld [vmem:[%s201 + $0x38] sm:$0xff]
      %v223 = vld [vmem:[%s201 + $0x40] sm:$0xff]
      %v224 = vld [vmem:[%s201 + $0x48] sm:$0xff]
      %v225 = vld [vmem:[%s201 + $0x50] sm:$0xff]
      %v226 = vld [vmem:[%s201 + $0x58] sm:$0xff]
      %v227 = vld [vmem:[%s201 + $0x60] sm:$0xff]
      %v228 = vld [vmem:[%s201 + $0x68] sm:$0xff]
      %v229 = vld [vmem:[%s201 + $0x70] sm:$0xff]
      %v230 = vld [vmem:[%s201 + $0x78] sm:$0xff]
      %v231 = vld [vmem:[%s201 + $0x80] sm:$0xff]
      %v232 = vld [vmem:[%s201 + $0x88] sm:$0xff]
      %v233 = vld [vmem:[%s201 + $0x90] sm:$0xff]
      %v234 = vld [vmem:[%s201 + $0x98] sm:$0xff]
      %v235 = vld [vmem:[%s201 + $0xa0] sm:$0xff]
      %v236 = vld [vmem:[%s201 + $0xa8] sm:$0xff]
      %v237 = vld [vmem:[%s201 + $0xb0] sm:$0xff]
      %v238 = vld [vmem:[%s201 + $0xb8] sm:$0xff]
      %v239 = vld [vmem:[%s201 + $0xc0] sm:$0xff]
      %v240 = vld [vmem:[%s201 + $0xc8] sm:$0xff]
      %v241 = vld [vmem:[%s201 + $0xd0] sm:$0xff]
      %v242 = vld [vmem:[%s201 + $0xd8] sm:$0xff]
      %v243 = vld [vmem:[%s201 + $0xe0] sm:$0xff]
      %v244 = vld [vmem:[%s201 + $0xe8] sm:$0xff]
      %v245 = vld [vmem:[%s201 + $0xf0] sm:$0xff]
      %v246 = vld [vmem:[%s201 + $0xf8] sm:$0xff]
      %v247 = vld [vmem:[%s201 + $0x100] sm:$0xff]
      %v248 = vld [vmem:[%s201 + $0x108] sm:$0xff]
      %v249 = vld [vmem:[%s201 + $0x110] sm:$0xff]
      %v250 = vld [vmem:[%s201 + $0x118] sm:$0xff]
      %v251 = vld [vmem:[%s201 + $0x120] sm:$0xff]
      %v252 = vld [vmem:[%s201 + $0x128] sm:$0xff]
      %v253 = vld [vmem:[%s201 + $0x130] sm:$0xff]
      %v254 = vld [vmem:[%s201 + $0x138] sm:$0xff]
      %v255 = vld [vmem:[%s201 + $0x140] sm:$0xff]
      %v256 = vld [vmem:[%s201 + $0x148] sm:$0xff]
      %v257 = vld [vmem:[%s201 + $0x150] sm:$0xff]
      %v258 = vld [vmem:[%s201 + $0x158] sm:$0xff]
      %v259 = vld [vmem:[%s201 + $0x160] sm:$0xff]
      %v260 = vld [vmem:[%s201 + $0x168] sm:$0xff]
      %v261 = vld [vmem:[%s201 + $0x170] sm:$0xff]
      %v262 = vld [vmem:[%s201 + $0x178] sm:$0xff]
      %v263 = vld [vmem:[%s201 + $0x180] sm:$0xff]
      %v264 = vld [vmem:[%s201 + $0x188] sm:$0xff]
      %v265 = vld [vmem:[%s201 + $0x190] sm:$0xff]
      %v266 = vld [vmem:[%s201 + $0x198] sm:$0xff]
      %v267 = vld [vmem:[%s201 + $0x1a0] sm:$0xff]
      %v268 = vld [vmem:[%s201 + $0x1a8] sm:$0xff]
      %v269 = vld [vmem:[%s201 + $0x1b0] sm:$0xff]
      %v270 = vld [vmem:[%s201 + $0x1b8] sm:$0xff]
      %v271 = vld [vmem:[%s201 + $0x1c0] sm:$0xff]
      %v272 = vld [vmem:[%s201 + $0x1c8] sm:$0xff]
      %v273 = vld [vmem:[%s201 + $0x1d0] sm:$0xff]
      %v274 = vld [vmem:[%s201 + $0x1d8] sm:$0xff]
      %v275 = vld [vmem:[%s201 + $0x1e0] sm:$0xff]
      %v276 = vld [vmem:[%s201 + $0x1e8] sm:$0xff]
      %v277 = vld [vmem:[%s201 + $0x1f0] sm:$0xff]
      %v278 = vld [vmem:[%s201 + $0x1f8] sm:$0xff]
      %v279 = vld [vmem:[%s201 + $0x200] sm:$0xff]
      %v280 = vld [vmem:[%s201 + $0x208] sm:$0xff]
      %v281 = vld [vmem:[%s201 + $0x210] sm:$0xff]
      %v282 = vld [vmem:[%s201 + $0x218] sm:$0xff]
      %v283 = vld [vmem:[%s201 + $0x220] sm:$0xff]
      %v284 = vld [vmem:[%s201 + $0x228] sm:$0xff]
      %v285 = vld [vmem:[%s201 + $0x230] sm:$0xff]
      %v286 = vld [vmem:[%s201 + $0x238] sm:$0xff]
      %v287 = vld [vmem:[%s1] sm:$0xff]
      %v288 = vld [vmem:[%s1 + $0x8] sm:$0xff]
      %v289 = vld [vmem:[%s1 + $0x10] sm:$0xff]
      %v290 = vld [vmem:[%s1 + $0x18] sm:$0x1]
      %v291 = vld [vmem:[%s2] sm:$0x1]
      %v293 = vlaneseq
      %v294 = vshrl.u32 %v293, 7
      %v295 = vsub.s32 0, %v294
      %v296 = vrot.slane %v291, %v295
      %vm298 = vcmask 203776
      %v300 = vsel %vm298, %v215, 0
      %v303 = vsel %vm298, %v216, 0
      %v306 = vsel %vm298, %v217, 0
      %v309 = vsel %vm298, %v218, 0
      %v312 = vsel %vm298, %v219, 0
      %v315 = vsel %vm298, %v220, 0
      %v318 = vsel %vm298, %v221, 0
      %v321 = vsel %vm298, %v222, 0
      %v324 = vsel %vm298, %v223, 0
      %v327 = vsel %vm298, %v224, 0
      %v330 = vsel %vm298, %v225, 0
      %v333 = vsel %vm298, %v226, 0
      %v336 = vsel %vm298, %v227, 0
      %v339 = vsel %vm298, %v228, 0
      %v342 = vsel %vm298, %v229, 0
      %v345 = vsel %vm298, %v230, 0
      %v348 = vsel %vm298, %v231, 0
      %v351 = vsel %vm298, %v232, 0
      %v354 = vsel %vm298, %v233, 0
      %v357 = vsel %vm298, %v234, 0
      %v360 = vsel %vm298, %v235, 0
      %v363 = vsel %vm298, %v236, 0
      %v366 = vsel %vm298, %v237, 0
      %v369 = vsel %vm298, %v238, 0
      %v372 = vsel %vm298, %v239, 0
      %v375 = vsel %vm298, %v240, 0
      %v378 = vsel %vm298, %v241, 0
      %v381 = vsel %vm298, %v242, 0
      %v384 = vsel %vm298, %v243, 0
      %v387 = vsel %vm298, %v244, 0
      %v390 = vsel %vm298, %v245, 0
      %v393 = vsel %vm298, %v246, 0
      %v396 = vsel %vm298, %v247, 0
      %v399 = vsel %vm298, %v248, 0
      %v402 = vsel %vm298, %v249, 0
      %v405 = vsel %vm298, %v250, 0
      %v408 = vsel %vm298, %v251, 0
      %v411 = vsel %vm298, %v252, 0
      %v414 = vsel %vm298, %v253, 0
      %v417 = vsel %vm298, %v254, 0
      %v420 = vsel %vm298, %v255, 0
      %v423 = vsel %vm298, %v256, 0
      %v426 = vsel %vm298, %v257, 0
      %v429 = vsel %vm298, %v258, 0
      %v432 = vsel %vm298, %v259, 0
      %v435 = vsel %vm298, %v260, 0
      %v438 = vsel %vm298, %v261, 0
      %v441 = vsel %vm298, %v262, 0
      %v444 = vsel %vm298, %v263, 0
      %v447 = vsel %vm298, %v264, 0
      %v450 = vsel %vm298, %v265, 0
      %v453 = vsel %vm298, %v266, 0
      %v456 = vsel %vm298, %v267, 0
      %v459 = vsel %vm298, %v268, 0
      %v462 = vsel %vm298, %v269, 0
      %v465 = vsel %vm298, %v270, 0
      %v468 = vsel %vm298, %v271, 0
      %v471 = vsel %vm298, %v272, 0
      %v474 = vsel %vm298, %v273, 0
      %v477 = vsel %vm298, %v274, 0
      %v480 = vsel %vm298, %v275, 0
      %v483 = vsel %vm298, %v276, 0
      %v486 = vsel %vm298, %v277, 0
      %v489 = vsel %vm298, %v278, 0
      %v492 = vsel %vm298, %v279, 0
      %v495 = vsel %vm298, %v280, 0
      %v498 = vsel %vm298, %v281, 0
      %v501 = vsel %vm298, %v282, 0
      %v504 = vsel %vm298, %v283, 0
      %v507 = vsel %vm298, %v284, 0
      %v510 = vsel %vm298, %v285, 0
      %v513 = vsel %vm298, %v286, 0
      %vm515 = vcmask 1040384
      %v517 = vsel %vm515, %v290, 0
      %519 = vmatprep.subr.mxu0 0.0
      %520 = vmatpush1.msra.mxu0 0.0
      %521 = vmatprep.subr.mxu0 0.0
      %522 = vmatpush1.msra.mxu0 0.0
      %523 = vmatprep.subr.mxu0 0.0
      %524 = vmatpush1.msra.mxu0 0.0
      %525 = vmatprep.subr.mxu0 0.0
      %526 = vmatpush1.msra.mxu0 0.0
      %527 = vmatprep.subr.mxu0 0.0
      %528 = vmatpush1.msra.mxu0 0.0
      %529 = vmatprep.subr.mxu0 0.0
      %530 = vmatpush1.msra.mxu0 0.0
      %531 = vmatprep.subr.mxu0 0.0
      %532 = vmatpush1.msra.mxu0 0.0
      %533 = vmatprep.subr.mxu0 0.0
      %534 = vmatpush1.msra.mxu0 0.0
      %535 = vmatprep.subr.mxu0 0.0
      %536 = vmatpush1.msra.mxu0 0.0
      %537 = vmatprep.subr.mxu0 0.0
      %538 = vmatpush1.msra.mxu0 0.0
      %539 = vmatprep.subr.mxu0 0.0
      %540 = vmatpush1.msra.mxu0 0.0
      %541 = vmatprep.subr.mxu0 0.0
      %542 = vmatpush1.msra.mxu0 0.0
      %543 = vmatprep.subr.mxu0 0.0
      %544 = vmatpush1.msra.mxu0 %v517
      %545 = vmatprep.subr.mxu0 0.0
      %546 = vmatpush1.msra.mxu0 %v289
      %547 = vmatprep.subr.mxu0 0.0
      %548 = vmatpush1.msra.mxu0 %v288
      %549 = vmatprep.subr.mxu0 0.0
      %550 = vmatpush1.msra.mxu0 %v287
      %551 = vmatprep.subr.mxu0 0.0
      %552 = vmatpush2.msra.mxu0 0.0
      %553 = vmatprep.subr.mxu0 0.0
      %554 = vmatpush2.msra.mxu0 0.0
      %555 = vmatprep.subr.mxu0 0.0
      %556 = vmatpush2.msra.mxu0 0.0
      %557 = vmatprep.subr.mxu0 0.0
      %558 = vmatpush2.msra.mxu0 0.0
      %559 = vmatprep.subr.mxu0 0.0
      %560 = vmatpush2.msra.mxu0 0.0
      %561 = vmatprep.subr.mxu0 0.0
      %562 = vmatpush2.msra.mxu0 0.0
      %563 = vmatprep.subr.mxu0 0.0
      %564 = vmatpush2.msra.mxu0 0.0
      %565 = vmatprep.subr.mxu0 0.0
      %566 = vmatpush2.msra.mxu0 0.0
      %567 = vmatprep.subr.mxu0 0.0
      %568 = vmatpush2.msra.mxu0 0.0
      %569 = vmatprep.subr.mxu0 0.0
      %570 = vmatpush2.msra.mxu0 0.0
      %571 = vmatprep.subr.mxu0 0.0
      %572 = vmatpush2.msra.mxu0 0.0
      %573 = vmatprep.subr.mxu0 0.0
      %574 = vmatpush2.msra.mxu0 0.0
      %575 = vmatprep.subr.mxu0 0.0
      %576 = vmatpush2.msra.mxu0 0.0
      %577 = vmatprep.subr.mxu0 0.0
      %578 = vmatpush2.msra.mxu0 0.0
      %579 = vmatprep.subr.mxu0 0.0
      %580 = vmatpush2.msra.mxu0 0.0
      %581 = vmatprep.subr.mxu0 0.0
      %582 = vmatpush2.msra.mxu0 0.0
      %583 = vmatprep.mubr.f32.mxu0 0.0
      %584 = vmatmul.mubr.f32.gmra.mxu0 %v300
      %v585 = vpop.f32.mrf.mxu0
      %v586 = vadd.f32 %v296, %v585
      %v587 = vpop.f32.mrf.mxu0
      %588 = vmatprep.mubr.f32.mxu0 0.0
      %589 = vmatmul.mubr.f32.gmra.mxu0 %v303
      %v590 = vpop.f32.mrf.mxu0
      %v591 = vadd.f32 %v296, %v590
      %v592 = vpop.f32.mrf.mxu0
      %593 = vmatprep.mubr.f32.mxu0 0.0
      %594 = vmatmul.mubr.f32.gmra.mxu0 %v306
      %v595 = vpop.f32.mrf.mxu0
      %v596 = vadd.f32 %v296, %v595
      %v597 = vpop.f32.mrf.mxu0
      %598 = vmatprep.mubr.f32.mxu0 0.0
      %599 = vmatmul.mubr.f32.gmra.mxu0 %v309
      %v600 = vpop.f32.mrf.mxu0
      %v601 = vadd.f32 %v296, %v600
      %v602 = vpop.f32.mrf.mxu0
      %603 = vmatprep.mubr.f32.mxu0 0.0
      %604 = vmatmul.mubr.f32.gmra.mxu0 %v312
      %v605 = vpop.f32.mrf.mxu0
      %v606 = vadd.f32 %v296, %v605
      %v607 = vpop.f32.mrf.mxu0
      %608 = vmatprep.mubr.f32.mxu0 0.0
      %609 = vmatmul.mubr.f32.gmra.mxu0 %v315
      %v610 = vpop.f32.mrf.mxu0
      %v611 = vadd.f32 %v296, %v610
      %v612 = vpop.f32.mrf.mxu0
      %613 = vmatprep.mubr.f32.mxu0 0.0
      %614 = vmatmul.mubr.f32.gmra.mxu0 %v318
      %v615 = vpop.f32.mrf.mxu0
      %v616 = vadd.f32 %v296, %v615
      %v617 = vpop.f32.mrf.mxu0
      %618 = vmatprep.mubr.f32.mxu0 0.0
      %619 = vmatmul.mubr.f32.gmra.mxu0 %v321
      %v620 = vpop.f32.mrf.mxu0
      %v621 = vadd.f32 %v296, %v620
      %v622 = vpop.f32.mrf.mxu0
      %623 = vmatprep.mubr.f32.mxu0 0.0
      %624 = vmatmul.mubr.f32.gmra.mxu0 %v324
      %v625 = vpop.f32.mrf.mxu0
      %v626 = vadd.f32 %v296, %v625
      %v627 = vpop.f32.mrf.mxu0
      %628 = vmatprep.mubr.f32.mxu0 0.0
      %629 = vmatmul.mubr.f32.gmra.mxu0 %v327
      %v630 = vpop.f32.mrf.mxu0
      %v631 = vadd.f32 %v296, %v630
      %v632 = vpop.f32.mrf.mxu0
      %633 = vmatprep.mubr.f32.mxu0 0.0
      %634 = vmatmul.mubr.f32.gmra.mxu0 %v330
      %v635 = vpop.f32.mrf.mxu0
      %v636 = vadd.f32 %v296, %v635
      %v637 = vpop.f32.mrf.mxu0
      %638 = vmatprep.mubr.f32.mxu0 0.0
      %639 = vmatmul.mubr.f32.gmra.mxu0 %v333
      %v640 = vpop.f32.mrf.mxu0
      %v641 = vadd.f32 %v296, %v640
      %v642 = vpop.f32.mrf.mxu0
      %643 = vmatprep.mubr.f32.mxu0 0.0
      %644 = vmatmul.mubr.f32.gmra.mxu0 %v336
      %v645 = vpop.f32.mrf.mxu0
      %v646 = vadd.f32 %v296, %v645
      %v647 = vpop.f32.mrf.mxu0
      %648 = vmatprep.mubr.f32.mxu0 0.0
      %649 = vmatmul.mubr.f32.gmra.mxu0 %v339
      %v650 = vpop.f32.mrf.mxu0
      %v651 = vadd.f32 %v296, %v650
      %v652 = vpop.f32.mrf.mxu0
      %653 = vmatprep.mubr.f32.mxu0 0.0
      %654 = vmatmul.mubr.f32.gmra.mxu0 %v342
      %v655 = vpop.f32.mrf.mxu0
      %v656 = vadd.f32 %v296, %v655
      %v657 = vpop.f32.mrf.mxu0
      %658 = vmatprep.mubr.f32.mxu0 0.0
      %659 = vmatmul.mubr.f32.gmra.mxu0 %v345
      %v660 = vpop.f32.mrf.mxu0
      %v661 = vadd.f32 %v296, %v660
      %v662 = vpop.f32.mrf.mxu0
      %663 = vmatprep.mubr.f32.mxu0 0.0
      %664 = vmatmul.mubr.f32.gmra.mxu0 %v348
      %v665 = vpop.f32.mrf.mxu0
      %v666 = vadd.f32 %v296, %v665
      %v667 = vpop.f32.mrf.mxu0
      %668 = vmatprep.mubr.f32.mxu0 0.0
      %669 = vmatmul.mubr.f32.gmra.mxu0 %v351
      %v670 = vpop.f32.mrf.mxu0
      %v671 = vadd.f32 %v296, %v670
      %v672 = vpop.f32.mrf.mxu0
      %673 = vmatprep.mubr.f32.mxu0 0.0
      %674 = vmatmul.mubr.f32.gmra.mxu0 %v354
      %v675 = vpop.f32.mrf.mxu0
      %v676 = vadd.f32 %v296, %v675
      %v677 = vpop.f32.mrf.mxu0
      %678 = vmatprep.mubr.f32.mxu0 0.0
      %679 = vmatmul.mubr.f32.gmra.mxu0 %v357
      %v680 = vpop.f32.mrf.mxu0
      %v681 = vadd.f32 %v296, %v680
      %v682 = vpop.f32.mrf.mxu0
      %683 = vmatprep.mubr.f32.mxu0 0.0
      %684 = vmatmul.mubr.f32.gmra.mxu0 %v360
      %v685 = vpop.f32.mrf.mxu0
      %v686 = vadd.f32 %v296, %v685
      %v687 = vpop.f32.mrf.mxu0
      %688 = vmatprep.mubr.f32.mxu0 0.0
      %689 = vmatmul.mubr.f32.gmra.mxu0 %v363
      %v690 = vpop.f32.mrf.mxu0
      %v691 = vadd.f32 %v296, %v690
      %v692 = vpop.f32.mrf.mxu0
      %693 = vmatprep.mubr.f32.mxu0 0.0
      %694 = vmatmul.mubr.f32.gmra.mxu0 %v366
      %v695 = vpop.f32.mrf.mxu0
      %v696 = vadd.f32 %v296, %v695
      %v697 = vpop.f32.mrf.mxu0
      %698 = vmatprep.mubr.f32.mxu0 0.0
      %699 = vmatmul.mubr.f32.gmra.mxu0 %v369
      %v700 = vpop.f32.mrf.mxu0
      %v701 = vadd.f32 %v296, %v700
      %v702 = vpop.f32.mrf.mxu0
      %703 = vmatprep.mubr.f32.mxu0 0.0
      %704 = vmatmul.mubr.f32.gmra.mxu0 %v372
      %v705 = vpop.f32.mrf.mxu0
      %v706 = vadd.f32 %v296, %v705
      %v707 = vpop.f32.mrf.mxu0
      %708 = vmatprep.mubr.f32.mxu0 0.0
      %709 = vmatmul.mubr.f32.gmra.mxu0 %v375
      %v710 = vpop.f32.mrf.mxu0
      %v711 = vadd.f32 %v296, %v710
      %v712 = vpop.f32.mrf.mxu0
      %713 = vmatprep.mubr.f32.mxu0 0.0
      %714 = vmatmul.mubr.f32.gmra.mxu0 %v378
      %v715 = vpop.f32.mrf.mxu0
      %v716 = vadd.f32 %v296, %v715
      %v717 = vpop.f32.mrf.mxu0
      %718 = vmatprep.mubr.f32.mxu0 0.0
      %719 = vmatmul.mubr.f32.gmra.mxu0 %v381
      %v720 = vpop.f32.mrf.mxu0
      %v721 = vadd.f32 %v296, %v720
      %v722 = vpop.f32.mrf.mxu0
      %723 = vmatprep.mubr.f32.mxu0 0.0
      %724 = vmatmul.mubr.f32.gmra.mxu0 %v384
      %v725 = vpop.f32.mrf.mxu0
      %v726 = vadd.f32 %v296, %v725
      %v727 = vpop.f32.mrf.mxu0
      %728 = vmatprep.mubr.f32.mxu0 0.0
      %729 = vmatmul.mubr.f32.gmra.mxu0 %v387
      %v730 = vpop.f32.mrf.mxu0
      %v731 = vadd.f32 %v296, %v730
      %v732 = vpop.f32.mrf.mxu0
      %733 = vmatprep.mubr.f32.mxu0 0.0
      %734 = vmatmul.mubr.f32.gmra.mxu0 %v390
      %v735 = vpop.f32.mrf.mxu0
      %v736 = vadd.f32 %v296, %v735
      %v737 = vpop.f32.mrf.mxu0
      %738 = vmatprep.mubr.f32.mxu0 0.0
      %739 = vmatmul.mubr.f32.gmra.mxu0 %v393
      %v740 = vpop.f32.mrf.mxu0
      %v741 = vadd.f32 %v296, %v740
      %v742 = vpop.f32.mrf.mxu0
      %743 = vmatprep.mubr.f32.mxu0 0.0
      %744 = vmatmul.mubr.f32.gmra.mxu0 %v396
      %v745 = vpop.f32.mrf.mxu0
      %v746 = vadd.f32 %v296, %v745
      %v747 = vpop.f32.mrf.mxu0
      %748 = vmatprep.mubr.f32.mxu0 0.0
      %749 = vmatmul.mubr.f32.gmra.mxu0 %v399
      %v750 = vpop.f32.mrf.mxu0
      %v751 = vadd.f32 %v296, %v750
      %v752 = vpop.f32.mrf.mxu0
      %753 = vmatprep.mubr.f32.mxu0 0.0
      %754 = vmatmul.mubr.f32.gmra.mxu0 %v402
      %v755 = vpop.f32.mrf.mxu0
      %v756 = vadd.f32 %v296, %v755
      %v757 = vpop.f32.mrf.mxu0
      %758 = vmatprep.mubr.f32.mxu0 0.0
      %759 = vmatmul.mubr.f32.gmra.mxu0 %v405
      %v760 = vpop.f32.mrf.mxu0
      %v761 = vadd.f32 %v296, %v760
      %v762 = vpop.f32.mrf.mxu0
      %763 = vmatprep.mubr.f32.mxu0 0.0
      %764 = vmatmul.mubr.f32.gmra.mxu0 %v408
      %v765 = vpop.f32.mrf.mxu0
      %v766 = vadd.f32 %v296, %v765
      %v767 = vpop.f32.mrf.mxu0
      %768 = vmatprep.mubr.f32.mxu0 0.0
      %769 = vmatmul.mubr.f32.gmra.mxu0 %v411
      %v770 = vpop.f32.mrf.mxu0
      %v771 = vadd.f32 %v296, %v770
      %v772 = vpop.f32.mrf.mxu0
      %773 = vmatprep.mubr.f32.mxu0 0.0
      %774 = vmatmul.mubr.f32.gmra.mxu0 %v414
      %v775 = vpop.f32.mrf.mxu0
      %v776 = vadd.f32 %v296, %v775
      %v777 = vpop.f32.mrf.mxu0
      %778 = vmatprep.mubr.f32.mxu0 0.0
      %779 = vmatmul.mubr.f32.gmra.mxu0 %v417
      %v780 = vpop.f32.mrf.mxu0
      %v781 = vadd.f32 %v296, %v780
      %v782 = vpop.f32.mrf.mxu0
      %783 = vmatprep.mubr.f32.mxu0 0.0
      %784 = vmatmul.mubr.f32.gmra.mxu0 %v420
      %v785 = vpop.f32.mrf.mxu0
      %v786 = vadd.f32 %v296, %v785
      %v787 = vpop.f32.mrf.mxu0
      %788 = vmatprep.mubr.f32.mxu0 0.0
      %789 = vmatmul.mubr.f32.gmra.mxu0 %v423
      %v790 = vpop.f32.mrf.mxu0
      %v791 = vadd.f32 %v296, %v790
      %v792 = vpop.f32.mrf.mxu0
      %793 = vmatprep.mubr.f32.mxu0 0.0
      %794 = vmatmul.mubr.f32.gmra.mxu0 %v426
      %v795 = vpop.f32.mrf.mxu0
      %v796 = vadd.f32 %v296, %v795
      %v797 = vpop.f32.mrf.mxu0
      %798 = vmatprep.mubr.f32.mxu0 0.0
      %799 = vmatmul.mubr.f32.gmra.mxu0 %v429
      %v800 = vpop.f32.mrf.mxu0
      %v801 = vadd.f32 %v296, %v800
      %v802 = vpop.f32.mrf.mxu0
      %803 = vmatprep.mubr.f32.mxu0 0.0
      %804 = vmatmul.mubr.f32.gmra.mxu0 %v432
      %v805 = vpop.f32.mrf.mxu0
      %v806 = vadd.f32 %v296, %v805
      %v807 = vpop.f32.mrf.mxu0
      %808 = vmatprep.mubr.f32.mxu0 0.0
      %809 = vmatmul.mubr.f32.gmra.mxu0 %v435
      %v810 = vpop.f32.mrf.mxu0
      %v811 = vadd.f32 %v296, %v810
      %v812 = vpop.f32.mrf.mxu0
      %813 = vmatprep.mubr.f32.mxu0 0.0
      %814 = vmatmul.mubr.f32.gmra.mxu0 %v438
      %v815 = vpop.f32.mrf.mxu0
      %v816 = vadd.f32 %v296, %v815
      %v817 = vpop.f32.mrf.mxu0
      %818 = vmatprep.mubr.f32.mxu0 0.0
      %819 = vmatmul.mubr.f32.gmra.mxu0 %v441
      %v820 = vpop.f32.mrf.mxu0
      %v821 = vadd.f32 %v296, %v820
      %v822 = vpop.f32.mrf.mxu0
      %823 = vmatprep.mubr.f32.mxu0 0.0
      %824 = vmatmul.mubr.f32.gmra.mxu0 %v444
      %v825 = vpop.f32.mrf.mxu0
      %v826 = vadd.f32 %v296, %v825
      %v827 = vpop.f32.mrf.mxu0
      %828 = vmatprep.mubr.f32.mxu0 0.0
      %829 = vmatmul.mubr.f32.gmra.mxu0 %v447
      %v830 = vpop.f32.mrf.mxu0
      %v831 = vadd.f32 %v296, %v830
      %v832 = vpop.f32.mrf.mxu0
      %833 = vmatprep.mubr.f32.mxu0 0.0
      %834 = vmatmul.mubr.f32.gmra.mxu0 %v450
      %v835 = vpop.f32.mrf.mxu0
      %v836 = vadd.f32 %v296, %v835
      %v837 = vpop.f32.mrf.mxu0
      %838 = vmatprep.mubr.f32.mxu0 0.0
      %839 = vmatmul.mubr.f32.gmra.mxu0 %v453
      %v840 = vpop.f32.mrf.mxu0
      %v841 = vadd.f32 %v296, %v840
      %v842 = vpop.f32.mrf.mxu0
      %843 = vmatprep.mubr.f32.mxu0 0.0
      %844 = vmatmul.mubr.f32.gmra.mxu0 %v456
      %v845 = vpop.f32.mrf.mxu0
      %v846 = vadd.f32 %v296, %v845
      %v847 = vpop.f32.mrf.mxu0
      %848 = vmatprep.mubr.f32.mxu0 0.0
      %849 = vmatmul.mubr.f32.gmra.mxu0 %v459
      %v850 = vpop.f32.mrf.mxu0
      %v851 = vadd.f32 %v296, %v850
      %v852 = vpop.f32.mrf.mxu0
      %853 = vmatprep.mubr.f32.mxu0 0.0
      %854 = vmatmul.mubr.f32.gmra.mxu0 %v462
      %v855 = vpop.f32.mrf.mxu0
      %v856 = vadd.f32 %v296, %v855
      %v857 = vpop.f32.mrf.mxu0
      %858 = vmatprep.mubr.f32.mxu0 0.0
      %859 = vmatmul.mubr.f32.gmra.mxu0 %v465
      %v860 = vpop.f32.mrf.mxu0
      %v861 = vadd.f32 %v296, %v860
      %v862 = vpop.f32.mrf.mxu0
      %863 = vmatprep.mubr.f32.mxu0 0.0
      %864 = vmatmul.mubr.f32.gmra.mxu0 %v468
      %v865 = vpop.f32.mrf.mxu0
      %v866 = vadd.f32 %v296, %v865
      %v867 = vpop.f32.mrf.mxu0
      %868 = vmatprep.mubr.f32.mxu0 0.0
      %869 = vmatmul.mubr.f32.gmra.mxu0 %v471
      %v870 = vpop.f32.mrf.mxu0
      %v871 = vadd.f32 %v296, %v870
      %v872 = vpop.f32.mrf.mxu0
      %873 = vmatprep.mubr.f32.mxu0 0.0
      %874 = vmatmul.mubr.f32.gmra.mxu0 %v474
      %v875 = vpop.f32.mrf.mxu0
      %v876 = vadd.f32 %v296, %v875
      %v877 = vpop.f32.mrf.mxu0
      %878 = vmatprep.mubr.f32.mxu0 0.0
      %879 = vmatmul.mubr.f32.gmra.mxu0 %v477
      %v880 = vpop.f32.mrf.mxu0
      %v881 = vadd.f32 %v296, %v880
      %v882 = vpop.f32.mrf.mxu0
      %883 = vmatprep.mubr.f32.mxu0 0.0
      %884 = vmatmul.mubr.f32.gmra.mxu0 %v480
      %v885 = vpop.f32.mrf.mxu0
      %v886 = vadd.f32 %v296, %v885
      %v887 = vpop.f32.mrf.mxu0
      %888 = vmatprep.mubr.f32.mxu0 0.0
      %889 = vmatmul.mubr.f32.gmra.mxu0 %v483
      %v890 = vpop.f32.mrf.mxu0
      %v891 = vadd.f32 %v296, %v890
      %v892 = vpop.f32.mrf.mxu0
      %893 = vmatprep.mubr.f32.mxu0 0.0
      %894 = vmatmul.mubr.f32.gmra.mxu0 %v486
      %v895 = vpop.f32.mrf.mxu0
      %v896 = vadd.f32 %v296, %v895
      %v897 = vpop.f32.mrf.mxu0
      %898 = vmatprep.mubr.f32.mxu0 0.0
      %899 = vmatmul.mubr.f32.gmra.mxu0 %v489
      %v900 = vpop.f32.mrf.mxu0
      %v901 = vadd.f32 %v296, %v900
      %v902 = vpop.f32.mrf.mxu0
      %903 = vmatprep.mubr.f32.mxu0 0.0
      %904 = vmatmul.mubr.f32.gmra.mxu0 %v492
      %v905 = vpop.f32.mrf.mxu0
      %v906 = vadd.f32 %v296, %v905
      %v907 = vpop.f32.mrf.mxu0
      %908 = vmatprep.mubr.f32.mxu0 0.0
      %909 = vmatmul.mubr.f32.gmra.mxu0 %v495
      %v910 = vpop.f32.mrf.mxu0
      %v911 = vadd.f32 %v296, %v910
      %v912 = vpop.f32.mrf.mxu0
      %913 = vmatprep.mubr.f32.mxu0 0.0
      %914 = vmatmul.mubr.f32.gmra.mxu0 %v498
      %v915 = vpop.f32.mrf.mxu0
      %v916 = vadd.f32 %v296, %v915
      %v917 = vpop.f32.mrf.mxu0
      %918 = vmatprep.mubr.f32.mxu0 0.0
      %919 = vmatmul.mubr.f32.gmra.mxu0 %v501
      %v920 = vpop.f32.mrf.mxu0
      %v921 = vadd.f32 %v296, %v920
      %v922 = vpop.f32.mrf.mxu0
      %923 = vmatprep.mubr.f32.mxu0 0.0
      %924 = vmatmul.mubr.f32.gmra.mxu0 %v504
      %v925 = vpop.f32.mrf.mxu0
      %v926 = vadd.f32 %v296, %v925
      %v927 = vpop.f32.mrf.mxu0
      %928 = vmatprep.mubr.f32.mxu0 0.0
      %929 = vmatmul.mubr.f32.gmra.mxu0 %v507
      %v930 = vpop.f32.mrf.mxu0
      %v931 = vadd.f32 %v296, %v930
      %v932 = vpop.f32.mrf.mxu0
      %933 = vmatprep.mubr.f32.mxu0 0.0
      %934 = vmatmul.mubr.f32.gmra.mxu0 %v510
      %v935 = vpop.f32.mrf.mxu0
      %v936 = vadd.f32 %v296, %v935
      %v937 = vpop.f32.mrf.mxu0
      %938 = vmatprep.mubr.f32.mxu0 0.0
      %939 = vmatmul.mubr.f32.gmra.mxu0 %v513
      %v940 = vpop.f32.mrf.mxu0
      %v941 = vadd.f32 %v296, %v940
      %v942 = vpop.f32.mrf.mxu0
      %943 = vdwg.mxu0
      %vm944 = vcmask 162816
      %945 = vst.msk [vmem:[%s207] sm:$0xff] %vm944, %v586
      %946 = vst.msk [vmem:[%s207 + $0x8] sm:$0xff] %vm944, %v591
      %947 = vst.msk [vmem:[%s207 + $0x10] sm:$0xff] %vm944, %v596
      %948 = vst.msk [vmem:[%s207 + $0x18] sm:$0xff] %vm944, %v601
      %949 = vst.msk [vmem:[%s207 + $0x20] sm:$0xff] %vm944, %v606
      %950 = vst.msk [vmem:[%s207 + $0x28] sm:$0xff] %vm944, %v611
      %951 = vst.msk [vmem:[%s207 + $0x30] sm:$0xff] %vm944, %v616
      %952 = vst.msk [vmem:[%s207 + $0x38] sm:$0xff] %vm944, %v621
      %953 = vst.msk [vmem:[%s207 + $0x40] sm:$0xff] %vm944, %v626
      %954 = vst.msk [vmem:[%s207 + $0x48] sm:$0xff] %vm944, %v631
      %955 = vst.msk [vmem:[%s207 + $0x50] sm:$0xff] %vm944, %v636
      %956 = vst.msk [vmem:[%s207 + $0x58] sm:$0xff] %vm944, %v641
      %957 = vst.msk [vmem:[%s207 + $0x60] sm:$0xff] %vm944, %v646
      %958 = vst.msk [vmem:[%s207 + $0x68] sm:$0xff] %vm944, %v651
      %959 = vst.msk [vmem:[%s207 + $0x70] sm:$0xff] %vm944, %v656
      %960 = vst.msk [vmem:[%s207 + $0x78] sm:$0xff] %vm944, %v661
      %961 = vst.msk [vmem:[%s207 + $0x80] sm:$0xff] %vm944, %v666
      %962 = vst.msk [vmem:[%s207 + $0x88] sm:$0xff] %vm944, %v671
      %963 = vst.msk [vmem:[%s207 + $0x90] sm:$0xff] %vm944, %v676
      %964 = vst.msk [vmem:[%s207 + $0x98] sm:$0xff] %vm944, %v681
      %965 = vst.msk [vmem:[%s207 + $0xa0] sm:$0xff] %vm944, %v686
      %966 = vst.msk [vmem:[%s207 + $0xa8] sm:$0xff] %vm944, %v691
      %967 = vst.msk [vmem:[%s207 + $0xb0] sm:$0xff] %vm944, %v696
      %968 = vst.msk [vmem:[%s207 + $0xb8] sm:$0xff] %vm944, %v701
      %969 = vst.msk [vmem:[%s207 + $0xc0] sm:$0xff] %vm944, %v706
      %970 = vst.msk [vmem:[%s207 + $0xc8] sm:$0xff] %vm944, %v711
      %971 = vst.msk [vmem:[%s207 + $0xd0] sm:$0xff] %vm944, %v716
      %972 = vst.msk [vmem:[%s207 + $0xd8] sm:$0xff] %vm944, %v721
      %973 = vst.msk [vmem:[%s207 + $0xe0] sm:$0xff] %vm944, %v726
      %974 = vst.msk [vmem:[%s207 + $0xe8] sm:$0xff] %vm944, %v731
      %975 = vst.msk [vmem:[%s207 + $0xf0] sm:$0xff] %vm944, %v736
      %976 = vst.msk [vmem:[%s207 + $0xf8] sm:$0xff] %vm944, %v741
      %977 = vst.msk [vmem:[%s207 + $0x100] sm:$0xff] %vm944, %v746
      %978 = vst.msk [vmem:[%s207 + $0x108] sm:$0xff] %vm944, %v751
      %979 = vst.msk [vmem:[%s207 + $0x110] sm:$0xff] %vm944, %v756
      %980 = vst.msk [vmem:[%s207 + $0x118] sm:$0xff] %vm944, %v761
      %981 = vst.msk [vmem:[%s207 + $0x120] sm:$0xff] %vm944, %v766
      %982 = vst.msk [vmem:[%s207 + $0x128] sm:$0xff] %vm944, %v771
      %983 = vst.msk [vmem:[%s207 + $0x130] sm:$0xff] %vm944, %v776
      %984 = vst.msk [vmem:[%s207 + $0x138] sm:$0xff] %vm944, %v781
      %985 = vst.msk [vmem:[%s207 + $0x140] sm:$0xff] %vm944, %v786
      %986 = vst.msk [vmem:[%s207 + $0x148] sm:$0xff] %vm944, %v791
      %987 = vst.msk [vmem:[%s207 + $0x150] sm:$0xff] %vm944, %v796
      %988 = vst.msk [vmem:[%s207 + $0x158] sm:$0xff] %vm944, %v801
      %989 = vst.msk [vmem:[%s207 + $0x160] sm:$0xff] %vm944, %v806
      %990 = vst.msk [vmem:[%s207 + $0x168] sm:$0xff] %vm944, %v811
      %991 = vst.msk [vmem:[%s207 + $0x170] sm:$0xff] %vm944, %v816
      %992 = vst.msk [vmem:[%s207 + $0x178] sm:$0xff] %vm944, %v821
      %993 = vst.msk [vmem:[%s207 + $0x180] sm:$0xff] %vm944, %v826
      %994 = vst.msk [vmem:[%s207 + $0x188] sm:$0xff] %vm944, %v831
      %995 = vst.msk [vmem:[%s207 + $0x190] sm:$0xff] %vm944, %v836
      %996 = vst.msk [vmem:[%s207 + $0x198] sm:$0xff] %vm944, %v841
      %997 = vst.msk [vmem:[%s207 + $0x1a0] sm:$0xff] %vm944, %v846
      %998 = vst.msk [vmem:[%s207 + $0x1a8] sm:$0xff] %vm944, %v851
      %999 = vst.msk [vmem:[%s207 + $0x1b0] sm:$0xff] %vm944, %v856
      %1000 = vst.msk [vmem:[%s207 + $0x1b8] sm:$0xff] %vm944, %v861
      %1001 = vst.msk [vmem:[%s207 + $0x1c0] sm:$0xff] %vm944, %v866
      %1002 = vst.msk [vmem:[%s207 + $0x1c8] sm:$0xff] %vm944, %v871
      %1003 = vst.msk [vmem:[%s207 + $0x1d0] sm:$0xff] %vm944, %v876
      %1004 = vst.msk [vmem:[%s207 + $0x1d8] sm:$0xff] %vm944, %v881
      %1005 = vst.msk [vmem:[%s207 + $0x1e0] sm:$0xff] %vm944, %v886
      %1006 = vst.msk [vmem:[%s207 + $0x1e8] sm:$0xff] %vm944, %v891
      %1007 = vst.msk [vmem:[%s207 + $0x1f0] sm:$0xff] %vm944, %v896
      %1008 = vst.msk [vmem:[%s207 + $0x1f8] sm:$0xff] %vm944, %v901
      %1009 = vst.msk [vmem:[%s207 + $0x200] sm:$0xff] %vm944, %v906
      %1010 = vst.msk [vmem:[%s207 + $0x208] sm:$0xff] %vm944, %v911
      %1011 = vst.msk [vmem:[%s207 + $0x210] sm:$0xff] %vm944, %v916
      %1012 = vst.msk [vmem:[%s207 + $0x218] sm:$0xff] %vm944, %v921
      %1013 = vst.msk [vmem:[%s207 + $0x220] sm:$0xff] %vm944, %v926
      %1014 = vst.msk [vmem:[%s207 + $0x228] sm:$0xff] %vm944, %v931
      %1015 = vst.msk [vmem:[%s207 + $0x230] sm:$0xff] %vm944, %v936
      %1016 = vst.msk [vmem:[%s207 + $0x238] sm:$0xff] %vm944, %v941
      %v1017 = vmax.f32 %v586, %v676
      %v1018 = vmax.f32 %v591, %v681
      %v1019 = vmax.f32 %v596, %v686
      %v1020 = vmax.f32 %v601, %v691
      %v1021 = vmax.f32 %v606, %v696
      %v1022 = vmax.f32 %v611, %v701
      %v1023 = vmax.f32 %v616, %v706
      %v1024 = vmax.f32 %v621, %v711
      %v1025 = vmax.f32 %v626, %v716
      %v1026 = vmax.f32 %v631, %v721
      %v1027 = vmax.f32 %v636, %v726
      %v1028 = vmax.f32 %v641, %v731
      %v1029 = vmax.f32 %v646, %v736
      %v1030 = vmax.f32 %v651, %v741
      %v1031 = vmax.f32 %v656, %v746
      %v1032 = vmax.f32 %v661, %v751
      %v1033 = vmax.f32 %v666, %v756
      %v1034 = vmax.f32 %v671, %v761
      %v1035 = vmax.f32 %v766, %v856
      %v1036 = vmax.f32 %v771, %v861
      %v1037 = vmax.f32 %v776, %v866
      %v1038 = vmax.f32 %v781, %v871
      %v1039 = vmax.f32 %v786, %v876
      %v1040 = vmax.f32 %v791, %v881
      %v1041 = vmax.f32 %v796, %v886
      %v1042 = vmax.f32 %v801, %v891
      %v1043 = vmax.f32 %v806, %v896
      %v1044 = vmax.f32 %v811, %v901
      %v1045 = vmax.f32 %v816, %v906
      %v1046 = vmax.f32 %v821, %v911
      %v1047 = vmax.f32 %v826, %v916
      %v1048 = vmax.f32 %v831, %v921
      %v1049 = vmax.f32 %v836, %v926
      %v1050 = vmax.f32 %v841, %v931
      %v1051 = vmax.f32 %v846, %v936
      %v1052 = vmax.f32 %v851, %v941
      %v1053 = vmax.f32 %v1017, %v1035
      %v1054 = vmax.f32 %v1018, %v1036
      %v1055 = vmax.f32 %v1019, %v1037
      %v1056 = vmax.f32 %v1020, %v1038
      %v1057 = vmax.f32 %v1021, %v1039
      %v1058 = vmax.f32 %v1022, %v1040
      %v1059 = vmax.f32 %v1023, %v1041
      %v1060 = vmax.f32 %v1024, %v1042
      %v1061 = vmax.f32 %v1025, %v1043
      %v1062 = vmax.f32 %v1026, %v1044
      %v1063 = vmax.f32 %v1027, %v1045
      %v1064 = vmax.f32 %v1028, %v1046
      %v1065 = vmax.f32 %v1029, %v1047
      %v1066 = vmax.f32 %v1030, %v1048
      %v1067 = vmax.f32 %v1031, %v1049
      %v1068 = vmax.f32 %v1032, %v1050
      %v1069 = vmax.f32 %v1033, %v1051
      %v1070 = vmax.f32 %v1034, %v1052
      %v1071 = vmax.f32 %v1053, 0.0
      %v1072 = vmax.f32 %v1054, 0.0
      %v1073 = vmax.f32 %v1055, 0.0
      %v1074 = vmax.f32 %v1056, 0.0
      %v1075 = vmax.f32 %v1057, 0.0
      %v1076 = vmax.f32 %v1058, 0.0
      %v1077 = vmax.f32 %v1059, 0.0
      %v1078 = vmax.f32 %v1060, 0.0
      %v1079 = vmax.f32 %v1061, 0.0
      %v1080 = vmax.f32 %v1062, 0.0
      %v1081 = vmax.f32 %v1063, 0.0
      %v1082 = vmax.f32 %v1064, 0.0
      %v1083 = vmax.f32 %v1065, 0.0
      %v1084 = vmax.f32 %v1066, 0.0
      %v1085 = vmax.f32 %v1067, 0.0
      %v1086 = vmax.f32 %v1068, 0.0
      %v1087 = vmax.f32 %v1069, 0.0
      %v1088 = vmax.f32 %v1070, 0.0
      %1089 = vst.msk [vmem:[%s213] sm:$0xff] %vm944, %v1071
      %1090 = vst.msk [vmem:[%s213 + $0x8] sm:$0xff] %vm944, %v1072
      %1091 = vst.msk [vmem:[%s213 + $0x10] sm:$0xff] %vm944, %v1073
      %1092 = vst.msk [vmem:[%s213 + $0x18] sm:$0xff] %vm944, %v1074
      %1093 = vst.msk [vmem:[%s213 + $0x20] sm:$0xff] %vm944, %v1075
      %1094 = vst.msk [vmem:[%s213 + $0x28] sm:$0xff] %vm944, %v1076
      %1095 = vst.msk [vmem:[%s213 + $0x30] sm:$0xff] %vm944, %v1077
      %1096 = vst.msk [vmem:[%s213 + $0x38] sm:$0xff] %vm944, %v1078
      %1097 = vst.msk [vmem:[%s213 + $0x40] sm:$0xff] %vm944, %v1079
      %1098 = vst.msk [vmem:[%s213 + $0x48] sm:$0xff] %vm944, %v1080
      %1099 = vst.msk [vmem:[%s213 + $0x50] sm:$0xff] %vm944, %v1081
      %1100 = vst.msk [vmem:[%s213 + $0x58] sm:$0xff] %vm944, %v1082
      %1101 = vst.msk [vmem:[%s213 + $0x60] sm:$0xff] %vm944, %v1083
      %1102 = vst.msk [vmem:[%s213 + $0x68] sm:$0xff] %vm944, %v1084
      %1103 = vst.msk [vmem:[%s213 + $0x70] sm:$0xff] %vm944, %v1085
      %1104 = vst.msk [vmem:[%s213 + $0x78] sm:$0xff] %vm944, %v1086
      %1105 = vst.msk [vmem:[%s213 + $0x80] sm:$0xff] %vm944, %v1087
      %1106 = vst.msk [vmem:[%s213 + $0x88] sm:$0xff] %vm944, %v1088
      %s1107 = smul.u32 72, %s16
      %p1108 = scmp.lt.s32.totalorder %s1107, 143
      %s1109 = scalar_select %p1108, %s1107, 143
      %s1110 = smul.addr %s1109, 8
      %s1111 = scalar_lea.vmem %s3, %s1110
      %s1112 = smul.u32 18, %s16
      %p1113 = scmp.lt.s32.totalorder %s1112, 35
      %s1114 = scalar_select %p1113, %s1112, 35
      %s1115 = smul.addr %s1114, 8
      %s1116 = scalar_lea.vmem %s4, %s1115
      // Predicated region
      $region33: #{net_forward.3} parent=31 // pred_check
        %p1117 = pneg %p102
      $region34: #{net_forward.3} parent=31 // pred_check_branch
        %1119 = sbr.rel (%p1117) target = $region36
      $region35: #{net_forward.3} parent=31 // pred_region
        %s1120 = smul.u32 72, %s16
      $region36: #{net_forward.3} parent=31 // pred_fallthru
        _
      // Predicated region
      $region37: #{net_forward.3} parent=31 // pred_check
        %p1121 = pneg %p128
      $region38: #{net_forward.3} parent=31 // pred_check_branch
        %1123 = sbr.rel (%p1121) target = $region40
      $region39: #{net_forward.3} parent=31 // pred_region
        %s1124 = smul.u32 18, %s16
      $region40: #{net_forward.3} parent=31 // pred_fallthru
        _
    $region32: #{net_forward.3} parent=5 // pred_fallthru
      _
    %p1125 = scmp.le.s32.totalorder 2, %s11
    // Predicated region
    $region41: #{net_forward.3} parent=5 // pred_check
      %p1126 = pneg %p1125
    $region42: #{net_forward.3} parent=5 // pred_check_branch
      %1128 = sbr.rel (%p1126) target = $region44
    $region43: #{net_forward.3} parent=5 // pred_region
      %s1129 = ssub.s32 %s11, 2
      // Predicated region
      $region45: #{net_forward.3} parent=43 // pred_check
        %p1130 = pneg %p108
      $region46: #{net_forward.3} parent=43 // pred_check_branch
        %1132 = sbr.rel (%p1130) target = $region48
      $region47: #{net_forward.3} parent=43 // pred_region
        %s1133 = smul.u32 72, %s17
        %p1134 = scmp.lt.s32.totalorder %s1133, 143
        %s1135 = scalar_select %p1134, %s1133, 143
        %s1136 = smul.addr %s1135, 8
        %s1137 = scalar_lea.vmem %s3, %s1136
      $region48: #{net_forward.3} parent=43 // pred_fallthru
        _
      // Predicated region
      $region49: #{net_forward.3} parent=43 // pred_check
        %p1138 = pneg %p134
      $region50: #{net_forward.3} parent=43 // pred_check_branch
        %1140 = sbr.rel (%p1138) target = $region52
      $region51: #{net_forward.3} parent=43 // pred_region
        %s1141 = smul.u32 18, %s17
        %p1142 = scmp.lt.s32.totalorder %s1141, 35
        %s1143 = scalar_select %p1142, %s1141, 35
        %s1144 = smul.addr %s1143, 8
        %s1145 = scalar_lea.vmem %s4, %s1144
      $region52: #{net_forward.3} parent=43 // pred_fallthru
        _
    $region44: #{net_forward.3} parent=5 // pred_fallthru
      _
  $region6: #{net_forward.3} parent=0 // loop_footer
    %s15 = sadd.s32 1, %s11
  $region7: #{net_forward.3} parent=0 // loop_footer_branch
    %10 = sbr.rel target = $region3
  $region8: #{net_forward.3} parent=0 // loop_exit
    _

// kernel: net_forward.4
$region0: #{net_forward.4}
  #allocation0 [shape = 'u32[]', space=smem, size = 0x4, offset = 0x4, fixed_abs, tag = 'smem constant byte address 0x4 - core index']
  #allocation1 [shape = 'u32[144,128]{1,0:T(1,128)}', space=vmem, size = 0x12000, scoped, tag = 'internal scratch']
  %s0 = inlined_call_operand.vmem [shape: f32[128,500], index: 0, kind: input, shape index: {}]
  %s1 = inlined_call_operand.vmem [shape: f32[500,50], index: 1, kind: input, shape index: {}]
  %s2 = inlined_call_operand.vmem [shape: f32[1,50], index: 2, kind: input, shape index: {}]
  %s3 = inlined_call_operand.vmem [shape: f32[128,50], index: 3, kind: output, shape index: {0}]
  %s4 = inlined_call_operand.vmem [shape: f32[32,50], index: 4, kind: output, shape index: {1}]
  %5 = xla_tuple %s3, %s4
  %s6 = sld [smem:[#allocation0]]
  $region53: #{net_forward.4} parent=0
    _
  %s8 = ssub.s32 1, %s6
  %s9 = scalar_select 0, %s8, %s6
  loop: start=0, step=1, limit=4
  $region2: #{net_forward.4} parent=0 // loop_pre_header
    _
  $region3: #{net_forward.4} parent=0 // loop_header
    %s11 = sphi 0, %s15
    %p12 = scmp.ge.s32.totalorder %s11, 4
    %s21 = sphi 0, %s23
    %s24 = sphi 0, %s21
    %s25 = sphi 0, %s24
    %s41 = sphi 0, %s25
    %s45 = sphi 0, %s45
    %s47 = sphi 0, %s45
    %s48 = sphi 0, %s47
    %s62 = sphi 0, %s48
    %s66 = sphi 0, %s66
    %s68 = sphi 0, %s66
    %s69 = sphi 0, %s68
    %s83 = sphi 0, %s69
    %s89 = sphi 0, %s91
    %s92 = sphi 0, %s89
    %s93 = sphi 0, %s92
    %s109 = sphi 0, %s93
    %s115 = sphi 0, %s117
    %s118 = sphi 0, %s115
    %s119 = sphi 0, %s118
    %s135 = sphi 0, %s119
  $region4: #{net_forward.4} parent=0 // loop_header_branch
    %14 = sbr.rel (%p12) target = $region8
  $region5: #{net_forward.4} parent=0 // loop_body
    %s16 = ssub.s32 %s11, 1
    %s17 = ssub.s32 %s11, 2
    %s18 = sadd.s32 %s11, 1
    %s19 = ssub.s32 %s11, %s18
    %p20 = scmp.eq.s32.totalorder %s19, 0
    %s22 = sadd.s32 %s21, 1
    %s23 = scalar_select %p20, %s21, %s22
    %p26 = pneg %p20
    %p27 = scmp.eq.s32.totalorder %s11, 1
    %p28 = por %p26, %p27
    %p29 = scmp.ne.s32.totalorder %s21, %s24
    %p30 = scmp.eq.s32.totalorder %s11, 0
    %p31 = por %p29, %p30
    %p32 = scmp.ne.s32.totalorder %s21, %s24
    %p33 = scmp.eq.s32.totalorder %s16, 1
    %p34 = por %p32, %p33
    %p35 = scmp.ne.s32.totalorder %s24, %s25
    %p36 = scmp.eq.s32.totalorder %s16, 0
    %p37 = por %p35, %p36
    %p38 = scmp.ne.s32.totalorder %s24, %s25
    %p39 = scmp.eq.s32.totalorder %s17, 1
    %p40 = por %p38, %p39
    %p42 = scmp.ne.s32.totalorder %s25, %s41
    %p43 = scmp.eq.s32.totalorder %s17, 0
    %p44 = por %p42, %p43
    %s46 = sadd.s32 %s45, 1
    %p49 = scmp.eq.s32.totalorder %s11, 1
    %p50 = scmp.ne.s32.totalorder %s45, %s47
    %p51 = scmp.eq.s32.totalorder %s11, 0
    %p52 = por %p50, %p51
    %p53 = scmp.ne.s32.totalorder %s45, %s47
    %p54 = scmp.eq.s32.totalorder %s16, 1
    %p55 = por %p53, %p54
    %p56 = scmp.ne.s32.totalorder %s47, %s48
    %p57 = scmp.eq.s32.totalorder %s16, 0
    %p58 = por %p56, %p57
    %p59 = scmp.ne.s32.totalorder %s47, %s48
    %p60 = scmp.eq.s32.totalorder %s17, 1
    %p61 = por %p59, %p60
    %p63 = scmp.ne.s32.totalorder %s48, %s62
    %p64 = scmp.eq.s32.totalorder %s17, 0
    %p65 = por %p63, %p64
    %s67 = sadd.s32 %s66, 1
    %p70 = scmp.eq.s32.totalorder %s11, 1
    %p71 = scmp.ne.s32.totalorder %s66, %s68
    %p72 = scmp.eq.s32.totalorder %s11, 0
    %p73 = por %p71, %p72
    %p74 = scmp.ne.s32.totalorder %s66, %s68
    %p75 = scmp.eq.s32.totalorder %s16, 1
    %p76 = por %p74, %p75
    %p77 = scmp.ne.s32.totalorder %s68, %s69
    %p78 = scmp.eq.s32.totalorder %s16, 0
    %p79 = por %p77, %p78
    %p80 = scmp.ne.s32.totalorder %s68, %s69
    %p81 = scmp.eq.s32.totalorder %s17, 1
    %p82 = por %p80, %p81
    %p84 = scmp.ne.s32.totalorder %s69, %s83
    %p85 = scmp.eq.s32.totalorder %s17, 0
    %p86 = por %p84, %p85
    %s87 = ssub.s32 %s11, %s18
    %p88 = scmp.eq.s32.totalorder %s87, 0
    %s90 = sadd.s32 %s89, 1
    %s91 = scalar_select %p88, %s89, %s90
    %p94 = pneg %p88
    %p95 = scmp.eq.s32.totalorder %s11, 1
    %p96 = por %p94, %p95
    %p97 = scmp.ne.s32.totalorder %s89, %s92
    %p98 = scmp.eq.s32.totalorder %s11, 0
    %p99 = por %p97, %p98
    %p100 = scmp.ne.s32.totalorder %s89, %s92
    %p101 = scmp.eq.s32.totalorder %s16, 1
    %p102 = por %p100, %p101
    %p103 = scmp.ne.s32.totalorder %s92, %s93
    %p104 = scmp.eq.s32.totalorder %s16, 0
    %p105 = por %p103, %p104
    %p106 = scmp.ne.s32.totalorder %s92, %s93
    %p107 = scmp.eq.s32.totalorder %s17, 1
    %p108 = por %p106, %p107
    %p110 = scmp.ne.s32.totalorder %s93, %s109
    %p111 = scmp.eq.s32.totalorder %s17, 0
    %p112 = por %p110, %p111
    %s113 = ssub.s32 %s11, %s18
    %p114 = scmp.eq.s32.totalorder %s113, 0
    %s116 = sadd.s32 %s115, 1
    %s117 = scalar_select %p114, %s115, %s116
    %p120 = pneg %p114
    %p121 = scmp.eq.s32.totalorder %s11, 1
    %p122 = por %p120, %p121
    %p123 = scmp.ne.s32.totalorder %s115, %s118
    %p124 = scmp.eq.s32.totalorder %s11, 0
    %p125 = por %p123, %p124
    %p126 = scmp.ne.s32.totalorder %s115, %s118
    %p127 = scmp.eq.s32.totalorder %s16, 1
    %p128 = por %p126, %p127
    %p129 = scmp.ne.s32.totalorder %s118, %s119
    %p130 = scmp.eq.s32.totalorder %s16, 0
    %p131 = por %p129, %p130
    %p132 = scmp.ne.s32.totalorder %s118, %s119
    %p133 = scmp.eq.s32.totalorder %s17, 1
    %p134 = por %p132, %p133
    %p136 = scmp.ne.s32.totalorder %s119, %s135
    %p137 = scmp.eq.s32.totalorder %s17, 0
    %p138 = por %p136, %p137
    %p139 = scmp.le.s32.totalorder 1, %s11
    %p140 = scmp.lt.s32.totalorder %s11, 3
    %p141 = pnand %p139, %p140
    %p142 = pneg %p141
    // Predicated region
    $region9: #{net_forward.4} parent=5 // pred_check
      _
    $region10: #{net_forward.4} parent=5 // pred_check_branch
      %144 = sbr.rel (%p141) target = $region12
    $region11: #{net_forward.4} parent=5 // pred_region
      %s145 = ssub.s32 %s11, 1
      // Predicated region
      $region13: #{net_forward.4} parent=11 // pred_check
        %p146 = pneg %p58
      $region14: #{net_forward.4} parent=11 // pred_check_branch
        %148 = sbr.rel (%p146) target = $region16
      $region15: #{net_forward.4} parent=11 // pred_region
        _
      $region16: #{net_forward.4} parent=11 // pred_fallthru
        _
      // Predicated region
      $region17: #{net_forward.4} parent=11 // pred_check
        %p149 = pneg %p79
      $region18: #{net_forward.4} parent=11 // pred_check_branch
        %151 = sbr.rel (%p149) target = $region20
      $region19: #{net_forward.4} parent=11 // pred_region
        _
      $region20: #{net_forward.4} parent=11 // pred_fallthru
        _
    $region12: #{net_forward.4} parent=5 // pred_fallthru
      _
    %p152 = scmp.lt.s32.totalorder %s11, 2
    // Predicated region
    $region21: #{net_forward.4} parent=5 // pred_check
      %p153 = pneg %p152
    $region22: #{net_forward.4} parent=5 // pred_check_branch
      %155 = sbr.rel (%p153) target = $region24
    $region23: #{net_forward.4} parent=5 // pred_region
      // Predicated region
      $region25: #{net_forward.4} parent=23 // pred_check
        %p156 = pneg %p31
      $region26: #{net_forward.4} parent=23 // pred_check_branch
        %158 = sbr.rel (%p156) target = $region28
      $region27: #{net_forward.4} parent=23 // pred_region
        %s159 = smul.u32 8, %s11
        %p160 = scmp.lt.s32.totalorder %s159, 15
        %s161 = scalar_select %p160, %s159, 15
        %s162 = smul.addr %s161, 4
        %s163 = smul.addr %s162, 8
        %s164 = scalar_lea.vmem %s0, %s163
        %s165 = smul.u32 8, %s11
      $region28: #{net_forward.4} parent=23 // pred_fallthru
        _
    $region24: #{net_forward.4} parent=5 // pred_fallthru
      _
    %p166 = scmp.le.s32.totalorder 1, %s11
    %p167 = scmp.lt.s32.totalorder %s11, 3
    %p168 = pnand %p166, %p167
    %p169 = pneg %p168
    // Predicated region
    $region29: #{net_forward.4} parent=5 // pred_check
      _
    $region30: #{net_forward.4} parent=5 // pred_check_branch
      %171 = sbr.rel (%p168) target = $region32
    $region31: #{net_forward.4} parent=5 // pred_region
      %s172 = ssub.s32 %s11, 1
      %s173 = smul.u32 8, %s16
      %p174 = scmp.lt.s32.totalorder %s173, 15
      %s175 = scalar_select %p174, %s173, 15
      %s176 = smul.addr %s175, 4
      %s177 = smul.addr %s176, 8
      %s178 = scalar_lea.vmem %s0, %s177
      %p179 = pneg %p37
      %p180 = pneg %p34
      %p181 = pneg %p58
      %p182 = pneg %p55
      %p183 = pneg %p79
      %p184 = pneg %p76
      %p185 = pneg %p105
      %p186 = pneg %p102
      %s187 = smul.u32 8, %s16
      %p188 = scmp.lt.s32.totalorder %s187, 15
      %s189 = scalar_select %p188, %s187, 15
      %s190 = smul.addr %s189, 8
      %s191 = scalar_lea.vmem %s3, %s190
      %p192 = pneg %p131
      %p193 = pneg %p128
      %s194 = smul.u32 2, %s16
      %p195 = scmp.lt.s32.totalorder %s194, 3
      %s196 = scalar_select %p195, %s194, 3
      %s197 = smul.addr %s196, 8
      %s198 = scalar_lea.vmem %s4, %s197
      %s199 = smul.u32 8, %s16
      %p200 = scmp.lt.s32.totalorder %s199, 15
      %s201 = scalar_select %p200, %s199, 15
      %s202 = smul.addr %s201, 4
      %s203 = smul.addr %s202, 8
      %s204 = scalar_lea.vmem %s0, %s203
      %s205 = smul.u32 8, %s16
      %s206 = smul.u32 8, %s16
      %p207 = scmp.lt.s32.totalorder %s206, 15
      %s208 = scalar_select %p207, %s206, 15
      %s209 = smul.addr %s208, 8
      %s210 = scalar_lea.vmem %s3, %s209
      %s211 = smul.u32 8, %s16
      %s212 = smul.u32 2, %s16
      %p213 = scmp.lt.s32.totalorder %s212, 3
      %s214 = scalar_select %p213, %s212, 3
      %s215 = smul.addr %s214, 8
      %s216 = scalar_lea.vmem %s4, %s215
      %s217 = smul.u32 2, %s16
      %v218 = vld [vmem:[%s204] sm:$0xff]
      %v219 = vld [vmem:[%s204 + $0x8] sm:$0xff]
      %v220 = vld [vmem:[%s204 + $0x10] sm:$0xff]
      %v221 = vld [vmem:[%s204 + $0x18] sm:$0xff]
      %v222 = vld [vmem:[%s204 + $0x20] sm:$0xff]
      %v223 = vld [vmem:[%s204 + $0x28] sm:$0xff]
      %v224 = vld [vmem:[%s204 + $0x30] sm:$0xff]
      %v225 = vld [vmem:[%s204 + $0x38] sm:$0xff]
      %v226 = vld [vmem:[%s204 + $0x40] sm:$0xff]
      %v227 = vld [vmem:[%s204 + $0x48] sm:$0xff]
      %v228 = vld [vmem:[%s204 + $0x50] sm:$0xff]
      %v229 = vld [vmem:[%s204 + $0x58] sm:$0xff]
      %v230 = vld [vmem:[%s204 + $0x60] sm:$0xff]
      %v231 = vld [vmem:[%s204 + $0x68] sm:$0xff]
      %v232 = vld [vmem:[%s204 + $0x70] sm:$0xff]
      %v233 = vld [vmem:[%s204 + $0x78] sm:$0xff]
      %v234 = vld [vmem:[%s204 + $0x80] sm:$0xff]
      %v235 = vld [vmem:[%s204 + $0x88] sm:$0xff]
      %v236 = vld [vmem:[%s204 + $0x90] sm:$0xff]
      %v237 = vld [vmem:[%s204 + $0x98] sm:$0xff]
      %v238 = vld [vmem:[%s204 + $0xa0] sm:$0xff]
      %v239 = vld [vmem:[%s204 + $0xa8] sm:$0xff]
      %v240 = vld [vmem:[%s204 + $0xb0] sm:$0xff]
      %v241 = vld [vmem:[%s204 + $0xb8] sm:$0xff]
      %v242 = vld [vmem:[%s204 + $0xc0] sm:$0xff]
      %v243 = vld [vmem:[%s204 + $0xc8] sm:$0xff]
      %v244 = vld [vmem:[%s204 + $0xd0] sm:$0xff]
      %v245 = vld [vmem:[%s204 + $0xd8] sm:$0xff]
      %v246 = vld [vmem:[%s204 + $0xe0] sm:$0xff]
      %v247 = vld [vmem:[%s204 + $0xe8] sm:$0xff]
      %v248 = vld [vmem:[%s204 + $0xf0] sm:$0xff]
      %v249 = vld [vmem:[%s204 + $0xf8] sm:$0xff]
      %v250 = vld [vmem:[%s1] sm:$0xff]
      %v251 = vld [vmem:[%s1 + $0x8] sm:$0xff]
      %v252 = vld [vmem:[%s1 + $0x10] sm:$0xff]
      %v253 = vld [vmem:[%s1 + $0x18] sm:$0xff]
      %v254 = vld [vmem:[%s1 + $0x20] sm:$0xff]
      %v255 = vld [vmem:[%s1 + $0x28] sm:$0xff]
      %v256 = vld [vmem:[%s1 + $0x30] sm:$0xff]
      %v257 = vld [vmem:[%s1 + $0x38] sm:$0xff]
      %v258 = vld [vmem:[%s1 + $0x40] sm:$0xff]
      %v259 = vld [vmem:[%s1 + $0x48] sm:$0xff]
      %v260 = vld [vmem:[%s1 + $0x50] sm:$0xff]
      %v261 = vld [vmem:[%s1 + $0x58] sm:$0xff]
      %v262 = vld [vmem:[%s1 + $0x60] sm:$0xff]
      %v263 = vld [vmem:[%s1 + $0x68] sm:$0xff]
      %v264 = vld [vmem:[%s1 + $0x70] sm:$0xff]
      %v265 = vld [vmem:[%s1 + $0x78] sm:$0xff]
      %v266 = vld [vmem:[%s1 + $0x80] sm:$0xff]
      %v267 = vld [vmem:[%s1 + $0x88] sm:$0xff]
      %v268 = vld [vmem:[%s1 + $0x90] sm:$0xff]
      %v269 = vld [vmem:[%s1 + $0x98] sm:$0xff]
      %v270 = vld [vmem:[%s1 + $0xa0] sm:$0xff]
      %v271 = vld [vmem:[%s1 + $0xa8] sm:$0xff]
      %v272 = vld [vmem:[%s1 + $0xb0] sm:$0xff]
      %v273 = vld [vmem:[%s1 + $0xb8] sm:$0xff]
      %v274 = vld [vmem:[%s1 + $0xc0] sm:$0xff]
      %v275 = vld [vmem:[%s1 + $0xc8] sm:$0xff]
      %v276 = vld [vmem:[%s1 + $0xd0] sm:$0xff]
      %v277 = vld [vmem:[%s1 + $0xd8] sm:$0xff]
      %v278 = vld [vmem:[%s1 + $0xe0] sm:$0xff]
      %v279 = vld [vmem:[%s1 + $0xe8] sm:$0xff]
      %v280 = vld [vmem:[%s1 + $0xf0] sm:$0xff]
      %v281 = vld [vmem:[%s1 + $0xf8] sm:$0xff]
      %v282 = vld [vmem:[%s1 + $0x100] sm:$0xff]
      %v283 = vld [vmem:[%s1 + $0x108] sm:$0xff]
      %v284 = vld [vmem:[%s1 + $0x110] sm:$0xff]
      %v285 = vld [vmem:[%s1 + $0x118] sm:$0xff]
      %v286 = vld [vmem:[%s1 + $0x120] sm:$0xff]
      %v287 = vld [vmem:[%s1 + $0x128] sm:$0xff]
      %v288 = vld [vmem:[%s1 + $0x130] sm:$0xff]
      %v289 = vld [vmem:[%s1 + $0x138] sm:$0xff]
      %v290 = vld [vmem:[%s1 + $0x140] sm:$0xff]
      %v291 = vld [vmem:[%s1 + $0x148] sm:$0xff]
      %v292 = vld [vmem:[%s1 + $0x150] sm:$0xff]
      %v293 = vld [vmem:[%s1 + $0x158] sm:$0xff]
      %v294 = vld [vmem:[%s1 + $0x160] sm:$0xff]
      %v295 = vld [vmem:[%s1 + $0x168] sm:$0xff]
      %v296 = vld [vmem:[%s1 + $0x170] sm:$0xff]
      %v297 = vld [vmem:[%s1 + $0x178] sm:$0xff]
      %v298 = vld [vmem:[%s1 + $0x180] sm:$0xff]
      %v299 = vld [vmem:[%s1 + $0x188] sm:$0xff]
      %v300 = vld [vmem:[%s1 + $0x190] sm:$0xff]
      %v301 = vld [vmem:[%s1 + $0x198] sm:$0xff]
      %v302 = vld [vmem:[%s1 + $0x1a0] sm:$0xff]
      %v303 = vld [vmem:[%s1 + $0x1a8] sm:$0xff]
      %v304 = vld [vmem:[%s1 + $0x1b0] sm:$0xff]
      %v305 = vld [vmem:[%s1 + $0x1b8] sm:$0xff]
      %v306 = vld [vmem:[%s1 + $0x1c0] sm:$0xff]
      %v307 = vld [vmem:[%s1 + $0x1c8] sm:$0xff]
      %v308 = vld [vmem:[%s1 + $0x1d0] sm:$0xff]
      %v309 = vld [vmem:[%s1 + $0x1d8] sm:$0xff]
      %v310 = vld [vmem:[%s1 + $0x1e0] sm:$0xff]
      %v311 = vld [vmem:[%s1 + $0x1e8] sm:$0xff]
      %v312 = vld [vmem:[%s1 + $0x1f0] sm:$0xf]
      %v313 = vld [vmem:[%s2] sm:$0x1]
      %v315 = vlaneseq
      %v316 = vshrl.u32 %v315, 7
      %v317 = vsub.s32 0, %v316
      %v318 = vrot.slane %v313, %v317
      %vm320 = vcmask 949248
      %v322 = vsel %vm320, %v221, 0
      %v325 = vsel %vm320, %v225, 0
      %v328 = vsel %vm320, %v229, 0
      %v331 = vsel %vm320, %v233, 0
      %v334 = vsel %vm320, %v237, 0
      %v337 = vsel %vm320, %v241, 0
      %v340 = vsel %vm320, %v245, 0
      %v343 = vsel %vm320, %v249, 0
      %vm345 = vcmask 1043456
      %v347 = vsel %vm345, %v312, 0
      %349 = vmatprep.subr.mxu0 0.0
      %350 = vmatpush1.msra.mxu0 %v265
      %351 = vmatprep.subr.mxu0 0.0
      %352 = vmatpush1.msra.mxu0 %v264
      %353 = vmatprep.subr.mxu0 0.0
      %354 = vmatpush1.msra.mxu0 %v263
      %355 = vmatprep.subr.mxu0 0.0
      %356 = vmatpush1.msra.mxu0 %v262
      %357 = vmatprep.subr.mxu0 0.0
      %358 = vmatpush1.msra.mxu0 %v261
      %359 = vmatprep.subr.mxu0 0.0
      %360 = vmatpush1.msra.mxu0 %v260
      %361 = vmatprep.subr.mxu0 0.0
      %362 = vmatpush1.msra.mxu0 %v259
      %363 = vmatprep.subr.mxu0 0.0
      %364 = vmatpush1.msra.mxu0 %v258
      %365 = vmatprep.subr.mxu0 0.0
      %366 = vmatpush1.msra.mxu0 %v257
      %367 = vmatprep.subr.mxu0 0.0
      %368 = vmatpush1.msra.mxu0 %v256
      %369 = vmatprep.subr.mxu0 0.0
      %370 = vmatpush1.msra.mxu0 %v255
      %371 = vmatprep.subr.mxu0 0.0
      %372 = vmatpush1.msra.mxu0 %v254
      %373 = vmatprep.subr.mxu0 0.0
      %374 = vmatpush1.msra.mxu0 %v253
      %375 = vmatprep.subr.mxu0 0.0
      %376 = vmatpush1.msra.mxu0 %v252
      %377 = vmatprep.subr.mxu0 0.0
      %378 = vmatpush1.msra.mxu0 %v251
      %379 = vmatprep.subr.mxu0 0.0
      %380 = vmatpush1.msra.mxu0 %v250
      %381 = vmatprep.subr.mxu0 0.0
      %382 = vmatpush2.msra.mxu0 %v281
      %383 = vmatprep.subr.mxu0 0.0
      %384 = vmatpush2.msra.mxu0 %v280
      %385 = vmatprep.subr.mxu0 0.0
      %386 = vmatpush2.msra.mxu0 %v279
      %387 = vmatprep.subr.mxu0 0.0
      %388 = vmatpush2.msra.mxu0 %v278
      %389 = vmatprep.subr.mxu0 0.0
      %390 = vmatpush2.msra.mxu0 %v277
      %391 = vmatprep.subr.mxu0 0.0
      %392 = vmatpush2.msra.mxu0 %v276
      %393 = vmatprep.subr.mxu0 0.0
      %394 = vmatpush2.msra.mxu0 %v275
      %395 = vmatprep.subr.mxu0 0.0
      %396 = vmatpush2.msra.mxu0 %v274
      %397 = vmatprep.subr.mxu0 0.0
      %398 = vmatpush2.msra.mxu0 %v273
      %399 = vmatprep.subr.mxu0 0.0
      %400 = vmatpush2.msra.mxu0 %v272
      %401 = vmatprep.subr.mxu0 0.0
      %402 = vmatpush2.msra.mxu0 %v271
      %403 = vmatprep.subr.mxu0 0.0
      %404 = vmatpush2.msra.mxu0 %v270
      %405 = vmatprep.subr.mxu0 0.0
      %406 = vmatpush2.msra.mxu0 %v269
      %407 = vmatprep.subr.mxu0 0.0
      %408 = vmatpush2.msra.mxu0 %v268
      %409 = vmatprep.subr.mxu0 0.0
      %410 = vmatpush2.msra.mxu0 %v267
      %411 = vmatprep.subr.mxu0 0.0
      %412 = vmatpush2.msra.mxu0 %v266
      %413 = vmatprep.mubr.f32.mxu0 %v219
      %414 = vmatmul.mubr.f32.gmra.mxu0 %v218
      %v415 = vpop.f32.mrf.mxu0
      %v416 = vadd.f32 %v318, %v415
      %v417 = vpop.f32.mrf.mxu0
      %418 = vmatprep.mubr.f32.mxu0 %v223
      %419 = vmatmul.mubr.f32.gmra.mxu0 %v222
      %v420 = vpop.f32.mrf.mxu0
      %v421 = vadd.f32 %v318, %v420
      %v422 = vpop.f32.mrf.mxu0
      %423 = vmatprep.mubr.f32.mxu0 %v227
      %424 = vmatmul.mubr.f32.gmra.mxu0 %v226
      %v425 = vpop.f32.mrf.mxu0
      %v426 = vadd.f32 %v318, %v425
      %v427 = vpop.f32.mrf.mxu0
      %428 = vmatprep.mubr.f32.mxu0 %v231
      %429 = vmatmul.mubr.f32.gmra.mxu0 %v230
      %v430 = vpop.f32.mrf.mxu0
      %v431 = vadd.f32 %v318, %v430
      %v432 = vpop.f32.mrf.mxu0
      %433 = vmatprep.mubr.f32.mxu0 %v235
      %434 = vmatmul.mubr.f32.gmra.mxu0 %v234
      %v435 = vpop.f32.mrf.mxu0
      %v436 = vadd.f32 %v318, %v435
      %v437 = vpop.f32.mrf.mxu0
      %438 = vmatprep.mubr.f32.mxu0 %v239
      %439 = vmatmul.mubr.f32.gmra.mxu0 %v238
      %v440 = vpop.f32.mrf.mxu0
      %v441 = vadd.f32 %v318, %v440
      %v442 = vpop.f32.mrf.mxu0
      %443 = vmatprep.mubr.f32.mxu0 %v243
      %444 = vmatmul.mubr.f32.gmra.mxu0 %v242
      %v445 = vpop.f32.mrf.mxu0
      %v446 = vadd.f32 %v318, %v445
      %v447 = vpop.f32.mrf.mxu0
      %448 = vmatprep.mubr.f32.mxu0 %v247
      %449 = vmatmul.mubr.f32.gmra.mxu0 %v246
      %v450 = vpop.f32.mrf.mxu0
      %v451 = vadd.f32 %v318, %v450
      %v452 = vpop.f32.mrf.mxu0
      %453 = vdwg.mxu0
      %454 = vmatprep.subr.mxu0 0.0
      %455 = vmatpush1.msra.mxu0 %v297
      %456 = vmatprep.subr.mxu0 0.0
      %457 = vmatpush1.msra.mxu0 %v296
      %458 = vmatprep.subr.mxu0 0.0
      %459 = vmatpush1.msra.mxu0 %v295
      %460 = vmatprep.subr.mxu0 0.0
      %461 = vmatpush1.msra.mxu0 %v294
      %462 = vmatprep.subr.mxu0 0.0
      %463 = vmatpush1.msra.mxu0 %v293
      %464 = vmatprep.subr.mxu0 0.0
      %465 = vmatpush1.msra.mxu0 %v292
      %466 = vmatprep.subr.mxu0 0.0
      %467 = vmatpush1.msra.mxu0 %v291
      %468 = vmatprep.subr.mxu0 0.0
      %469 = vmatpush1.msra.mxu0 %v290
      %470 = vmatprep.subr.mxu0 0.0
      %471 = vmatpush1.msra.mxu0 %v289
      %472 = vmatprep.subr.mxu0 0.0
      %473 = vmatpush1.msra.mxu0 %v288
      %474 = vmatprep.subr.mxu0 0.0
      %475 = vmatpush1.msra.mxu0 %v287
      %476 = vmatprep.subr.mxu0 0.0
      %477 = vmatpush1.msra.mxu0 %v286
      %478 = vmatprep.subr.mxu0 0.0
      %479 = vmatpush1.msra.mxu0 %v285
      %480 = vmatprep.subr.mxu0 0.0
      %481 = vmatpush1.msra.mxu0 %v284
      %482 = vmatprep.subr.mxu0 0.0
      %483 = vmatpush1.msra.mxu0 %v283
      %484 = vmatprep.subr.mxu0 0.0
      %485 = vmatpush1.msra.mxu0 %v282
      %486 = vmatprep.subr.mxu0 0.0
      %487 = vmatpush2.msra.mxu0 0.0
      %488 = vmatprep.subr.mxu0 0.0
      %489 = vmatpush2.msra.mxu0 %v347
      %490 = vmatprep.subr.mxu0 0.0
      %491 = vmatpush2.msra.mxu0 %v311
      %492 = vmatprep.subr.mxu0 0.0
      %493 = vmatpush2.msra.mxu0 %v310
      %494 = vmatprep.subr.mxu0 0.0
      %495 = vmatpush2.msra.mxu0 %v309
      %496 = vmatprep.subr.mxu0 0.0
      %497 = vmatpush2.msra.mxu0 %v308
      %498 = vmatprep.subr.mxu0 0.0
      %499 = vmatpush2.msra.mxu0 %v307
      %500 = vmatprep.subr.mxu0 0.0
      %501 = vmatpush2.msra.mxu0 %v306
      %502 = vmatprep.subr.mxu0 0.0
      %503 = vmatpush2.msra.mxu0 %v305
      %504 = vmatprep.subr.mxu0 0.0
      %505 = vmatpush2.msra.mxu0 %v304
      %506 = vmatprep.subr.mxu0 0.0
      %507 = vmatpush2.msra.mxu0 %v303
      %508 = vmatprep.subr.mxu0 0.0
      %509 = vmatpush2.msra.mxu0 %v302
      %510 = vmatprep.subr.mxu0 0.0
      %511 = vmatpush2.msra.mxu0 %v301
      %512 = vmatprep.subr.mxu0 0.0
      %513 = vmatpush2.msra.mxu0 %v300
      %514 = vmatprep.subr.mxu0 0.0
      %515 = vmatpush2.msra.mxu0 %v299
      %516 = vmatprep.subr.mxu0 0.0
      %517 = vmatpush2.msra.mxu0 %v298
      %518 = vmatprep.mubr.f32.mxu0 %v322
      %519 = vmatmul.mubr.f32.gmra.mxu0 %v220
      %v520 = vpop.f32.mrf.mxu0
      %v521 = vadd.f32 %v416, %v520
      %v522 = vpop.f32.mrf.mxu0
      %523 = vmatprep.mubr.f32.mxu0 %v325
      %524 = vmatmul.mubr.f32.gmra.mxu0 %v224
      %v525 = vpop.f32.mrf.mxu0
      %v526 = vadd.f32 %v421, %v525
      %v527 = vpop.f32.mrf.mxu0
      %528 = vmatprep.mubr.f32.mxu0 %v328
      %529 = vmatmul.mubr.f32.gmra.mxu0 %v228
      %v530 = vpop.f32.mrf.mxu0
      %v531 = vadd.f32 %v426, %v530
      %v532 = vpop.f32.mrf.mxu0
      %533 = vmatprep.mubr.f32.mxu0 %v331
      %534 = vmatmul.mubr.f32.gmra.mxu0 %v232
      %v535 = vpop.f32.mrf.mxu0
      %v536 = vadd.f32 %v431, %v535
      %v537 = vpop.f32.mrf.mxu0
      %538 = vmatprep.mubr.f32.mxu0 %v334
      %539 = vmatmul.mubr.f32.gmra.mxu0 %v236
      %v540 = vpop.f32.mrf.mxu0
      %v541 = vadd.f32 %v436, %v540
      %v542 = vpop.f32.mrf.mxu0
      %543 = vmatprep.mubr.f32.mxu0 %v337
      %544 = vmatmul.mubr.f32.gmra.mxu0 %v240
      %v545 = vpop.f32.mrf.mxu0
      %v546 = vadd.f32 %v441, %v545
      %v547 = vpop.f32.mrf.mxu0
      %548 = vmatprep.mubr.f32.mxu0 %v340
      %549 = vmatmul.mubr.f32.gmra.mxu0 %v244
      %v550 = vpop.f32.mrf.mxu0
      %v551 = vadd.f32 %v446, %v550
      %v552 = vpop.f32.mrf.mxu0
      %553 = vmatprep.mubr.f32.mxu0 %v343
      %554 = vmatmul.mubr.f32.gmra.mxu0 %v248
      %v555 = vpop.f32.mrf.mxu0
      %v556 = vadd.f32 %v451, %v555
      %v557 = vpop.f32.mrf.mxu0
      %558 = vdwg.mxu0
      %vm559 = vcmask 408576
      %560 = vst.msk [vmem:[%s210] sm:$0xff] %vm559, %v521
      %561 = vst.msk [vmem:[%s210 + $0x8] sm:$0xff] %vm559, %v526
      %562 = vst.msk [vmem:[%s210 + $0x10] sm:$0xff] %vm559, %v531
      %563 = vst.msk [vmem:[%s210 + $0x18] sm:$0xff] %vm559, %v536
      %564 = vst.msk [vmem:[%s210 + $0x20] sm:$0xff] %vm559, %v541
      %565 = vst.msk [vmem:[%s210 + $0x28] sm:$0xff] %vm559, %v546
      %566 = vst.msk [vmem:[%s210 + $0x30] sm:$0xff] %vm559, %v551
      %567 = vst.msk [vmem:[%s210 + $0x38] sm:$0xff] %vm559, %v556
      %v568 = vmax.f32 %v521, %v531
      %v569 = vmax.f32 %v526, %v536
      %v570 = vmax.f32 %v541, %v551
      %v571 = vmax.f32 %v546, %v556
      %v572 = vmax.f32 %v568, %v570
      %v573 = vmax.f32 %v569, %v571
      %v574 = vmax.f32 %v572, 0.0
      %v575 = vmax.f32 %v573, 0.0
      %576 = vst.msk [vmem:[%s216] sm:$0xff] %vm559, %v574
      %577 = vst.msk [vmem:[%s216 + $0x8] sm:$0xff] %vm559, %v575
      %s578 = smul.u32 8, %s16
      %p579 = scmp.lt.s32.totalorder %s578, 15
      %s580 = scalar_select %p579, %s578, 15
      %s581 = smul.addr %s580, 8
      %s582 = scalar_lea.vmem %s3, %s581
      %s583 = smul.u32 2, %s16
      %p584 = scmp.lt.s32.totalorder %s583, 3
      %s585 = scalar_select %p584, %s583, 3
      %s586 = smul.addr %s585, 8
      %s587 = scalar_lea.vmem %s4, %s586
      // Predicated region
      $region33: #{net_forward.4} parent=31 // pred_check
        %p588 = pneg %p102
      $region34: #{net_forward.4} parent=31 // pred_check_branch
        %590 = sbr.rel (%p588) target = $region36
      $region35: #{net_forward.4} parent=31 // pred_region
        %s591 = smul.u32 8, %s16
      $region36: #{net_forward.4} parent=31 // pred_fallthru
        _
      // Predicated region
      $region37: #{net_forward.4} parent=31 // pred_check
        %p592 = pneg %p128
      $region38: #{net_forward.4} parent=31 // pred_check_branch
        %594 = sbr.rel (%p592) target = $region40
      $region39: #{net_forward.4} parent=31 // pred_region
        %s595 = smul.u32 2, %s16
      $region40: #{net_forward.4} parent=31 // pred_fallthru
        _
    $region32: #{net_forward.4} parent=5 // pred_fallthru
      _
    %p596 = scmp.le.s32.totalorder 2, %s11
    // Predicated region
    $region41: #{net_forward.4} parent=5 // pred_check
      %p597 = pneg %p596
    $region42: #{net_forward.4} parent=5 // pred_check_branch
      %599 = sbr.rel (%p597) target = $region44
    $region43: #{net_forward.4} parent=5 // pred_region
      %s600 = ssub.s32 %s11, 2
      // Predicated region
      $region45: #{net_forward.4} parent=43 // pred_check
        %p601 = pneg %p108
      $region46: #{net_forward.4} parent=43 // pred_check_branch
        %603 = sbr.rel (%p601) target = $region48
      $region47: #{net_forward.4} parent=43 // pred_region
        %s604 = smul.u32 8, %s17
        %p605 = scmp.lt.s32.totalorder %s604, 15
        %s606 = scalar_select %p605, %s604, 15
        %s607 = smul.addr %s606, 8
        %s608 = scalar_lea.vmem %s3, %s607
      $region48: #{net_forward.4} parent=43 // pred_fallthru
        _
      // Predicated region
      $region49: #{net_forward.4} parent=43 // pred_check
        %p609 = pneg %p134
      $region50: #{net_forward.4} parent=43 // pred_check_branch
        %611 = sbr.rel (%p609) target = $region52
      $region51: #{net_forward.4} parent=43 // pred_region
        %s612 = smul.u32 2, %s17
        %p613 = scmp.lt.s32.totalorder %s612, 3
        %s614 = scalar_select %p613, %s612, 3
        %s615 = smul.addr %s614, 8
        %s616 = scalar_lea.vmem %s4, %s615
      $region52: #{net_forward.4} parent=43 // pred_fallthru
        _
    $region44: #{net_forward.4} parent=5 // pred_fallthru
      _
  $region6: #{net_forward.4} parent=0 // loop_footer
    %s15 = sadd.s32 1, %s11
  $region7: #{net_forward.4} parent=0 // loop_footer_branch
    %10 = sbr.rel target = $region3
  $region8: #{net_forward.4} parent=0 // loop_exit
    _

// kernel: net_forward.5
$region0: #{net_forward.5}
  #allocation0 [shape = 'u32[]', space=smem, size = 0x4, offset = 0x4, fixed_abs, tag = 'smem constant byte address 0x4 - core index']
  #allocation1 [shape = 'u32[144,128]{1,0:T(1,128)}', space=vmem, size = 0x12000, scoped, tag = 'internal scratch']
  %s0 = inlined_call_operand.vmem [shape: f32[2,800], index: 0, kind: input, shape index: {}]
  %s1 = inlined_call_operand.vmem [shape: f32[800,500], index: 1, kind: input, shape index: {}]
  %s2 = inlined_call_operand.vmem [shape: f32[1,500], index: 2, kind: input, shape index: {}]
  %s3 = inlined_call_operand.vmem [shape: f32[500,10], index: 3, kind: input, shape index: {}]
  %s4 = inlined_call_operand.vmem [shape: f32[1,10], index: 4, kind: input, shape index: {}]
  %s5 = inlined_call_operand.hbm [shape: f32[2,500], index: 5, kind: output, shape index: {0}]
  %s6 = inlined_call_operand.vmem [shape: f32[2,10], index: 6, kind: output, shape index: {1}]
  %7 = xla_tuple %s5, %s6
  %s8 = sld [smem:[#allocation0]]
  $region38: #{net_forward.5} parent=0
    _
  %s10 = ssub.s32 1, %s8
  %s11 = scalar_select 0, %s10, %s8
  $region1: #{net_forward.5} parent=0
    #allocation2 [shape = 'u8[4096]{0}', space=vmem, size = 0x1000, scoped, tag = 'output window, operand 0, single buffered']
    #allocation3 [shape = 's32[1]{0}', space=sflag, size = 0x4, scoped, tag = 'scoped memory for net_forward.5']
    %12 = vsyncpa [#allocation3], 0
    // Predicated region
    $region2: #{net_forward.5} parent=1 // pred_check
      _
    $region3: #{net_forward.5} parent=1 // pred_check_branch
      %14 = sbr.rel (0) target = $region5
    $region4: #{net_forward.5} parent=1 // pred_region
      _
    $region5: #{net_forward.5} parent=1 // pred_fallthru
      _
    // Predicated region
    $region6: #{net_forward.5} parent=1 // pred_check
      _
    $region7: #{net_forward.5} parent=1 // pred_check_branch
      %16 = sbr.rel (0) target = $region9
    $region8: #{net_forward.5} parent=1 // pred_region
      _
    $region9: #{net_forward.5} parent=1 // pred_fallthru
      _
    // Predicated region
    $region10: #{net_forward.5} parent=1 // pred_check
      _
    $region11: #{net_forward.5} parent=1 // pred_check_branch
      %18 = sbr.rel (0) target = $region13
    $region12: #{net_forward.5} parent=1 // pred_region
      _
    $region13: #{net_forward.5} parent=1 // pred_fallthru
      _
    // Predicated region
    $region14: #{net_forward.5} parent=1 // pred_check
      _
    $region15: #{net_forward.5} parent=1 // pred_check_branch
      %20 = sbr.rel (0) target = $region17
    $region16: #{net_forward.5} parent=1 // pred_region
      _
    $region17: #{net_forward.5} parent=1 // pred_fallthru
      _
    // Predicated region
    $region18: #{net_forward.5} parent=1 // pred_check
      _
    $region19: #{net_forward.5} parent=1 // pred_check_branch
      %22 = sbr.rel (0) target = $region21
    $region20: #{net_forward.5} parent=1 // pred_region
      _
    $region21: #{net_forward.5} parent=1 // pred_fallthru
      _
    %v23 = vld [vmem:[%s0] sm:$0xff]
    %v24 = vld [vmem:[%s0 + $0x8] sm:$0x3f]
    %v25 = vld [vmem:[%s1] sm:$0xff]
    %v26 = vld [vmem:[%s1 + $0x8] sm:$0xff]
    %v27 = vld [vmem:[%s1 + $0x10] sm:$0xff]
    %v28 = vld [vmem:[%s1 + $0x18] sm:$0xff]
    %v29 = vld [vmem:[%s1 + $0x20] sm:$0xff]
    %v30 = vld [vmem:[%s1 + $0x28] sm:$0xff]
    %v31 = vld [vmem:[%s1 + $0x30] sm:$0xff]
    %v32 = vld [vmem:[%s1 + $0x38] sm:$0xff]
    %v33 = vld [vmem:[%s1 + $0x40] sm:$0xff]
    %v34 = vld [vmem:[%s1 + $0x48] sm:$0xff]
    %v35 = vld [vmem:[%s1 + $0x50] sm:$0xff]
    %v36 = vld [vmem:[%s1 + $0x58] sm:$0xff]
    %v37 = vld [vmem:[%s1 + $0x60] sm:$0xff]
    %v38 = vld [vmem:[%s1 + $0x68] sm:$0xff]
    %v39 = vld [vmem:[%s1 + $0x70] sm:$0xff]
    %v40 = vld [vmem:[%s1 + $0x78] sm:$0xff]
    %v41 = vld [vmem:[%s1 + $0x80] sm:$0xff]
    %v42 = vld [vmem:[%s1 + $0x88] sm:$0xff]
    %v43 = vld [vmem:[%s1 + $0x90] sm:$0xff]
    %v44 = vld [vmem:[%s1 + $0x98] sm:$0xff]
    %v45 = vld [vmem:[%s1 + $0xa0] sm:$0xff]
    %v46 = vld [vmem:[%s1 + $0xa8] sm:$0xff]
    %v47 = vld [vmem:[%s1 + $0xb0] sm:$0xff]
    %v48 = vld [vmem:[%s1 + $0xb8] sm:$0xff]
    %v49 = vld [vmem:[%s1 + $0xc0] sm:$0xff]
    %v50 = vld [vmem:[%s1 + $0xc8] sm:$0xff]
    %v51 = vld [vmem:[%s1 + $0xd0] sm:$0xff]
    %v52 = vld [vmem:[%s1 + $0xd8] sm:$0xff]
    %v53 = vld [vmem:[%s1 + $0xe0] sm:$0xff]
    %v54 = vld [vmem:[%s1 + $0xe8] sm:$0xff]
    %v55 = vld [vmem:[%s1 + $0xf0] sm:$0xff]
    %v56 = vld [vmem:[%s1 + $0xf8] sm:$0xff]
    %v57 = vld [vmem:[%s1 + $0x100] sm:$0xff]
    %v58 = vld [vmem:[%s1 + $0x108] sm:$0xff]
    %v59 = vld [vmem:[%s1 + $0x110] sm:$0xff]
    %v60 = vld [vmem:[%s1 + $0x118] sm:$0xff]
    %v61 = vld [vmem:[%s1 + $0x120] sm:$0xff]
    %v62 = vld [vmem:[%s1 + $0x128] sm:$0xff]
    %v63 = vld [vmem:[%s1 + $0x130] sm:$0xff]
    %v64 = vld [vmem:[%s1 + $0x138] sm:$0xff]
    %v65 = vld [vmem:[%s1 + $0x140] sm:$0xff]
    %v66 = vld [vmem:[%s1 + $0x148] sm:$0xff]
    %v67 = vld [vmem:[%s1 + $0x150] sm:$0xff]
    %v68 = vld [vmem:[%s1 + $0x158] sm:$0xff]
    %v69 = vld [vmem:[%s1 + $0x160] sm:$0xff]
    %v70 = vld [vmem:[%s1 + $0x168] sm:$0xff]
    %v71 = vld [vmem:[%s1 + $0x170] sm:$0xff]
    %v72 = vld [vmem:[%s1 + $0x178] sm:$0xff]
    %v73 = vld [vmem:[%s1 + $0x180] sm:$0xff]
    %v74 = vld [vmem:[%s1 + $0x188] sm:$0xff]
    %v75 = vld [vmem:[%s1 + $0x190] sm:$0xff]
    %v76 = vld [vmem:[%s1 + $0x198] sm:$0xff]
    %v77 = vld [vmem:[%s1 + $0x1a0] sm:$0xff]
    %v78 = vld [vmem:[%s1 + $0x1a8] sm:$0xff]
    %v79 = vld [vmem:[%s1 + $0x1b0] sm:$0xff]
    %v80 = vld [vmem:[%s1 + $0x1b8] sm:$0xff]
    %v81 = vld [vmem:[%s1 + $0x1c0] sm:$0xff]
    %v82 = vld [vmem:[%s1 + $0x1c8] sm:$0xff]
    %v83 = vld [vmem:[%s1 + $0x1d0] sm:$0xff]
    %v84 = vld [vmem:[%s1 + $0x1d8] sm:$0xff]
    %v85 = vld [vmem:[%s1 + $0x1e0] sm:$0xff]
    %v86 = vld [vmem:[%s1 + $0x1e8] sm:$0xff]
    %v87 = vld [vmem:[%s1 + $0x1f0] sm:$0xff]
    %v88 = vld [vmem:[%s1 + $0x1f8] sm:$0xff]
    %v89 = vld [vmem:[%s1 + $0x200] sm:$0xff]
    %v90 = vld [vmem:[%s1 + $0x208] sm:$0xff]
    %v91 = vld [vmem:[%s1 + $0x210] sm:$0xff]
    %v92 = vld [vmem:[%s1 + $0x218] sm:$0xff]
    %v93 = vld [vmem:[%s1 + $0x220] sm:$0xff]
    %v94 = vld [vmem:[%s1 + $0x228] sm:$0xff]
    %v95 = vld [vmem:[%s1 + $0x230] sm:$0xff]
    %v96 = vld [vmem:[%s1 + $0x238] sm:$0xff]
    %v97 = vld [vmem:[%s1 + $0x240] sm:$0xff]
    %v98 = vld [vmem:[%s1 + $0x248] sm:$0xff]
    %v99 = vld [vmem:[%s1 + $0x250] sm:$0xff]
    %v100 = vld [vmem:[%s1 + $0x258] sm:$0xff]
    %v101 = vld [vmem:[%s1 + $0x260] sm:$0xff]
    %v102 = vld [vmem:[%s1 + $0x268] sm:$0xff]
    %v103 = vld [vmem:[%s1 + $0x270] sm:$0xff]
    %v104 = vld [vmem:[%s1 + $0x278] sm:$0xff]
    %v105 = vld [vmem:[%s1 + $0x280] sm:$0xff]
    %v106 = vld [vmem:[%s1 + $0x288] sm:$0xff]
    %v107 = vld [vmem:[%s1 + $0x290] sm:$0xff]
    %v108 = vld [vmem:[%s1 + $0x298] sm:$0xff]
    %v109 = vld [vmem:[%s1 + $0x2a0] sm:$0xff]
    %v110 = vld [vmem:[%s1 + $0x2a8] sm:$0xff]
    %v111 = vld [vmem:[%s1 + $0x2b0] sm:$0xff]
    %v112 = vld [vmem:[%s1 + $0x2b8] sm:$0xff]
    %v113 = vld [vmem:[%s1 + $0x2c0] sm:$0xff]
    %v114 = vld [vmem:[%s1 + $0x2c8] sm:$0xff]
    %v115 = vld [vmem:[%s1 + $0x2d0] sm:$0xff]
    %v116 = vld [vmem:[%s1 + $0x2d8] sm:$0xff]
    %v117 = vld [vmem:[%s1 + $0x2e0] sm:$0xff]
    %v118 = vld [vmem:[%s1 + $0x2e8] sm:$0xff]
    %v119 = vld [vmem:[%s1 + $0x2f0] sm:$0xff]
    %v120 = vld [vmem:[%s1 + $0x2f8] sm:$0xff]
    %v121 = vld [vmem:[%s1 + $0x300] sm:$0xff]
    %v122 = vld [vmem:[%s1 + $0x308] sm:$0xff]
    %v123 = vld [vmem:[%s1 + $0x310] sm:$0xff]
    %v124 = vld [vmem:[%s1 + $0x318] sm:$0xff]
    %v125 = vld [vmem:[%s1 + $0x320] sm:$0xff]
    %v126 = vld [vmem:[%s1 + $0x328] sm:$0xff]
    %v127 = vld [vmem:[%s1 + $0x330] sm:$0xff]
    %v128 = vld [vmem:[%s1 + $0x338] sm:$0xff]
    %v129 = vld [vmem:[%s1 + $0x340] sm:$0xff]
    %v130 = vld [vmem:[%s1 + $0x348] sm:$0xff]
    %v131 = vld [vmem:[%s1 + $0x350] sm:$0xff]
    %v132 = vld [vmem:[%s1 + $0x358] sm:$0xff]
    %v133 = vld [vmem:[%s1 + $0x360] sm:$0xff]
    %v134 = vld [vmem:[%s1 + $0x368] sm:$0xff]
    %v135 = vld [vmem:[%s1 + $0x370] sm:$0xff]
    %v136 = vld [vmem:[%s1 + $0x378] sm:$0xff]
    %v137 = vld [vmem:[%s1 + $0x380] sm:$0xff]
    %v138 = vld [vmem:[%s1 + $0x388] sm:$0xff]
    %v139 = vld [vmem:[%s1 + $0x390] sm:$0xff]
    %v140 = vld [vmem:[%s1 + $0x398] sm:$0xff]
    %v141 = vld [vmem:[%s1 + $0x3a0] sm:$0xff]
    %v142 = vld [vmem:[%s1 + $0x3a8] sm:$0xff]
    %v143 = vld [vmem:[%s1 + $0x3b0] sm:$0xff]
    %v144 = vld [vmem:[%s1 + $0x3b8] sm:$0xff]
    %v145 = vld [vmem:[%s1 + $0x3c0] sm:$0xff]
    %v146 = vld [vmem:[%s1 + $0x3c8] sm:$0xff]
    %v147 = vld [vmem:[%s1 + $0x3d0] sm:$0xff]
    %v148 = vld [vmem:[%s1 + $0x3d8] sm:$0xff]
    %v149 = vld [vmem:[%s1 + $0x3e0] sm:$0xff]
    %v150 = vld [vmem:[%s1 + $0x3e8] sm:$0xff]
    %v151 = vld [vmem:[%s1 + $0x3f0] sm:$0xff]
    %v152 = vld [vmem:[%s1 + $0x3f8] sm:$0xff]
    %v153 = vld [vmem:[%s1 + $0x400] sm:$0xff]
    %v154 = vld [vmem:[%s1 + $0x408] sm:$0xff]
    %v155 = vld [vmem:[%s1 + $0x410] sm:$0xff]
    %v156 = vld [vmem:[%s1 + $0x418] sm:$0xff]
    %v157 = vld [vmem:[%s1 + $0x420] sm:$0xff]
    %v158 = vld [vmem:[%s1 + $0x428] sm:$0xff]
    %v159 = vld [vmem:[%s1 + $0x430] sm:$0xff]
    %v160 = vld [vmem:[%s1 + $0x438] sm:$0xff]
    %v161 = vld [vmem:[%s1 + $0x440] sm:$0xff]
    %v162 = vld [vmem:[%s1 + $0x448] sm:$0xff]
    %v163 = vld [vmem:[%s1 + $0x450] sm:$0xff]
    %v164 = vld [vmem:[%s1 + $0x458] sm:$0xff]
    %v165 = vld [vmem:[%s1 + $0x460] sm:$0xff]
    %v166 = vld [vmem:[%s1 + $0x468] sm:$0xff]
    %v167 = vld [vmem:[%s1 + $0x470] sm:$0xff]
    %v168 = vld [vmem:[%s1 + $0x478] sm:$0xff]
    %v169 = vld [vmem:[%s1 + $0x480] sm:$0xff]
    %v170 = vld [vmem:[%s1 + $0x488] sm:$0xff]
    %v171 = vld [vmem:[%s1 + $0x490] sm:$0xff]
    %v172 = vld [vmem:[%s1 + $0x498] sm:$0xff]
    %v173 = vld [vmem:[%s1 + $0x4a0] sm:$0xff]
    %v174 = vld [vmem:[%s1 + $0x4a8] sm:$0xff]
    %v175 = vld [vmem:[%s1 + $0x4b0] sm:$0xff]
    %v176 = vld [vmem:[%s1 + $0x4b8] sm:$0xff]
    %v177 = vld [vmem:[%s1 + $0x4c0] sm:$0xff]
    %v178 = vld [vmem:[%s1 + $0x4c8] sm:$0xff]
    %v179 = vld [vmem:[%s1 + $0x4d0] sm:$0xff]
    %v180 = vld [vmem:[%s1 + $0x4d8] sm:$0xff]
    %v181 = vld [vmem:[%s1 + $0x4e0] sm:$0xff]
    %v182 = vld [vmem:[%s1 + $0x4e8] sm:$0xff]
    %v183 = vld [vmem:[%s1 + $0x4f0] sm:$0xff]
    %v184 = vld [vmem:[%s1 + $0x4f8] sm:$0xff]
    %v185 = vld [vmem:[%s1 + $0x500] sm:$0xff]
    %v186 = vld [vmem:[%s1 + $0x508] sm:$0xff]
    %v187 = vld [vmem:[%s1 + $0x510] sm:$0xff]
    %v188 = vld [vmem:[%s1 + $0x518] sm:$0xff]
    %v189 = vld [vmem:[%s1 + $0x520] sm:$0xff]
    %v190 = vld [vmem:[%s1 + $0x528] sm:$0xff]
    %v191 = vld [vmem:[%s1 + $0x530] sm:$0xff]
    %v192 = vld [vmem:[%s1 + $0x538] sm:$0xff]
    %v193 = vld [vmem:[%s1 + $0x540] sm:$0xff]
    %v194 = vld [vmem:[%s1 + $0x548] sm:$0xff]
    %v195 = vld [vmem:[%s1 + $0x550] sm:$0xff]
    %v196 = vld [vmem:[%s1 + $0x558] sm:$0xff]
    %v197 = vld [vmem:[%s1 + $0x560] sm:$0xff]
    %v198 = vld [vmem:[%s1 + $0x568] sm:$0xff]
    %v199 = vld [vmem:[%s1 + $0x570] sm:$0xff]
    %v200 = vld [vmem:[%s1 + $0x578] sm:$0xff]
    %v201 = vld [vmem:[%s1 + $0x580] sm:$0xff]
    %v202 = vld [vmem:[%s1 + $0x588] sm:$0xff]
    %v203 = vld [vmem:[%s1 + $0x590] sm:$0xff]
    %v204 = vld [vmem:[%s1 + $0x598] sm:$0xff]
    %v205 = vld [vmem:[%s1 + $0x5a0] sm:$0xff]
    %v206 = vld [vmem:[%s1 + $0x5a8] sm:$0xff]
    %v207 = vld [vmem:[%s1 + $0x5b0] sm:$0xff]
    %v208 = vld [vmem:[%s1 + $0x5b8] sm:$0xff]
    %v209 = vld [vmem:[%s1 + $0x5c0] sm:$0xff]
    %v210 = vld [vmem:[%s1 + $0x5c8] sm:$0xff]
    %v211 = vld [vmem:[%s1 + $0x5d0] sm:$0xff]
    %v212 = vld [vmem:[%s1 + $0x5d8] sm:$0xff]
    %v213 = vld [vmem:[%s1 + $0x5e0] sm:$0xff]
    %v214 = vld [vmem:[%s1 + $0x5e8] sm:$0xff]
    %v215 = vld [vmem:[%s1 + $0x5f0] sm:$0xff]
    %v216 = vld [vmem:[%s1 + $0x5f8] sm:$0xff]
    %v217 = vld [vmem:[%s1 + $0x600] sm:$0xff]
    %v218 = vld [vmem:[%s1 + $0x608] sm:$0xff]
    %v219 = vld [vmem:[%s1 + $0x610] sm:$0xff]
    %v220 = vld [vmem:[%s1 + $0x618] sm:$0xff]
    %v221 = vld [vmem:[%s1 + $0x620] sm:$0xff]
    %v222 = vld [vmem:[%s1 + $0x628] sm:$0xff]
    %v223 = vld [vmem:[%s1 + $0x630] sm:$0xff]
    %v224 = vld [vmem:[%s1 + $0x638] sm:$0xff]
    %v225 = vld [vmem:[%s1 + $0x640] sm:$0xff]
    %v226 = vld [vmem:[%s1 + $0x648] sm:$0xff]
    %v227 = vld [vmem:[%s1 + $0x650] sm:$0xff]
    %v228 = vld [vmem:[%s1 + $0x658] sm:$0xff]
    %v229 = vld [vmem:[%s1 + $0x660] sm:$0xff]
    %v230 = vld [vmem:[%s1 + $0x668] sm:$0xff]
    %v231 = vld [vmem:[%s1 + $0x670] sm:$0xff]
    %v232 = vld [vmem:[%s1 + $0x678] sm:$0xff]
    %v233 = vld [vmem:[%s1 + $0x680] sm:$0xff]
    %v234 = vld [vmem:[%s1 + $0x688] sm:$0xff]
    %v235 = vld [vmem:[%s1 + $0x690] sm:$0xff]
    %v236 = vld [vmem:[%s1 + $0x698] sm:$0xff]
    %v237 = vld [vmem:[%s1 + $0x6a0] sm:$0xff]
    %v238 = vld [vmem:[%s1 + $0x6a8] sm:$0xff]
    %v239 = vld [vmem:[%s1 + $0x6b0] sm:$0xff]
    %v240 = vld [vmem:[%s1 + $0x6b8] sm:$0xff]
    %v241 = vld [vmem:[%s1 + $0x6c0] sm:$0xff]
    %v242 = vld [vmem:[%s1 + $0x6c8] sm:$0xff]
    %v243 = vld [vmem:[%s1 + $0x6d0] sm:$0xff]
    %v244 = vld [vmem:[%s1 + $0x6d8] sm:$0xff]
    %v245 = vld [vmem:[%s1 + $0x6e0] sm:$0xff]
    %v246 = vld [vmem:[%s1 + $0x6e8] sm:$0xff]
    %v247 = vld [vmem:[%s1 + $0x6f0] sm:$0xff]
    %v248 = vld [vmem:[%s1 + $0x6f8] sm:$0xff]
    %v249 = vld [vmem:[%s1 + $0x700] sm:$0xff]
    %v250 = vld [vmem:[%s1 + $0x708] sm:$0xff]
    %v251 = vld [vmem:[%s1 + $0x710] sm:$0xff]
    %v252 = vld [vmem:[%s1 + $0x718] sm:$0xff]
    %v253 = vld [vmem:[%s1 + $0x720] sm:$0xff]
    %v254 = vld [vmem:[%s1 + $0x728] sm:$0xff]
    %v255 = vld [vmem:[%s1 + $0x730] sm:$0xff]
    %v256 = vld [vmem:[%s1 + $0x738] sm:$0xff]
    %v257 = vld [vmem:[%s1 + $0x740] sm:$0xff]
    %v258 = vld [vmem:[%s1 + $0x748] sm:$0xff]
    %v259 = vld [vmem:[%s1 + $0x750] sm:$0xff]
    %v260 = vld [vmem:[%s1 + $0x758] sm:$0xff]
    %v261 = vld [vmem:[%s1 + $0x760] sm:$0xff]
    %v262 = vld [vmem:[%s1 + $0x768] sm:$0xff]
    %v263 = vld [vmem:[%s1 + $0x770] sm:$0xff]
    %v264 = vld [vmem:[%s1 + $0x778] sm:$0xff]
    %v265 = vld [vmem:[%s1 + $0x780] sm:$0xff]
    %v266 = vld [vmem:[%s1 + $0x788] sm:$0xff]
    %v267 = vld [vmem:[%s1 + $0x790] sm:$0xff]
    %v268 = vld [vmem:[%s1 + $0x798] sm:$0xff]
    %v269 = vld [vmem:[%s1 + $0x7a0] sm:$0xff]
    %v270 = vld [vmem:[%s1 + $0x7a8] sm:$0xff]
    %v271 = vld [vmem:[%s1 + $0x7b0] sm:$0xff]
    %v272 = vld [vmem:[%s1 + $0x7b8] sm:$0xff]
    %v273 = vld [vmem:[%s1 + $0x7c0] sm:$0xff]
    %v274 = vld [vmem:[%s1 + $0x7c8] sm:$0xff]
    %v275 = vld [vmem:[%s1 + $0x7d0] sm:$0xff]
    %v276 = vld [vmem:[%s1 + $0x7d8] sm:$0xff]
    %v277 = vld [vmem:[%s1 + $0x7e0] sm:$0xff]
    %v278 = vld [vmem:[%s1 + $0x7e8] sm:$0xff]
    %v279 = vld [vmem:[%s1 + $0x7f0] sm:$0xff]
    %v280 = vld [vmem:[%s1 + $0x7f8] sm:$0xff]
    %v281 = vld [vmem:[%s1 + $0x800] sm:$0xff]
    %v282 = vld [vmem:[%s1 + $0x808] sm:$0xff]
    %v283 = vld [vmem:[%s1 + $0x810] sm:$0xff]
    %v284 = vld [vmem:[%s1 + $0x818] sm:$0xff]
    %v285 = vld [vmem:[%s1 + $0x820] sm:$0xff]
    %v286 = vld [vmem:[%s1 + $0x828] sm:$0xff]
    %v287 = vld [vmem:[%s1 + $0x830] sm:$0xff]
    %v288 = vld [vmem:[%s1 + $0x838] sm:$0xff]
    %v289 = vld [vmem:[%s1 + $0x840] sm:$0xff]
    %v290 = vld [vmem:[%s1 + $0x848] sm:$0xff]
    %v291 = vld [vmem:[%s1 + $0x850] sm:$0xff]
    %v292 = vld [vmem:[%s1 + $0x858] sm:$0xff]
    %v293 = vld [vmem:[%s1 + $0x860] sm:$0xff]
    %v294 = vld [vmem:[%s1 + $0x868] sm:$0xff]
    %v295 = vld [vmem:[%s1 + $0x870] sm:$0xff]
    %v296 = vld [vmem:[%s1 + $0x878] sm:$0xff]
    %v297 = vld [vmem:[%s1 + $0x880] sm:$0xff]
    %v298 = vld [vmem:[%s1 + $0x888] sm:$0xff]
    %v299 = vld [vmem:[%s1 + $0x890] sm:$0xff]
    %v300 = vld [vmem:[%s1 + $0x898] sm:$0xff]
    %v301 = vld [vmem:[%s1 + $0x8a0] sm:$0xff]
    %v302 = vld [vmem:[%s1 + $0x8a8] sm:$0xff]
    %v303 = vld [vmem:[%s1 + $0x8b0] sm:$0xff]
    %v304 = vld [vmem:[%s1 + $0x8b8] sm:$0xff]
    %v305 = vld [vmem:[%s1 + $0x8c0] sm:$0xff]
    %v306 = vld [vmem:[%s1 + $0x8c8] sm:$0xff]
    %v307 = vld [vmem:[%s1 + $0x8d0] sm:$0xff]
    %v308 = vld [vmem:[%s1 + $0x8d8] sm:$0xff]
    %v309 = vld [vmem:[%s1 + $0x8e0] sm:$0xff]
    %v310 = vld [vmem:[%s1 + $0x8e8] sm:$0xff]
    %v311 = vld [vmem:[%s1 + $0x8f0] sm:$0xff]
    %v312 = vld [vmem:[%s1 + $0x8f8] sm:$0xff]
    %v313 = vld [vmem:[%s1 + $0x900] sm:$0xff]
    %v314 = vld [vmem:[%s1 + $0x908] sm:$0xff]
    %v315 = vld [vmem:[%s1 + $0x910] sm:$0xff]
    %v316 = vld [vmem:[%s1 + $0x918] sm:$0xff]
    %v317 = vld [vmem:[%s1 + $0x920] sm:$0xff]
    %v318 = vld [vmem:[%s1 + $0x928] sm:$0xff]
    %v319 = vld [vmem:[%s1 + $0x930] sm:$0xff]
    %v320 = vld [vmem:[%s1 + $0x938] sm:$0xff]
    %v321 = vld [vmem:[%s1 + $0x940] sm:$0xff]
    %v322 = vld [vmem:[%s1 + $0x948] sm:$0xff]
    %v323 = vld [vmem:[%s1 + $0x950] sm:$0xff]
    %v324 = vld [vmem:[%s1 + $0x958] sm:$0xff]
    %v325 = vld [vmem:[%s1 + $0x960] sm:$0xff]
    %v326 = vld [vmem:[%s1 + $0x968] sm:$0xff]
    %v327 = vld [vmem:[%s1 + $0x970] sm:$0xff]
    %v328 = vld [vmem:[%s1 + $0x978] sm:$0xff]
    %v329 = vld [vmem:[%s1 + $0x980] sm:$0xff]
    %v330 = vld [vmem:[%s1 + $0x988] sm:$0xff]
    %v331 = vld [vmem:[%s1 + $0x990] sm:$0xff]
    %v332 = vld [vmem:[%s1 + $0x998] sm:$0xff]
    %v333 = vld [vmem:[%s1 + $0x9a0] sm:$0xff]
    %v334 = vld [vmem:[%s1 + $0x9a8] sm:$0xff]
    %v335 = vld [vmem:[%s1 + $0x9b0] sm:$0xff]
    %v336 = vld [vmem:[%s1 + $0x9b8] sm:$0xff]
    %v337 = vld [vmem:[%s1 + $0x9c0] sm:$0xff]
    %v338 = vld [vmem:[%s1 + $0x9c8] sm:$0xff]
    %v339 = vld [vmem:[%s1 + $0x9d0] sm:$0xff]
    %v340 = vld [vmem:[%s1 + $0x9d8] sm:$0xff]
    %v341 = vld [vmem:[%s1 + $0x9e0] sm:$0xff]
    %v342 = vld [vmem:[%s1 + $0x9e8] sm:$0xff]
    %v343 = vld [vmem:[%s1 + $0x9f0] sm:$0xff]
    %v344 = vld [vmem:[%s1 + $0x9f8] sm:$0xff]
    %v345 = vld [vmem:[%s1 + $0xa00] sm:$0xff]
    %v346 = vld [vmem:[%s1 + $0xa08] sm:$0xff]
    %v347 = vld [vmem:[%s1 + $0xa10] sm:$0xff]
    %v348 = vld [vmem:[%s1 + $0xa18] sm:$0xff]
    %v349 = vld [vmem:[%s1 + $0xa20] sm:$0xff]
    %v350 = vld [vmem:[%s1 + $0xa28] sm:$0xff]
    %v351 = vld [vmem:[%s1 + $0xa30] sm:$0xff]
    %v352 = vld [vmem:[%s1 + $0xa38] sm:$0xff]
    %v353 = vld [vmem:[%s1 + $0xa40] sm:$0xff]
    %v354 = vld [vmem:[%s1 + $0xa48] sm:$0xff]
    %v355 = vld [vmem:[%s1 + $0xa50] sm:$0xff]
    %v356 = vld [vmem:[%s1 + $0xa58] sm:$0xff]
    %v357 = vld [vmem:[%s1 + $0xa60] sm:$0xff]
    %v358 = vld [vmem:[%s1 + $0xa68] sm:$0xff]
    %v359 = vld [vmem:[%s1 + $0xa70] sm:$0xff]
    %v360 = vld [vmem:[%s1 + $0xa78] sm:$0xff]
    %v361 = vld [vmem:[%s1 + $0xa80] sm:$0xff]
    %v362 = vld [vmem:[%s1 + $0xa88] sm:$0xff]
    %v363 = vld [vmem:[%s1 + $0xa90] sm:$0xff]
    %v364 = vld [vmem:[%s1 + $0xa98] sm:$0xff]
    %v365 = vld [vmem:[%s1 + $0xaa0] sm:$0xff]
    %v366 = vld [vmem:[%s1 + $0xaa8] sm:$0xff]
    %v367 = vld [vmem:[%s1 + $0xab0] sm:$0xff]
    %v368 = vld [vmem:[%s1 + $0xab8] sm:$0xff]
    %v369 = vld [vmem:[%s1 + $0xac0] sm:$0xff]
    %v370 = vld [vmem:[%s1 + $0xac8] sm:$0xff]
    %v371 = vld [vmem:[%s1 + $0xad0] sm:$0xff]
    %v372 = vld [vmem:[%s1 + $0xad8] sm:$0xff]
    %v373 = vld [vmem:[%s1 + $0xae0] sm:$0xff]
    %v374 = vld [vmem:[%s1 + $0xae8] sm:$0xff]
    %v375 = vld [vmem:[%s1 + $0xaf0] sm:$0xff]
    %v376 = vld [vmem:[%s1 + $0xaf8] sm:$0xff]
    %v377 = vld [vmem:[%s1 + $0xb00] sm:$0xff]
    %v378 = vld [vmem:[%s1 + $0xb08] sm:$0xff]
    %v379 = vld [vmem:[%s1 + $0xb10] sm:$0xff]
    %v380 = vld [vmem:[%s1 + $0xb18] sm:$0xff]
    %v381 = vld [vmem:[%s1 + $0xb20] sm:$0xff]
    %v382 = vld [vmem:[%s1 + $0xb28] sm:$0xff]
    %v383 = vld [vmem:[%s1 + $0xb30] sm:$0xff]
    %v384 = vld [vmem:[%s1 + $0xb38] sm:$0xff]
    %v385 = vld [vmem:[%s1 + $0xb40] sm:$0xff]
    %v386 = vld [vmem:[%s1 + $0xb48] sm:$0xff]
    %v387 = vld [vmem:[%s1 + $0xb50] sm:$0xff]
    %v388 = vld [vmem:[%s1 + $0xb58] sm:$0xff]
    %v389 = vld [vmem:[%s1 + $0xb60] sm:$0xff]
    %v390 = vld [vmem:[%s1 + $0xb68] sm:$0xff]
    %v391 = vld [vmem:[%s1 + $0xb70] sm:$0xff]
    %v392 = vld [vmem:[%s1 + $0xb78] sm:$0xff]
    %v393 = vld [vmem:[%s1 + $0xb80] sm:$0xff]
    %v394 = vld [vmem:[%s1 + $0xb88] sm:$0xff]
    %v395 = vld [vmem:[%s1 + $0xb90] sm:$0xff]
    %v396 = vld [vmem:[%s1 + $0xb98] sm:$0xff]
    %v397 = vld [vmem:[%s1 + $0xba0] sm:$0xff]
    %v398 = vld [vmem:[%s1 + $0xba8] sm:$0xff]
    %v399 = vld [vmem:[%s1 + $0xbb0] sm:$0xff]
    %v400 = vld [vmem:[%s1 + $0xbb8] sm:$0xff]
    %v401 = vld [vmem:[%s1 + $0xbc0] sm:$0xff]
    %v402 = vld [vmem:[%s1 + $0xbc8] sm:$0xff]
    %v403 = vld [vmem:[%s1 + $0xbd0] sm:$0xff]
    %v404 = vld [vmem:[%s1 + $0xbd8] sm:$0xff]
    %v405 = vld [vmem:[%s1 + $0xbe0] sm:$0xff]
    %v406 = vld [vmem:[%s1 + $0xbe8] sm:$0xff]
    %v407 = vld [vmem:[%s1 + $0xbf0] sm:$0xff]
    %v408 = vld [vmem:[%s1 + $0xbf8] sm:$0xff]
    %v409 = vld [vmem:[%s1 + $0xc00] sm:$0xff]
    %v410 = vld [vmem:[%s1 + $0xc08] sm:$0xff]
    %v411 = vld [vmem:[%s1 + $0xc10] sm:$0xff]
    %v412 = vld [vmem:[%s1 + $0xc18] sm:$0xff]
    %v413 = vld [vmem:[%s1 + $0xc20] sm:$0xff]
    %v414 = vld [vmem:[%s1 + $0xc28] sm:$0xff]
    %v415 = vld [vmem:[%s1 + $0xc30] sm:$0xff]
    %v416 = vld [vmem:[%s1 + $0xc38] sm:$0xff]
    %v417 = vld [vmem:[%s1 + $0xc40] sm:$0xff]
    %v418 = vld [vmem:[%s1 + $0xc48] sm:$0xff]
    %v419 = vld [vmem:[%s1 + $0xc50] sm:$0xff]
    %v420 = vld [vmem:[%s1 + $0xc58] sm:$0xff]
    %v421 = vld [vmem:[%s1 + $0xc60] sm:$0xff]
    %v422 = vld [vmem:[%s1 + $0xc68] sm:$0xff]
    %v423 = vld [vmem:[%s1 + $0xc70] sm:$0xff]
    %v424 = vld [vmem:[%s1 + $0xc78] sm:$0xff]
    %v425 = vld [vmem:[%s2] sm:$0xf]
    %v427 = vlaneseq
    %v428 = vshrl.u32 %v427, 7
    %v429 = vsub.s32 0, %v428
    %v430 = vrot.slane %v425, %v429
    %v431 = vlaneseq
    %v432 = vshrl.u32 %v431, 7
    %v433 = vsub.s32 1, %v432
    %v434 = vrot.slane %v425, %v433
    %v435 = vlaneseq
    %v436 = vshrl.u32 %v435, 7
    %v437 = vsub.s32 2, %v436
    %v438 = vrot.slane %v425, %v437
    %v439 = vlaneseq
    %v440 = vshrl.u32 %v439, 7
    %v441 = vsub.s32 3, %v440
    %v442 = vrot.slane %v425, %v441
    %v449 = vcombine.high %v23, %v23
    %v451 = vunpack.c.l.s4 1983009808
    %v452 = vunpack.c.0.s8 %v451
    %v453 = vlaneseq
    %v454 = vshrl.u32 %v453, 7
    %v455 = vsub.s32 %v452, %v454
    %v456 = vrot.slane %v23, %v455
    %v458 = vunpack.c.l.s4 1983009808
    %v459 = vunpack.c.0.s8 %v458
    %v460 = vlaneseq
    %v461 = vshrl.u32 %v460, 7
    %v462 = vsub.s32 %v459, %v461
    %v463 = vrot.slane %v449, %v462
    %v464 = vcombine.high %v456, %v456
    %v465 = vcombine.high %v463, %v463
    %v466 = vcombine.high %v24, %v24
    %v468 = vunpack.c.l.s4 1983009808
    %v469 = vunpack.c.0.s8 %v468
    %v470 = vlaneseq
    %v471 = vshrl.u32 %v470, 7
    %v472 = vsub.s32 %v469, %v471
    %v473 = vrot.slane %v24, %v472
    %v475 = vunpack.c.l.s4 1983009808
    %v476 = vunpack.c.0.s8 %v475
    %v477 = vlaneseq
    %v478 = vshrl.u32 %v477, 7
    %v479 = vsub.s32 %v476, %v478
    %v480 = vrot.slane %v466, %v479
    %v481 = vcombine.high %v473, %v473
    %vm488 = vcmask 261120
    %v489 = vsel %vm488, %v480, 0
    %491 = vmatprep.subr.mxu0 %v86
    %492 = vmatpush1.msra.mxu0 %v85
    %493 = vmatprep.subr.mxu0 %v82
    %494 = vmatpush1.msra.mxu0 %v81
    %495 = vmatprep.subr.mxu0 %v78
    %496 = vmatpush1.msra.mxu0 %v77
    %497 = vmatprep.subr.mxu0 %v74
    %498 = vmatpush1.msra.mxu0 %v73
    %499 = vmatprep.subr.mxu0 %v70
    %500 = vmatpush1.msra.mxu0 %v69
    %501 = vmatprep.subr.mxu0 %v66
    %502 = vmatpush1.msra.mxu0 %v65
    %503 = vmatprep.subr.mxu0 %v62
    %504 = vmatpush1.msra.mxu0 %v61
    %505 = vmatprep.subr.mxu0 %v58
    %506 = vmatpush1.msra.mxu0 %v57
    %507 = vmatprep.subr.mxu0 %v54
    %508 = vmatpush1.msra.mxu0 %v53
    %509 = vmatprep.subr.mxu0 %v50
    %510 = vmatpush1.msra.mxu0 %v49
    %511 = vmatprep.subr.mxu0 %v46
    %512 = vmatpush1.msra.mxu0 %v45
    %513 = vmatprep.subr.mxu0 %v42
    %514 = vmatpush1.msra.mxu0 %v41
    %515 = vmatprep.subr.mxu0 %v38
    %516 = vmatpush1.msra.mxu0 %v37
    %517 = vmatprep.subr.mxu0 %v34
    %518 = vmatpush1.msra.mxu0 %v33
    %519 = vmatprep.subr.mxu0 %v30
    %520 = vmatpush1.msra.mxu0 %v29
    %521 = vmatprep.subr.mxu0 %v26
    %522 = vmatpush1.msra.mxu0 %v25
    %523 = vmatprep.subr.mxu0 %v150
    %524 = vmatpush2.msra.mxu0 %v149
    %525 = vmatprep.subr.mxu0 %v146
    %526 = vmatpush2.msra.mxu0 %v145
    %527 = vmatprep.subr.mxu0 %v142
    %528 = vmatpush2.msra.mxu0 %v141
    %529 = vmatprep.subr.mxu0 %v138
    %530 = vmatpush2.msra.mxu0 %v137
    %531 = vmatprep.subr.mxu0 %v134
    %532 = vmatpush2.msra.mxu0 %v133
    %533 = vmatprep.subr.mxu0 %v130
    %534 = vmatpush2.msra.mxu0 %v129
    %535 = vmatprep.subr.mxu0 %v126
    %536 = vmatpush2.msra.mxu0 %v125
    %537 = vmatprep.subr.mxu0 %v122
    %538 = vmatpush2.msra.mxu0 %v121
    %539 = vmatprep.subr.mxu0 %v118
    %540 = vmatpush2.msra.mxu0 %v117
    %541 = vmatprep.subr.mxu0 %v114
    %542 = vmatpush2.msra.mxu0 %v113
    %543 = vmatprep.subr.mxu0 %v110
    %544 = vmatpush2.msra.mxu0 %v109
    %545 = vmatprep.subr.mxu0 %v106
    %546 = vmatpush2.msra.mxu0 %v105
    %547 = vmatprep.subr.mxu0 %v102
    %548 = vmatpush2.msra.mxu0 %v101
    %549 = vmatprep.subr.mxu0 %v98
    %550 = vmatpush2.msra.mxu0 %v97
    %551 = vmatprep.subr.mxu0 %v94
    %552 = vmatpush2.msra.mxu0 %v93
    %553 = vmatprep.subr.mxu0 %v90
    %554 = vmatpush2.msra.mxu0 %v89
    %555 = vmatprep.mubr.f32.mxu0 %v464
    %556 = vmatmul.mubr.f32.gmra.mxu0 %v456
    %v557 = vpop.f32.mrf.mxu0
    %v558 = vadd.f32 %v430, %v557
    %v559 = vpop.f32.mrf.mxu0
    %v560 = vadd.f32 %v434, %v559
    %561 = vdwg.mxu0
    %562 = vmatprep.subr.mxu0 %v214
    %563 = vmatpush1.msra.mxu0 %v213
    %564 = vmatprep.subr.mxu0 %v210
    %565 = vmatpush1.msra.mxu0 %v209
    %566 = vmatprep.subr.mxu0 %v206
    %567 = vmatpush1.msra.mxu0 %v205
    %568 = vmatprep.subr.mxu0 %v202
    %569 = vmatpush1.msra.mxu0 %v201
    %570 = vmatprep.subr.mxu0 %v198
    %571 = vmatpush1.msra.mxu0 %v197
    %572 = vmatprep.subr.mxu0 %v194
    %573 = vmatpush1.msra.mxu0 %v193
    %574 = vmatprep.subr.mxu0 %v190
    %575 = vmatpush1.msra.mxu0 %v189
    %576 = vmatprep.subr.mxu0 %v186
    %577 = vmatpush1.msra.mxu0 %v185
    %578 = vmatprep.subr.mxu0 %v182
    %579 = vmatpush1.msra.mxu0 %v181
    %580 = vmatprep.subr.mxu0 %v178
    %581 = vmatpush1.msra.mxu0 %v177
    %582 = vmatprep.subr.mxu0 %v174
    %583 = vmatpush1.msra.mxu0 %v173
    %584 = vmatprep.subr.mxu0 %v170
    %585 = vmatpush1.msra.mxu0 %v169
    %586 = vmatprep.subr.mxu0 %v166
    %587 = vmatpush1.msra.mxu0 %v165
    %588 = vmatprep.subr.mxu0 %v162
    %589 = vmatpush1.msra.mxu0 %v161
    %590 = vmatprep.subr.mxu0 %v158
    %591 = vmatpush1.msra.mxu0 %v157
    %592 = vmatprep.subr.mxu0 %v154
    %593 = vmatpush1.msra.mxu0 %v153
    %594 = vmatprep.subr.mxu0 %v278
    %595 = vmatpush2.msra.mxu0 %v277
    %596 = vmatprep.subr.mxu0 %v274
    %597 = vmatpush2.msra.mxu0 %v273
    %598 = vmatprep.subr.mxu0 %v270
    %599 = vmatpush2.msra.mxu0 %v269
    %600 = vmatprep.subr.mxu0 %v266
    %601 = vmatpush2.msra.mxu0 %v265
    %602 = vmatprep.subr.mxu0 %v262
    %603 = vmatpush2.msra.mxu0 %v261
    %604 = vmatprep.subr.mxu0 %v258
    %605 = vmatpush2.msra.mxu0 %v257
    %606 = vmatprep.subr.mxu0 %v254
    %607 = vmatpush2.msra.mxu0 %v253
    %608 = vmatprep.subr.mxu0 %v250
    %609 = vmatpush2.msra.mxu0 %v249
    %610 = vmatprep.subr.mxu0 %v246
    %611 = vmatpush2.msra.mxu0 %v245
    %612 = vmatprep.subr.mxu0 %v242
    %613 = vmatpush2.msra.mxu0 %v241
    %614 = vmatprep.subr.mxu0 %v238
    %615 = vmatpush2.msra.mxu0 %v237
    %616 = vmatprep.subr.mxu0 %v234
    %617 = vmatpush2.msra.mxu0 %v233
    %618 = vmatprep.subr.mxu0 %v230
    %619 = vmatpush2.msra.mxu0 %v229
    %620 = vmatprep.subr.mxu0 %v226
    %621 = vmatpush2.msra.mxu0 %v225
    %622 = vmatprep.subr.mxu0 %v222
    %623 = vmatpush2.msra.mxu0 %v221
    %624 = vmatprep.subr.mxu0 %v218
    %625 = vmatpush2.msra.mxu0 %v217
    %626 = vmatprep.mubr.f32.mxu0 %v465
    %627 = vmatmul.mubr.f32.gmra.mxu0 %v463
    %v628 = vpop.f32.mrf.mxu0
    %v629 = vadd.f32 %v558, %v628
    %v630 = vpop.f32.mrf.mxu0
    %v631 = vadd.f32 %v560, %v630
    %632 = vdwg.mxu0
    %633 = vmatprep.subr.mxu0 %v342
    %634 = vmatpush1.msra.mxu0 %v341
    %635 = vmatprep.subr.mxu0 %v338
    %636 = vmatpush1.msra.mxu0 %v337
    %637 = vmatprep.subr.mxu0 %v334
    %638 = vmatpush1.msra.mxu0 %v333
    %639 = vmatprep.subr.mxu0 %v330
    %640 = vmatpush1.msra.mxu0 %v329
    %641 = vmatprep.subr.mxu0 %v326
    %642 = vmatpush1.msra.mxu0 %v325
    %643 = vmatprep.subr.mxu0 %v322
    %644 = vmatpush1.msra.mxu0 %v321
    %645 = vmatprep.subr.mxu0 %v318
    %646 = vmatpush1.msra.mxu0 %v317
    %647 = vmatprep.subr.mxu0 %v314
    %648 = vmatpush1.msra.mxu0 %v313
    %649 = vmatprep.subr.mxu0 %v310
    %650 = vmatpush1.msra.mxu0 %v309
    %651 = vmatprep.subr.mxu0 %v306
    %652 = vmatpush1.msra.mxu0 %v305
    %653 = vmatprep.subr.mxu0 %v302
    %654 = vmatpush1.msra.mxu0 %v301
    %655 = vmatprep.subr.mxu0 %v298
    %656 = vmatpush1.msra.mxu0 %v297
    %657 = vmatprep.subr.mxu0 %v294
    %658 = vmatpush1.msra.mxu0 %v293
    %659 = vmatprep.subr.mxu0 %v290
    %660 = vmatpush1.msra.mxu0 %v289
    %661 = vmatprep.subr.mxu0 %v286
    %662 = vmatpush1.msra.mxu0 %v285
    %663 = vmatprep.subr.mxu0 %v282
    %664 = vmatpush1.msra.mxu0 %v281
    %665 = vmatprep.subr.mxu0 %v406
    %666 = vmatpush2.msra.mxu0 %v405
    %667 = vmatprep.subr.mxu0 %v402
    %668 = vmatpush2.msra.mxu0 %v401
    %669 = vmatprep.subr.mxu0 %v398
    %670 = vmatpush2.msra.mxu0 %v397
    %671 = vmatprep.subr.mxu0 %v394
    %672 = vmatpush2.msra.mxu0 %v393
    %673 = vmatprep.subr.mxu0 %v390
    %674 = vmatpush2.msra.mxu0 %v389
    %675 = vmatprep.subr.mxu0 %v386
    %676 = vmatpush2.msra.mxu0 %v385
    %677 = vmatprep.subr.mxu0 %v382
    %678 = vmatpush2.msra.mxu0 %v381
    %679 = vmatprep.subr.mxu0 %v378
    %680 = vmatpush2.msra.mxu0 %v377
    %681 = vmatprep.subr.mxu0 %v374
    %682 = vmatpush2.msra.mxu0 %v373
    %683 = vmatprep.subr.mxu0 %v370
    %684 = vmatpush2.msra.mxu0 %v369
    %685 = vmatprep.subr.mxu0 %v366
    %686 = vmatpush2.msra.mxu0 %v365
    %687 = vmatprep.subr.mxu0 %v362
    %688 = vmatpush2.msra.mxu0 %v361
    %689 = vmatprep.subr.mxu0 %v358
    %690 = vmatpush2.msra.mxu0 %v357
    %691 = vmatprep.subr.mxu0 %v354
    %692 = vmatpush2.msra.mxu0 %v353
    %693 = vmatprep.subr.mxu0 %v350
    %694 = vmatpush2.msra.mxu0 %v349
    %695 = vmatprep.subr.mxu0 %v346
    %696 = vmatpush2.msra.mxu0 %v345
    %697 = vmatprep.mubr.f32.mxu0 %v481
    %698 = vmatmul.mubr.f32.gmra.mxu0 %v473
    %v699 = vpop.f32.mrf.mxu0
    %v700 = vadd.f32 %v629, %v699
    %v701 = vpop.f32.mrf.mxu0
    %v702 = vadd.f32 %v631, %v701
    %703 = vdwg.mxu0
    %704 = vmatprep.subr.mxu0 0.0
    %705 = vmatpush1.msra.mxu0 0.0
    %706 = vmatprep.subr.mxu0 0.0
    %707 = vmatpush1.msra.mxu0 0.0
    %708 = vmatprep.subr.mxu0 0.0
    %709 = vmatpush1.msra.mxu0 0.0
    %710 = vmatprep.subr.mxu0 0.0
    %711 = vmatpush1.msra.mxu0 0.0
    %712 = vmatprep.subr.mxu0 0.0
    %713 = vmatpush1.msra.mxu0 0.0
    %714 = vmatprep.subr.mxu0 0.0
    %715 = vmatpush1.msra.mxu0 0.0
    %716 = vmatprep.subr.mxu0 0.0
    %717 = vmatpush1.msra.mxu0 0.0
    %718 = vmatprep.subr.mxu0 0.0
    %719 = vmatpush1.msra.mxu0 0.0
    %720 = vmatprep.subr.mxu0 0.0
    %721 = vmatpush1.msra.mxu0 0.0
    %722 = vmatprep.subr.mxu0 0.0
    %723 = vmatpush1.msra.mxu0 0.0
    %724 = vmatprep.subr.mxu0 0.0
    %725 = vmatpush1.msra.mxu0 0.0
    %726 = vmatprep.subr.mxu0 0.0
    %727 = vmatpush1.msra.mxu0 0.0
    %728 = vmatprep.subr.mxu0 %v422
    %729 = vmatpush1.msra.mxu0 %v421
    %730 = vmatprep.subr.mxu0 %v418
    %731 = vmatpush1.msra.mxu0 %v417
    %732 = vmatprep.subr.mxu0 %v414
    %733 = vmatpush1.msra.mxu0 %v413
    %734 = vmatprep.subr.mxu0 %v410
    %735 = vmatpush1.msra.mxu0 %v409
    %736 = vmatprep.subr.mxu0 0.0
    %737 = vmatpush2.msra.mxu0 0.0
    %738 = vmatprep.subr.mxu0 0.0
    %739 = vmatpush2.msra.mxu0 0.0
    %740 = vmatprep.subr.mxu0 0.0
    %741 = vmatpush2.msra.mxu0 0.0
    %742 = vmatprep.subr.mxu0 0.0
    %743 = vmatpush2.msra.mxu0 0.0
    %744 = vmatprep.subr.mxu0 0.0
    %745 = vmatpush2.msra.mxu0 0.0
    %746 = vmatprep.subr.mxu0 0.0
    %747 = vmatpush2.msra.mxu0 0.0
    %748 = vmatprep.subr.mxu0 0.0
    %749 = vmatpush2.msra.mxu0 0.0
    %750 = vmatprep.subr.mxu0 0.0
    %751 = vmatpush2.msra.mxu0 0.0
    %752 = vmatprep.subr.mxu0 0.0
    %753 = vmatpush2.msra.mxu0 0.0
    %754 = vmatprep.subr.mxu0 0.0
    %755 = vmatpush2.msra.mxu0 0.0
    %756 = vmatprep.subr.mxu0 0.0
    %757 = vmatpush2.msra.mxu0 0.0
    %758 = vmatprep.subr.mxu0 0.0
    %759 = vmatpush2.msra.mxu0 0.0
    %760 = vmatprep.subr.mxu0 0.0
    %761 = vmatpush2.msra.mxu0 0.0
    %762 = vmatprep.subr.mxu0 0.0
    %763 = vmatpush2.msra.mxu0 0.0
    %764 = vmatprep.subr.mxu0 0.0
    %765 = vmatpush2.msra.mxu0 0.0
    %766 = vmatprep.subr.mxu0 0.0
    %767 = vmatpush2.msra.mxu0 0.0
    %768 = vmatprep.mubr.f32.mxu0 0.0
    %769 = vmatmul.mubr.f32.gmra.mxu0 %v489
    %v770 = vpop.f32.mrf.mxu0
    %v771 = vadd.f32 %v700, %v770
    %v772 = vpop.f32.mrf.mxu0
    %v773 = vadd.f32 %v702, %v772
    %774 = vdwg.mxu0
    %775 = vmatprep.subr.mxu0 %v88
    %776 = vmatpush1.msra.mxu0 %v87
    %777 = vmatprep.subr.mxu0 %v84
    %778 = vmatpush1.msra.mxu0 %v83
    %779 = vmatprep.subr.mxu0 %v80
    %780 = vmatpush1.msra.mxu0 %v79
    %781 = vmatprep.subr.mxu0 %v76
    %782 = vmatpush1.msra.mxu0 %v75
    %783 = vmatprep.subr.mxu0 %v72
    %784 = vmatpush1.msra.mxu0 %v71
    %785 = vmatprep.subr.mxu0 %v68
    %786 = vmatpush1.msra.mxu0 %v67
    %787 = vmatprep.subr.mxu0 %v64
    %788 = vmatpush1.msra.mxu0 %v63
    %789 = vmatprep.subr.mxu0 %v60
    %790 = vmatpush1.msra.mxu0 %v59
    %791 = vmatprep.subr.mxu0 %v56
    %792 = vmatpush1.msra.mxu0 %v55
    %793 = vmatprep.subr.mxu0 %v52
    %794 = vmatpush1.msra.mxu0 %v51
    %795 = vmatprep.subr.mxu0 %v48
    %796 = vmatpush1.msra.mxu0 %v47
    %797 = vmatprep.subr.mxu0 %v44
    %798 = vmatpush1.msra.mxu0 %v43
    %799 = vmatprep.subr.mxu0 %v40
    %800 = vmatpush1.msra.mxu0 %v39
    %801 = vmatprep.subr.mxu0 %v36
    %802 = vmatpush1.msra.mxu0 %v35
    %803 = vmatprep.subr.mxu0 %v32
    %804 = vmatpush1.msra.mxu0 %v31
    %805 = vmatprep.subr.mxu0 %v28
    %806 = vmatpush1.msra.mxu0 %v27
    %807 = vmatprep.subr.mxu0 %v152
    %808 = vmatpush2.msra.mxu0 %v151
    %809 = vmatprep.subr.mxu0 %v148
    %810 = vmatpush2.msra.mxu0 %v147
    %811 = vmatprep.subr.mxu0 %v144
    %812 = vmatpush2.msra.mxu0 %v143
    %813 = vmatprep.subr.mxu0 %v140
    %814 = vmatpush2.msra.mxu0 %v139
    %815 = vmatprep.subr.mxu0 %v136
    %816 = vmatpush2.msra.mxu0 %v135
    %817 = vmatprep.subr.mxu0 %v132
    %818 = vmatpush2.msra.mxu0 %v131
    %819 = vmatprep.subr.mxu0 %v128
    %820 = vmatpush2.msra.mxu0 %v127
    %821 = vmatprep.subr.mxu0 %v124
    %822 = vmatpush2.msra.mxu0 %v123
    %823 = vmatprep.subr.mxu0 %v120
    %824 = vmatpush2.msra.mxu0 %v119
    %825 = vmatprep.subr.mxu0 %v116
    %826 = vmatpush2.msra.mxu0 %v115
    %827 = vmatprep.subr.mxu0 %v112
    %828 = vmatpush2.msra.mxu0 %v111
    %829 = vmatprep.subr.mxu0 %v108
    %830 = vmatpush2.msra.mxu0 %v107
    %831 = vmatprep.subr.mxu0 %v104
    %832 = vmatpush2.msra.mxu0 %v103
    %833 = vmatprep.subr.mxu0 %v100
    %834 = vmatpush2.msra.mxu0 %v99
    %835 = vmatprep.subr.mxu0 %v96
    %836 = vmatpush2.msra.mxu0 %v95
    %837 = vmatprep.subr.mxu0 %v92
    %838 = vmatpush2.msra.mxu0 %v91
    %839 = vmatprep.mubr.f32.mxu0 %v464
    %840 = vmatmul.mubr.f32.gmra.mxu0 %v456
    %v841 = vpop.f32.mrf.mxu0
    %v842 = vadd.f32 %v438, %v841
    %v843 = vpop.f32.mrf.mxu0
    %v844 = vadd.f32 %v442, %v843
    %845 = vdwg.mxu0
    %846 = vmatprep.subr.mxu0 %v216
    %847 = vmatpush1.msra.mxu0 %v215
    %848 = vmatprep.subr.mxu0 %v212
    %849 = vmatpush1.msra.mxu0 %v211
    %850 = vmatprep.subr.mxu0 %v208
    %851 = vmatpush1.msra.mxu0 %v207
    %852 = vmatprep.subr.mxu0 %v204
    %853 = vmatpush1.msra.mxu0 %v203
    %854 = vmatprep.subr.mxu0 %v200
    %855 = vmatpush1.msra.mxu0 %v199
    %856 = vmatprep.subr.mxu0 %v196
    %857 = vmatpush1.msra.mxu0 %v195
    %858 = vmatprep.subr.mxu0 %v192
    %859 = vmatpush1.msra.mxu0 %v191
    %860 = vmatprep.subr.mxu0 %v188
    %861 = vmatpush1.msra.mxu0 %v187
    %862 = vmatprep.subr.mxu0 %v184
    %863 = vmatpush1.msra.mxu0 %v183
    %864 = vmatprep.subr.mxu0 %v180
    %865 = vmatpush1.msra.mxu0 %v179
    %866 = vmatprep.subr.mxu0 %v176
    %867 = vmatpush1.msra.mxu0 %v175
    %868 = vmatprep.subr.mxu0 %v172
    %869 = vmatpush1.msra.mxu0 %v171
    %870 = vmatprep.subr.mxu0 %v168
    %871 = vmatpush1.msra.mxu0 %v167
    %872 = vmatprep.subr.mxu0 %v164
    %873 = vmatpush1.msra.mxu0 %v163
    %874 = vmatprep.subr.mxu0 %v160
    %875 = vmatpush1.msra.mxu0 %v159
    %876 = vmatprep.subr.mxu0 %v156
    %877 = vmatpush1.msra.mxu0 %v155
    %878 = vmatprep.subr.mxu0 %v280
    %879 = vmatpush2.msra.mxu0 %v279
    %880 = vmatprep.subr.mxu0 %v276
    %881 = vmatpush2.msra.mxu0 %v275
    %882 = vmatprep.subr.mxu0 %v272
    %883 = vmatpush2.msra.mxu0 %v271
    %884 = vmatprep.subr.mxu0 %v268
    %885 = vmatpush2.msra.mxu0 %v267
    %886 = vmatprep.subr.mxu0 %v264
    %887 = vmatpush2.msra.mxu0 %v263
    %888 = vmatprep.subr.mxu0 %v260
    %889 = vmatpush2.msra.mxu0 %v259
    %890 = vmatprep.subr.mxu0 %v256
    %891 = vmatpush2.msra.mxu0 %v255
    %892 = vmatprep.subr.mxu0 %v252
    %893 = vmatpush2.msra.mxu0 %v251
    %894 = vmatprep.subr.mxu0 %v248
    %895 = vmatpush2.msra.mxu0 %v247
    %896 = vmatprep.subr.mxu0 %v244
    %897 = vmatpush2.msra.mxu0 %v243
    %898 = vmatprep.subr.mxu0 %v240
    %899 = vmatpush2.msra.mxu0 %v239
    %900 = vmatprep.subr.mxu0 %v236
    %901 = vmatpush2.msra.mxu0 %v235
    %902 = vmatprep.subr.mxu0 %v232
    %903 = vmatpush2.msra.mxu0 %v231
    %904 = vmatprep.subr.mxu0 %v228
    %905 = vmatpush2.msra.mxu0 %v227
    %906 = vmatprep.subr.mxu0 %v224
    %907 = vmatpush2.msra.mxu0 %v223
    %908 = vmatprep.subr.mxu0 %v220
    %909 = vmatpush2.msra.mxu0 %v219
    %910 = vmatprep.mubr.f32.mxu0 %v465
    %911 = vmatmul.mubr.f32.gmra.mxu0 %v463
    %v912 = vpop.f32.mrf.mxu0
    %v913 = vadd.f32 %v842, %v912
    %v914 = vpop.f32.mrf.mxu0
    %v915 = vadd.f32 %v844, %v914
    %916 = vdwg.mxu0
    %917 = vmatprep.subr.mxu0 %v344
    %918 = vmatpush1.msra.mxu0 %v343
    %919 = vmatprep.subr.mxu0 %v340
    %920 = vmatpush1.msra.mxu0 %v339
    %921 = vmatprep.subr.mxu0 %v336
    %922 = vmatpush1.msra.mxu0 %v335
    %923 = vmatprep.subr.mxu0 %v332
    %924 = vmatpush1.msra.mxu0 %v331
    %925 = vmatprep.subr.mxu0 %v328
    %926 = vmatpush1.msra.mxu0 %v327
    %927 = vmatprep.subr.mxu0 %v324
    %928 = vmatpush1.msra.mxu0 %v323
    %929 = vmatprep.subr.mxu0 %v320
    %930 = vmatpush1.msra.mxu0 %v319
    %931 = vmatprep.subr.mxu0 %v316
    %932 = vmatpush1.msra.mxu0 %v315
    %933 = vmatprep.subr.mxu0 %v312
    %934 = vmatpush1.msra.mxu0 %v311
    %935 = vmatprep.subr.mxu0 %v308
    %936 = vmatpush1.msra.mxu0 %v307
    %937 = vmatprep.subr.mxu0 %v304
    %938 = vmatpush1.msra.mxu0 %v303
    %939 = vmatprep.subr.mxu0 %v300
    %940 = vmatpush1.msra.mxu0 %v299
    %941 = vmatprep.subr.mxu0 %v296
    %942 = vmatpush1.msra.mxu0 %v295
    %943 = vmatprep.subr.mxu0 %v292
    %944 = vmatpush1.msra.mxu0 %v291
    %945 = vmatprep.subr.mxu0 %v288
    %946 = vmatpush1.msra.mxu0 %v287
    %947 = vmatprep.subr.mxu0 %v284
    %948 = vmatpush1.msra.mxu0 %v283
    %949 = vmatprep.subr.mxu0 %v408
    %950 = vmatpush2.msra.mxu0 %v407
    %951 = vmatprep.subr.mxu0 %v404
    %952 = vmatpush2.msra.mxu0 %v403
    %953 = vmatprep.subr.mxu0 %v400
    %954 = vmatpush2.msra.mxu0 %v399
    %955 = vmatprep.subr.mxu0 %v396
    %956 = vmatpush2.msra.mxu0 %v395
    %957 = vmatprep.subr.mxu0 %v392
    %958 = vmatpush2.msra.mxu0 %v391
    %959 = vmatprep.subr.mxu0 %v388
    %960 = vmatpush2.msra.mxu0 %v387
    %961 = vmatprep.subr.mxu0 %v384
    %962 = vmatpush2.msra.mxu0 %v383
    %963 = vmatprep.subr.mxu0 %v380
    %964 = vmatpush2.msra.mxu0 %v379
    %965 = vmatprep.subr.mxu0 %v376
    %966 = vmatpush2.msra.mxu0 %v375
    %967 = vmatprep.subr.mxu0 %v372
    %968 = vmatpush2.msra.mxu0 %v371
    %969 = vmatprep.subr.mxu0 %v368
    %970 = vmatpush2.msra.mxu0 %v367
    %971 = vmatprep.subr.mxu0 %v364
    %972 = vmatpush2.msra.mxu0 %v363
    %973 = vmatprep.subr.mxu0 %v360
    %974 = vmatpush2.msra.mxu0 %v359
    %975 = vmatprep.subr.mxu0 %v356
    %976 = vmatpush2.msra.mxu0 %v355
    %977 = vmatprep.subr.mxu0 %v352
    %978 = vmatpush2.msra.mxu0 %v351
    %979 = vmatprep.subr.mxu0 %v348
    %980 = vmatpush2.msra.mxu0 %v347
    %981 = vmatprep.mubr.f32.mxu0 %v481
    %982 = vmatmul.mubr.f32.gmra.mxu0 %v473
    %v983 = vpop.f32.mrf.mxu0
    %v984 = vadd.f32 %v913, %v983
    %v985 = vpop.f32.mrf.mxu0
    %v986 = vadd.f32 %v915, %v985
    %987 = vdwg.mxu0
    %988 = vmatprep.subr.mxu0 0.0
    %989 = vmatpush1.msra.mxu0 0.0
    %990 = vmatprep.subr.mxu0 0.0
    %991 = vmatpush1.msra.mxu0 0.0
    %992 = vmatprep.subr.mxu0 0.0
    %993 = vmatpush1.msra.mxu0 0.0
    %994 = vmatprep.subr.mxu0 0.0
    %995 = vmatpush1.msra.mxu0 0.0
    %996 = vmatprep.subr.mxu0 0.0
    %997 = vmatpush1.msra.mxu0 0.0
    %998 = vmatprep.subr.mxu0 0.0
    %999 = vmatpush1.msra.mxu0 0.0
    %1000 = vmatprep.subr.mxu0 0.0
    %1001 = vmatpush1.msra.mxu0 0.0
    %1002 = vmatprep.subr.mxu0 0.0
    %1003 = vmatpush1.msra.mxu0 0.0
    %1004 = vmatprep.subr.mxu0 0.0
    %1005 = vmatpush1.msra.mxu0 0.0
    %1006 = vmatprep.subr.mxu0 0.0
    %1007 = vmatpush1.msra.mxu0 0.0
    %1008 = vmatprep.subr.mxu0 0.0
    %1009 = vmatpush1.msra.mxu0 0.0
    %1010 = vmatprep.subr.mxu0 0.0
    %1011 = vmatpush1.msra.mxu0 0.0
    %1012 = vmatprep.subr.mxu0 %v424
    %1013 = vmatpush1.msra.mxu0 %v423
    %1014 = vmatprep.subr.mxu0 %v420
    %1015 = vmatpush1.msra.mxu0 %v419
    %1016 = vmatprep.subr.mxu0 %v416
    %1017 = vmatpush1.msra.mxu0 %v415
    %1018 = vmatprep.subr.mxu0 %v412
    %1019 = vmatpush1.msra.mxu0 %v411
    %1020 = vmatprep.subr.mxu0 0.0
    %1021 = vmatpush2.msra.mxu0 0.0
    %1022 = vmatprep.subr.mxu0 0.0
    %1023 = vmatpush2.msra.mxu0 0.0
    %1024 = vmatprep.subr.mxu0 0.0
    %1025 = vmatpush2.msra.mxu0 0.0
    %1026 = vmatprep.subr.mxu0 0.0
    %1027 = vmatpush2.msra.mxu0 0.0
    %1028 = vmatprep.subr.mxu0 0.0
    %1029 = vmatpush2.msra.mxu0 0.0
    %1030 = vmatprep.subr.mxu0 0.0
    %1031 = vmatpush2.msra.mxu0 0.0
    %1032 = vmatprep.subr.mxu0 0.0
    %1033 = vmatpush2.msra.mxu0 0.0
    %1034 = vmatprep.subr.mxu0 0.0
    %1035 = vmatpush2.msra.mxu0 0.0
    %1036 = vmatprep.subr.mxu0 0.0
    %1037 = vmatpush2.msra.mxu0 0.0
    %1038 = vmatprep.subr.mxu0 0.0
    %1039 = vmatpush2.msra.mxu0 0.0
    %1040 = vmatprep.subr.mxu0 0.0
    %1041 = vmatpush2.msra.mxu0 0.0
    %1042 = vmatprep.subr.mxu0 0.0
    %1043 = vmatpush2.msra.mxu0 0.0
    %1044 = vmatprep.subr.mxu0 0.0
    %1045 = vmatpush2.msra.mxu0 0.0
    %1046 = vmatprep.subr.mxu0 0.0
    %1047 = vmatpush2.msra.mxu0 0.0
    %1048 = vmatprep.subr.mxu0 0.0
    %1049 = vmatpush2.msra.mxu0 0.0
    %1050 = vmatprep.subr.mxu0 0.0
    %1051 = vmatpush2.msra.mxu0 0.0
    %1052 = vmatprep.mubr.f32.mxu0 0.0
    %1053 = vmatmul.mubr.f32.gmra.mxu0 %v489
    %v1054 = vpop.f32.mrf.mxu0
    %v1055 = vadd.f32 %v984, %v1054
    %v1056 = vpop.f32.mrf.mxu0
    %v1057 = vadd.f32 %v986, %v1056
    %1058 = vdwg.mxu0
    %v1063 = vcombine.low %v771, %v773
    %v1064 = vcombine.low %v1055, %v1057
    %v1066 = vunpack.c.l.s4 1983009808
    %v1067 = vunpack.c.0.s8 %v1066
    %v1068 = vlaneseq
    %v1069 = vshrl.u32 %v1068, 7
    %v1070 = vsub.s32 %v1067, %v1069
    %v1071 = vrot.slane %v1063, %v1070
    %v1073 = vunpack.c.l.s4 1983009808
    %v1074 = vunpack.c.0.s8 %v1073
    %v1075 = vlaneseq
    %v1076 = vshrl.u32 %v1075, 7
    %v1077 = vsub.s32 %v1074, %v1076
    %v1078 = vrot.slane %v1064, %v1077
    %v1079 = vcombine.low %v1071, %v1078
    %vm1081 = vcmask 1041408
    %vm1082 = vcmask 1043458
    %vm1083 = vmor %vm1082, %vm1081
    %vm1084 = vcmask 1045508
    %vm1085 = vmor %vm1084, %vm1083
    %vm1086 = vcmask 949254
    %vm1087 = vmor %vm1086, %vm1085
    %1088 = vst.msk [vmem:[#allocation2] sm:$0xff] %vm1087, %v1079
    %v1089 = vmax.f32 %v771, 0.0
    %v1090 = vmax.f32 %v773, 0.0
    %v1091 = vmax.f32 %v1055, 0.0
    %v1092 = vmax.f32 %v1057, 0.0
    %v1093 = vld [vmem:[%s3] sm:$0xff]
    %v1094 = vld [vmem:[%s3 + $0x8] sm:$0xff]
    %v1095 = vld [vmem:[%s3 + $0x10] sm:$0xff]
    %v1096 = vld [vmem:[%s3 + $0x18] sm:$0xff]
    %v1097 = vld [vmem:[%s3 + $0x20] sm:$0xff]
    %v1098 = vld [vmem:[%s3 + $0x28] sm:$0xff]
    %v1099 = vld [vmem:[%s3 + $0x30] sm:$0xff]
    %v1100 = vld [vmem:[%s3 + $0x38] sm:$0xff]
    %v1101 = vld [vmem:[%s3 + $0x40] sm:$0xff]
    %v1102 = vld [vmem:[%s3 + $0x48] sm:$0xff]
    %v1103 = vld [vmem:[%s3 + $0x50] sm:$0xff]
    %v1104 = vld [vmem:[%s3 + $0x58] sm:$0xff]
    %v1105 = vld [vmem:[%s3 + $0x60] sm:$0xff]
    %v1106 = vld [vmem:[%s3 + $0x68] sm:$0xff]
    %v1107 = vld [vmem:[%s3 + $0x70] sm:$0xff]
    %v1108 = vld [vmem:[%s3 + $0x78] sm:$0xff]
    %v1109 = vld [vmem:[%s3 + $0x80] sm:$0xff]
    %v1110 = vld [vmem:[%s3 + $0x88] sm:$0xff]
    %v1111 = vld [vmem:[%s3 + $0x90] sm:$0xff]
    %v1112 = vld [vmem:[%s3 + $0x98] sm:$0xff]
    %v1113 = vld [vmem:[%s3 + $0xa0] sm:$0xff]
    %v1114 = vld [vmem:[%s3 + $0xa8] sm:$0xff]
    %v1115 = vld [vmem:[%s3 + $0xb0] sm:$0xff]
    %v1116 = vld [vmem:[%s3 + $0xb8] sm:$0xff]
    %v1117 = vld [vmem:[%s3 + $0xc0] sm:$0xff]
    %v1118 = vld [vmem:[%s3 + $0xc8] sm:$0xff]
    %v1119 = vld [vmem:[%s3 + $0xd0] sm:$0xff]
    %v1120 = vld [vmem:[%s3 + $0xd8] sm:$0xff]
    %v1121 = vld [vmem:[%s3 + $0xe0] sm:$0xff]
    %v1122 = vld [vmem:[%s3 + $0xe8] sm:$0xff]
    %v1123 = vld [vmem:[%s3 + $0xf0] sm:$0xff]
    %v1124 = vld [vmem:[%s3 + $0xf8] sm:$0xff]
    %v1125 = vld [vmem:[%s3 + $0x100] sm:$0xff]
    %v1126 = vld [vmem:[%s3 + $0x108] sm:$0xff]
    %v1127 = vld [vmem:[%s3 + $0x110] sm:$0xff]
    %v1128 = vld [vmem:[%s3 + $0x118] sm:$0xff]
    %v1129 = vld [vmem:[%s3 + $0x120] sm:$0xff]
    %v1130 = vld [vmem:[%s3 + $0x128] sm:$0xff]
    %v1131 = vld [vmem:[%s3 + $0x130] sm:$0xff]
    %v1132 = vld [vmem:[%s3 + $0x138] sm:$0xff]
    %v1133 = vld [vmem:[%s3 + $0x140] sm:$0xff]
    %v1134 = vld [vmem:[%s3 + $0x148] sm:$0xff]
    %v1135 = vld [vmem:[%s3 + $0x150] sm:$0xff]
    %v1136 = vld [vmem:[%s3 + $0x158] sm:$0xff]
    %v1137 = vld [vmem:[%s3 + $0x160] sm:$0xff]
    %v1138 = vld [vmem:[%s3 + $0x168] sm:$0xff]
    %v1139 = vld [vmem:[%s3 + $0x170] sm:$0xff]
    %v1140 = vld [vmem:[%s3 + $0x178] sm:$0xff]
    %v1141 = vld [vmem:[%s3 + $0x180] sm:$0xff]
    %v1142 = vld [vmem:[%s3 + $0x188] sm:$0xff]
    %v1143 = vld [vmem:[%s3 + $0x190] sm:$0xff]
    %v1144 = vld [vmem:[%s3 + $0x198] sm:$0xff]
    %v1145 = vld [vmem:[%s3 + $0x1a0] sm:$0xff]
    %v1146 = vld [vmem:[%s3 + $0x1a8] sm:$0xff]
    %v1147 = vld [vmem:[%s3 + $0x1b0] sm:$0xff]
    %v1148 = vld [vmem:[%s3 + $0x1b8] sm:$0xff]
    %v1149 = vld [vmem:[%s3 + $0x1c0] sm:$0xff]
    %v1150 = vld [vmem:[%s3 + $0x1c8] sm:$0xff]
    %v1151 = vld [vmem:[%s3 + $0x1d0] sm:$0xff]
    %v1152 = vld [vmem:[%s3 + $0x1d8] sm:$0xff]
    %v1153 = vld [vmem:[%s3 + $0x1e0] sm:$0xff]
    %v1154 = vld [vmem:[%s3 + $0x1e8] sm:$0xff]
    %v1155 = vld [vmem:[%s3 + $0x1f0] sm:$0xf]
    %v1156 = vld [vmem:[%s4] sm:$0x1]
    %v1158 = vlaneseq
    %v1159 = vshrl.u32 %v1158, 7
    %v1160 = vsub.s32 0, %v1159
    %v1161 = vrot.slane %v1156, %v1160
    %vm1163 = vcmask 949248
    %v1165 = vsel %vm1163, %v1092, 0
    %vm1167 = vcmask 1043456
    %v1169 = vsel %vm1167, %v1155, 0
    %1171 = vmatprep.subr.mxu0 0.0
    %1172 = vmatpush1.msra.mxu0 %v1108
    %1173 = vmatprep.subr.mxu0 0.0
    %1174 = vmatpush1.msra.mxu0 %v1107
    %1175 = vmatprep.subr.mxu0 0.0
    %1176 = vmatpush1.msra.mxu0 %v1106
    %1177 = vmatprep.subr.mxu0 0.0
    %1178 = vmatpush1.msra.mxu0 %v1105
    %1179 = vmatprep.subr.mxu0 0.0
    %1180 = vmatpush1.msra.mxu0 %v1104
    %1181 = vmatprep.subr.mxu0 0.0
    %1182 = vmatpush1.msra.mxu0 %v1103
    %1183 = vmatprep.subr.mxu0 0.0
    %1184 = vmatpush1.msra.mxu0 %v1102
    %1185 = vmatprep.subr.mxu0 0.0
    %1186 = vmatpush1.msra.mxu0 %v1101
    %1187 = vmatprep.subr.mxu0 0.0
    %1188 = vmatpush1.msra.mxu0 %v1100
    %1189 = vmatprep.subr.mxu0 0.0
    %1190 = vmatpush1.msra.mxu0 %v1099
    %1191 = vmatprep.subr.mxu0 0.0
    %1192 = vmatpush1.msra.mxu0 %v1098
    %1193 = vmatprep.subr.mxu0 0.0
    %1194 = vmatpush1.msra.mxu0 %v1097
    %1195 = vmatprep.subr.mxu0 0.0
    %1196 = vmatpush1.msra.mxu0 %v1096
    %1197 = vmatprep.subr.mxu0 0.0
    %1198 = vmatpush1.msra.mxu0 %v1095
    %1199 = vmatprep.subr.mxu0 0.0
    %1200 = vmatpush1.msra.mxu0 %v1094
    %1201 = vmatprep.subr.mxu0 0.0
    %1202 = vmatpush1.msra.mxu0 %v1093
    %1203 = vmatprep.subr.mxu0 0.0
    %1204 = vmatpush2.msra.mxu0 %v1124
    %1205 = vmatprep.subr.mxu0 0.0
    %1206 = vmatpush2.msra.mxu0 %v1123
    %1207 = vmatprep.subr.mxu0 0.0
    %1208 = vmatpush2.msra.mxu0 %v1122
    %1209 = vmatprep.subr.mxu0 0.0
    %1210 = vmatpush2.msra.mxu0 %v1121
    %1211 = vmatprep.subr.mxu0 0.0
    %1212 = vmatpush2.msra.mxu0 %v1120
    %1213 = vmatprep.subr.mxu0 0.0
    %1214 = vmatpush2.msra.mxu0 %v1119
    %1215 = vmatprep.subr.mxu0 0.0
    %1216 = vmatpush2.msra.mxu0 %v1118
    %1217 = vmatprep.subr.mxu0 0.0
    %1218 = vmatpush2.msra.mxu0 %v1117
    %1219 = vmatprep.subr.mxu0 0.0
    %1220 = vmatpush2.msra.mxu0 %v1116
    %1221 = vmatprep.subr.mxu0 0.0
    %1222 = vmatpush2.msra.mxu0 %v1115
    %1223 = vmatprep.subr.mxu0 0.0
    %1224 = vmatpush2.msra.mxu0 %v1114
    %1225 = vmatprep.subr.mxu0 0.0
    %1226 = vmatpush2.msra.mxu0 %v1113
    %1227 = vmatprep.subr.mxu0 0.0
    %1228 = vmatpush2.msra.mxu0 %v1112
    %1229 = vmatprep.subr.mxu0 0.0
    %1230 = vmatpush2.msra.mxu0 %v1111
    %1231 = vmatprep.subr.mxu0 0.0
    %1232 = vmatpush2.msra.mxu0 %v1110
    %1233 = vmatprep.subr.mxu0 0.0
    %1234 = vmatpush2.msra.mxu0 %v1109
    %1235 = vmatprep.mubr.f32.mxu0 %v1090
    %1236 = vmatmul.mubr.f32.gmra.mxu0 %v1089
    %v1237 = vpop.f32.mrf.mxu0
    %v1238 = vadd.f32 %v1161, %v1237
    %v1239 = vpop.f32.mrf.mxu0
    %1240 = vdwg.mxu0
    %1241 = vmatprep.subr.mxu0 0.0
    %1242 = vmatpush1.msra.mxu0 %v1140
    %1243 = vmatprep.subr.mxu0 0.0
    %1244 = vmatpush1.msra.mxu0 %v1139
    %1245 = vmatprep.subr.mxu0 0.0
    %1246 = vmatpush1.msra.mxu0 %v1138
    %1247 = vmatprep.subr.mxu0 0.0
    %1248 = vmatpush1.msra.mxu0 %v1137
    %1249 = vmatprep.subr.mxu0 0.0
    %1250 = vmatpush1.msra.mxu0 %v1136
    %1251 = vmatprep.subr.mxu0 0.0
    %1252 = vmatpush1.msra.mxu0 %v1135
    %1253 = vmatprep.subr.mxu0 0.0
    %1254 = vmatpush1.msra.mxu0 %v1134
    %1255 = vmatprep.subr.mxu0 0.0
    %1256 = vmatpush1.msra.mxu0 %v1133
    %1257 = vmatprep.subr.mxu0 0.0
    %1258 = vmatpush1.msra.mxu0 %v1132
    %1259 = vmatprep.subr.mxu0 0.0
    %1260 = vmatpush1.msra.mxu0 %v1131
    %1261 = vmatprep.subr.mxu0 0.0
    %1262 = vmatpush1.msra.mxu0 %v1130
    %1263 = vmatprep.subr.mxu0 0.0
    %1264 = vmatpush1.msra.mxu0 %v1129
    %1265 = vmatprep.subr.mxu0 0.0
    %1266 = vmatpush1.msra.mxu0 %v1128
    %1267 = vmatprep.subr.mxu0 0.0
    %1268 = vmatpush1.msra.mxu0 %v1127
    %1269 = vmatprep.subr.mxu0 0.0
    %1270 = vmatpush1.msra.mxu0 %v1126
    %1271 = vmatprep.subr.mxu0 0.0
    %1272 = vmatpush1.msra.mxu0 %v1125
    %1273 = vmatprep.subr.mxu0 0.0
    %1274 = vmatpush2.msra.mxu0 0.0
    %1275 = vmatprep.subr.mxu0 0.0
    %1276 = vmatpush2.msra.mxu0 %v1169
    %1277 = vmatprep.subr.mxu0 0.0
    %1278 = vmatpush2.msra.mxu0 %v1154
    %1279 = vmatprep.subr.mxu0 0.0
    %1280 = vmatpush2.msra.mxu0 %v1153
    %1281 = vmatprep.subr.mxu0 0.0
    %1282 = vmatpush2.msra.mxu0 %v1152
    %1283 = vmatprep.subr.mxu0 0.0
    %1284 = vmatpush2.msra.mxu0 %v1151
    %1285 = vmatprep.subr.mxu0 0.0
    %1286 = vmatpush2.msra.mxu0 %v1150
    %1287 = vmatprep.subr.mxu0 0.0
    %1288 = vmatpush2.msra.mxu0 %v1149
    %1289 = vmatprep.subr.mxu0 0.0
    %1290 = vmatpush2.msra.mxu0 %v1148
    %1291 = vmatprep.subr.mxu0 0.0
    %1292 = vmatpush2.msra.mxu0 %v1147
    %1293 = vmatprep.subr.mxu0 0.0
    %1294 = vmatpush2.msra.mxu0 %v1146
    %1295 = vmatprep.subr.mxu0 0.0
    %1296 = vmatpush2.msra.mxu0 %v1145
    %1297 = vmatprep.subr.mxu0 0.0
    %1298 = vmatpush2.msra.mxu0 %v1144
    %1299 = vmatprep.subr.mxu0 0.0
    %1300 = vmatpush2.msra.mxu0 %v1143
    %1301 = vmatprep.subr.mxu0 0.0
    %1302 = vmatpush2.msra.mxu0 %v1142
    %1303 = vmatprep.subr.mxu0 0.0
    %1304 = vmatpush2.msra.mxu0 %v1141
    %1305 = vmatprep.mubr.f32.mxu0 %v1165
    %1306 = vmatmul.mubr.f32.gmra.mxu0 %v1091
    %v1307 = vpop.f32.mrf.mxu0
    %v1308 = vadd.f32 %v1238, %v1307
    %v1309 = vpop.f32.mrf.mxu0
    %1310 = vdwg.mxu0
    %vm1311 = vcmask 74752
    %1312 = vst.msk [vmem:[%s6] sm:$0x3] %vm1311, %v1308
    // Predicated region
    $region22: #{net_forward.5} parent=1 // pred_check
      _
    $region23: #{net_forward.5} parent=1 // pred_check_branch
      %1314 = sbr.rel (0) target = $region25
    $region24: #{net_forward.5} parent=1 // pred_region
      %s1316 = ssub.s32 128, 128
      %1317 = vsyncadd [#allocation3], %s1316
      %s1319 = sshll.u32 [#allocation2], 4
      %s1320 = int_to_ptr.vmem [resolvable:$true] %s1319
      %1322 = dma.vmem_to_hbm [thread:$0]  %s1320, 128, %s5, [#allocation3]
    $region25: #{net_forward.5} parent=1 // pred_fallthru
      _
    // Predicated region
    $region26: #{net_forward.5} parent=1 // pred_check
      _
    $region27: #{net_forward.5} parent=1 // pred_check_branch
      %1324 = sbr.rel (0) target = $region29
    $region28: #{net_forward.5} parent=1 // pred_region
      _
    $region29: #{net_forward.5} parent=1 // pred_fallthru
      _
    // Predicated region
    $region30: #{net_forward.5} parent=1 // pred_check
      _
    $region31: #{net_forward.5} parent=1 // pred_check_branch
      %1326 = sbr.rel (0) target = $region33
    $region32: #{net_forward.5} parent=1 // pred_region
      %1327 = dma.done [#allocation3], 128
    $region33: #{net_forward.5} parent=1 // pred_fallthru
      _
    // Predicated region
    $region34: #{net_forward.5} parent=1 // pred_check
      _
    $region35: #{net_forward.5} parent=1 // pred_check_branch
      %1329 = sbr.rel (0) target = $region37
    $region36: #{net_forward.5} parent=1 // pred_region
      _
    $region37: #{net_forward.5} parent=1 // pred_fallthru
      _
    %1330 = vsyncpa [#allocation3], 1

</llo_original>
